<compile_context>
chip_gen: v7x
topology: tpu7x:2x2x1
jax: 0.10.0
libtpu: 0.0.40
codegen_flags: <defaults>
</compile_context>

<pallas_src>
import functools
import math

import jax
import jax.numpy as jnp
from jax import lax
from jax.experimental import pallas as pl
from jax.experimental.pallas import tpu as pltpu


_LANE = 128
# Exact fp32 division matches torch's softmax; set True to use the EUP
# approximate reciprocal (faster, slightly lower precision).
_APPROX_SOFTMAX_RECIP = False


def _pad_up(x, m):
    return ((x + m - 1) // m) * m


# ----------------------------- in-kernel helpers ----------------------------

def _gelu_exact(x):
    # matches torch.nn.GELU() (erf form), fp32 math
    return 0.5 * x * (1.0 + lax.erf(x * (1.0 / math.sqrt(2.0))))


def _ln(x, g, b, eps):
    """LayerNorm over last axis; x fp32, g/b (1, D). Biased variance like torch."""
    mean = jnp.mean(x, axis=-1, keepdims=True)
    xc = x - mean
    var = jnp.mean(xc * xc, axis=-1, keepdims=True)
    return xc * lax.rsqrt(var + eps) * g.astype(jnp.float32) + b.astype(jnp.float32)


# ----------------------------- fused Pallas kernel --------------------------

def _fused_forward_kernel(idx_ref, emb_ref, pos_ref, lng_ref, lnb_ref,
                          win_ref, bin_ref,
                          ang_ref, anb_ref, wqkv_ref, wo_ref, bo_ref,
                          fng_ref, fnb_ref, w1_ref, b1_ref, w2_ref, b2_ref,
                          fg_ref, fb_ref, wout_ref, bout_ref,
                          tpw_ref, tpb_ref, tpg_ref, tpb2_ref,
                          embt_ref, bias_ref, o_ref,
                          *, n_layers, heads, scale):
    """Whole Transformer.forward for one batch row per grid step."""
    N, E = pos_ref.shape
    H = win_ref.shape[1]
    Dh = H // heads
    Vp = embt_ref.shape[1]

    # ---- embedding gather as a one-hot MXU matmul (no dynamic indexing) ----
    ids = idx_ref[0]                                                # (N, 1) int32
    eq = lax.broadcasted_iota(jnp.int32, (N, Vp), 1) == ids         # (N, Vp) bool
    onehot = jnp.where(eq, 1.0, 0.0).astype(jnp.bfloat16)
    tok = jnp.dot(onehot, emb_ref[...],
                  preferred_element_type=jnp.float32)               # (N, E) fp32

    # ---- ln(tok + pos, eps=1e-12) -> drop (identity) -> project_in ----
    t = tok + pos_ref[...].astype(jnp.float32)
    h = _ln(t, lng_ref[...], lnb_ref[...], 1e-12)
    x = jnp.dot(h.astype(jnp.bfloat16), win_ref[...],
                preferred_element_type=jnp.float32) + bin_ref[...].astype(jnp.float32)

    # ---- pre-norm transformer layers (statically unrolled over stacked L) ----
    for l in range(n_layers):
        # --- self-attention block (pre-norm, eps=1e-5) ---
        h = _ln(x, ang_ref[l], anb_ref[l], 1e-5)
        qkv = jnp.dot(h.astype(jnp.bfloat16), wqkv_ref[l],
                      preferred_element_type=jnp.float32)           # (N, 3H)
        # heads-batched attention: (heads, N, Dh) stacks of static lane slices
        q = jnp.stack([qkv[:, i * Dh:(i + 1) * Dh]
                       for i in range(heads)], 0).astype(jnp.bfloat16)
        k = jnp.stack([qkv[:, H + i * Dh:H + (i + 1) * Dh]
                       for i in range(heads)], 0).astype(jnp.bfloat16)
        v = jnp.stack([qkv[:, 2 * H + i * Dh:2 * H + (i + 1) * Dh]
                       for i in range(heads)], 0).astype(jnp.bfloat16)
        s = jnp.einsum('hnd,hmd->hnm', q, k,
                       preferred_element_type=jnp.float32) * scale  # (h, N, N)
        s = s - jnp.max(s, axis=-1, keepdims=True)
        p = jnp.exp(s)
        denom = jnp.sum(p, axis=-1, keepdims=True)
        if _APPROX_SOFTMAX_RECIP:
            p = p * pl.reciprocal(denom, approx=True)
        else:
            p = p / denom
        o = jnp.einsum('hnm,hmd->hnd', p.astype(jnp.bfloat16), v,
                       preferred_element_type=jnp.float32)          # (h, N, Dh)
        # head-major merge -> single K=H output projection (one MXU matmul)
        o = jnp.concatenate([o[i] for i in range(heads)], axis=-1)  # (N, H)
        attn = jnp.dot(o.astype(jnp.bfloat16), wo_ref[l],
                       preferred_element_type=jnp.float32)
        x = x + attn + bo_ref[l].astype(jnp.float32)                # residual

        # --- feed-forward block (pre-norm, eps=1e-5) ---
        h = _ln(x, fng_ref[l], fnb_ref[l], 1e-5)
        h = jnp.dot(h.astype(jnp.bfloat16), w1_ref[l],
                    preferred_element_type=jnp.float32) + b1_ref[l].astype(jnp.float32)
        h = _gelu_exact(h)
        h = jnp.dot(h.astype(jnp.bfloat16), w2_ref[l],
                    preferred_element_type=jnp.float32) + b2_ref[l].astype(jnp.float32)
        x = x + h                                                   # residual

    # ---- final LN -> project_out -> Token_Prediction -> tied-emb logits ----
    h = _ln(x, fg_ref[...], fb_ref[...], 1e-5)
    h = jnp.dot(h.astype(jnp.bfloat16), wout_ref[...],
                preferred_element_type=jnp.float32) + bout_ref[...].astype(jnp.float32)
    # Token_Prediction: Linear -> GELU -> LayerNorm(1e-12)
    h = jnp.dot(h.astype(jnp.bfloat16), tpw_ref[...],
                preferred_element_type=jnp.float32) + tpb_ref[...].astype(jnp.float32)
    h = _gelu_exact(h)
    h = _ln(h, tpg_ref[...], tpb2_ref[...], 1e-12)
    # logits = h @ tok_emb.T + bias, with tok_emb.T passed pre-transposed and
    # lane-padded to (E, Vp) so the output stores are lane-dense.
    logits = jnp.dot(h.astype(jnp.bfloat16), embt_ref[...],
                     preferred_element_type=jnp.float32)            # (N, Vp)
    o_ref[0] = (logits + bias_ref[...].astype(jnp.float32)).astype(o_ref.dtype)


# ----------------------------- pallas_call wrapper --------------------------

def transformer_forward(params, idx, cfg):
    """Transformer.forward: token indices (B, N) int32 -> logits (B, N, codebook_sizes)."""
    B, N = idx.shape
    H = cfg["hidden_size"]
    heads = cfg["heads"]
    assert H % heads == 0, "hidden_size must be divisible by heads"
    # self.bias is (num_tokens, V); torch broadcasting requires N == num_tokens.
    assert N == cfg["num_tokens"], "sequence length must equal num_tokens"
    Dh = H // heads
    scale = Dh ** -0.5
    L = cfg["n_layers"]
    Vp = params["tok_emb"].shape[0]                     # lane-padded vocab

    pos = params["pos_emb"][:N]                         # (N, E)
    idx3 = idx.astype(jnp.int32)[..., None]             # (B, N, 1) for VMEM block

    def rep(a):
        # whole-array block, constant index map (fetched once, not re-DMA'd)
        return pl.BlockSpec(a.shape, lambda b, _n=a.ndim: (0,) * _n)

    ins = (idx3, params["tok_emb"], pos, params["ln_g"], params["ln_b"],
           params["proj_in_w"], params["proj_in_b"],
           params["an_g"], params["an_b"], params["wqkv"], params["wo"],
           params["bo"], params["fn_g"], params["fn_b"], params["w1"],
           params["b1"], params["w2"], params["b2"],
           params["final_g"], params["final_b"],
           params["proj_out_w"], params["proj_out_b"],
           params["tp_w"], params["tp_b"], params["tp_ln_g"], params["tp_ln_b"],
           params["tok_emb_t"], params["out_bias"])

    in_specs = [pl.BlockSpec((1, N, 1), lambda b: (b, 0, 0))] + \
               [rep(a) for a in ins[1:]]

    logits_pad = pl.pallas_call(
        functools.partial(_fused_forward_kernel,
                          n_layers=L, heads=heads, scale=scale),
        out_shape=jax.ShapeDtypeStruct((B, N, Vp), jnp.float32),
        grid=(B,),
        in_specs=in_specs,
        out_specs=pl.BlockSpec((1, N, Vp), lambda b: (b, 0, 0)),
        compiler_params=pltpu.CompilerParams(
            dimension_semantics=("parallel",),
            vmem_limit_bytes=48 * 1024 * 1024),
    )(*ins)

    # Reference returns logits[:, :, :-1] (drops the mask-token column); here we
    # also drop the lane-padding columns.  Tiny slice, done once in the wrapper.
    return logits_pad[:, :, :cfg["codebook_sizes"]]


# ----------------------------- model params ---------------------------------

def init_transformer_params(key, cfg):
    E = cfg["embed_dim"]
    H = cfg["hidden_size"]
    L = cfg["n_layers"]
    F = H * cfg["ff_mult"]
    V = cfg["codebook_sizes"] + 1                       # +1 mask token
    Vp = _pad_up(V, _LANE)                              # lane-dense vocab padding
    Npos = cfg["num_tokens"] + 1
    dt = jnp.bfloat16

    keys = iter(jax.random.split(key, 32))

    def w(shape, scale=0.02):
        return (jax.random.normal(next(keys), shape, jnp.float32) * scale).astype(dt)

    ones = lambda s: jnp.ones(s, dt)
    zeros = lambda s: jnp.zeros(s, dt)

    tok_emb = jnp.zeros((Vp, E), dt).at[:V].set(w((V, E)))   # rows >= V are padding
    params = {
        "tok_emb": tok_emb,                               # (Vp, E) for the gather
        "tok_emb_t": jnp.transpose(tok_emb),              # (E, Vp) tied, for logits
        "pos_emb": w((Npos, E)),
        "ln_g": ones((1, E)), "ln_b": zeros((1, E)),
        "proj_in_w": w((E, H)), "proj_in_b": zeros((1, H)),
        # per-layer weights stacked on a leading L axis (fused single kernel)
        "an_g": jnp.ones((L, 1, H), dt), "an_b": jnp.zeros((L, 1, H), dt),
        "wqkv": w((L, H, 3 * H)),                          # fused q/k/v (no bias)
        "wo": w((L, H, H)), "bo": jnp.zeros((L, 1, H), dt),
        "fn_g": jnp.ones((L, 1, H), dt), "fn_b": jnp.zeros((L, 1, H), dt),
        "w1": w((L, H, F)), "b1": jnp.zeros((L, 1, F), dt),
        "w2": w((L, F, H)), "b2": jnp.zeros((L, 1, H), dt),
        "final_g": ones((1, H)), "final_b": zeros((1, H)),
        "proj_out_w": w((H, E)), "proj_out_b": zeros((1, E)),
        "tp_w": w((E, E)), "tp_b": zeros((1, E)),
        "tp_ln_g": ones((1, E)), "tp_ln_b": zeros((1, E)),
        # self.bias = nn.Parameter(torch.zeros(num_tokens, codebook_sizes + 1)),
        # stored lane-padded to (num_tokens, Vp)
        "out_bias": jnp.zeros((cfg["num_tokens"], Vp), jnp.float32),
    }
    return params


# ----------------------------- BidirectionalTransformer.forward --------------

def bidirectional_transformer_forward(params, idx, key, cfg, t=0.5):
    """BidirectionalTransformer.forward semantics on precomputed token indices.

    `idx` plays the role of encode_to_z_q(y) indices (quantizer output).
    `t` is the deterministic stand-in for np.random.uniform(0, 1).
    """
    B, N = idx.shape
    gamma = math.cos(t * math.pi / 2.0)                 # 'cosine' gamma
    n_masks = math.floor(gamma * N)
    rand = jax.random.uniform(key, (B, N))
    mask = jnp.zeros((B, N), dtype=bool)
    if n_masks > 0:
        top_idx = jax.lax.top_k(rand, n_masks)[1]       # rand.topk(n_masks, dim=1)
        mask = mask.at[jnp.arange(B)[:, None], top_idx].set(True)
    mask_token = cfg["codebook_sizes"]                  # mask_token_ids = num_factors
    # Reference: idx_M = mask * idx + ~mask * masked_indices (True keeps idx).
    idx_M = jnp.where(mask, idx, mask_token).astype(jnp.int32)

    logit = transformer_forward(params, idx_M, cfg)
    target = idx
    return logit, target


# ----------------------------- main ------------------------------------------

if __name__ == "__main__":
    cfg = dict(
        num_tokens=8,        # sequence length of token indices
        codebook_sizes=16,   # num_factors; vocab = codebook_sizes + 1 (mask token)
        embed_dim=32,
        hidden_size=64,
        heads=4,
        n_layers=2,
        ff_mult=4,
    )
    B = 2

    root = jax.random.PRNGKey(0)
    k_params, k_idx, k_mask = jax.random.split(root, 3)

    params = init_transformer_params(k_params, cfg)
    idx = jax.random.randint(k_idx, (B, cfg["num_tokens"]), 0,
                             cfg["codebook_sizes"], dtype=jnp.int32)

    fwd = jax.jit(functools.partial(bidirectional_transformer_forward, cfg=cfg, t=0.5))
    logit, target = fwd(params, idx, k_mask)
    logit = jax.block_until_ready(logit)
    target = jax.block_until_ready(target)

    assert logit.shape == (B, cfg["num_tokens"], cfg["codebook_sizes"]), logit.shape
    assert target.shape == (B, cfg["num_tokens"]), target.shape
    assert bool(jnp.all(jnp.isfinite(logit)))
    print("KERNEL_OK")
</pallas_src>

<mosaic_0001>
module attributes {stable_mosaic.version = 11 : i64} {
  func.func @_fused_forward_kernel(%arg0: i32, %arg1: memref<1x8x1xi32, #tpu.memory_space<vmem>>, %arg2: memref<128x32xbf16, #tpu.memory_space<vmem>>, %arg3: memref<8x32xbf16, #tpu.memory_space<vmem>>, %arg4: memref<1x32xbf16, #tpu.memory_space<vmem>>, %arg5: memref<1x32xbf16, #tpu.memory_space<vmem>>, %arg6: memref<32x64xbf16, #tpu.memory_space<vmem>>, %arg7: memref<1x64xbf16, #tpu.memory_space<vmem>>, %arg8: memref<2x1x64xbf16, #tpu.memory_space<vmem>>, %arg9: memref<2x1x64xbf16, #tpu.memory_space<vmem>>, %arg10: memref<2x64x192xbf16, #tpu.memory_space<vmem>>, %arg11: memref<2x64x64xbf16, #tpu.memory_space<vmem>>, %arg12: memref<2x1x64xbf16, #tpu.memory_space<vmem>>, %arg13: memref<2x1x64xbf16, #tpu.memory_space<vmem>>, %arg14: memref<2x1x64xbf16, #tpu.memory_space<vmem>>, %arg15: memref<2x64x256xbf16, #tpu.memory_space<vmem>>, %arg16: memref<2x1x256xbf16, #tpu.memory_space<vmem>>, %arg17: memref<2x256x64xbf16, #tpu.memory_space<vmem>>, %arg18: memref<2x1x64xbf16, #tpu.memory_space<vmem>>, %arg19: memref<1x64xbf16, #tpu.memory_space<vmem>>, %arg20: memref<1x64xbf16, #tpu.memory_space<vmem>>, %arg21: memref<64x32xbf16, #tpu.memory_space<vmem>>, %arg22: memref<1x32xbf16, #tpu.memory_space<vmem>>, %arg23: memref<32x32xbf16, #tpu.memory_space<vmem>>, %arg24: memref<1x32xbf16, #tpu.memory_space<vmem>>, %arg25: memref<1x32xbf16, #tpu.memory_space<vmem>>, %arg26: memref<1x32xbf16, #tpu.memory_space<vmem>>, %arg27: memref<32x128xbf16, #tpu.memory_space<vmem>>, %arg28: memref<8x128xf32, #tpu.memory_space<vmem>>, %arg29: memref<1x8x128xf32, #tpu.memory_space<vmem>>) attributes {dimension_semantics = [#tpu.dimension_semantics<parallel>], iteration_bounds = array<i64: 2>, scalar_prefetch = 0 : i64, scratch_operands = 0 : i64, tpu.core_type = #tpu.core_type<tc>, window_params = [{transform_indices = @transform_0, window_bounds = array<i64: 1, 8, 1>}, {pipeline_mode = #tpu.pipeline_mode<synchronous>, transform_indices = @transform_1, window_bounds = array<i64: 128, 32>}, {pipeline_mode = #tpu.pipeline_mode<synchronous>, transform_indices = @transform_2, window_bounds = array<i64: 8, 32>}, {pipeline_mode = #tpu.pipeline_mode<synchronous>, transform_indices = @transform_3, window_bounds = array<i64: 1, 32>}, {pipeline_mode = #tpu.pipeline_mode<synchronous>, transform_indices = @transform_4, window_bounds = array<i64: 1, 32>}, {pipeline_mode = #tpu.pipeline_mode<synchronous>, transform_indices = @transform_5, window_bounds = array<i64: 32, 64>}, {pipeline_mode = #tpu.pipeline_mode<synchronous>, transform_indices = @transform_6, window_bounds = array<i64: 1, 64>}, {pipeline_mode = #tpu.pipeline_mode<synchronous>, transform_indices = @transform_7, window_bounds = array<i64: 2, 1, 64>}, {pipeline_mode = #tpu.pipeline_mode<synchronous>, transform_indices = @transform_8, window_bounds = array<i64: 2, 1, 64>}, {pipeline_mode = #tpu.pipeline_mode<synchronous>, transform_indices = @transform_9, window_bounds = array<i64: 2, 64, 192>}, {pipeline_mode = #tpu.pipeline_mode<synchronous>, transform_indices = @transform_10, window_bounds = array<i64: 2, 64, 64>}, {pipeline_mode = #tpu.pipeline_mode<synchronous>, transform_indices = @transform_11, window_bounds = array<i64: 2, 1, 64>}, {pipeline_mode = #tpu.pipeline_mode<synchronous>, transform_indices = @transform_12, window_bounds = array<i64: 2, 1, 64>}, {pipeline_mode = #tpu.pipeline_mode<synchronous>, transform_indices = @transform_13, window_bounds = array<i64: 2, 1, 64>}, {pipeline_mode = #tpu.pipeline_mode<synchronous>, transform_indices = @transform_14, window_bounds = array<i64: 2, 64, 256>}, {pipeline_mode = #tpu.pipeline_mode<synchronous>, transform_indices = @transform_15, window_bounds = array<i64: 2, 1, 256>}, {pipeline_mode = #tpu.pipeline_mode<synchronous>, transform_indices = @transform_16, window_bounds = array<i64: 2, 256, 64>}, {pipeline_mode = #tpu.pipeline_mode<synchronous>, transform_indices = @transform_17, window_bounds = array<i64: 2, 1, 64>}, {pipeline_mode = #tpu.pipeline_mode<synchronous>, transform_indices = @transform_18, window_bounds = array<i64: 1, 64>}, {pipeline_mode = #tpu.pipeline_mode<synchronous>, transform_indices = @transform_19, window_bounds = array<i64: 1, 64>}, {pipeline_mode = #tpu.pipeline_mode<synchronous>, transform_indices = @transform_20, window_bounds = array<i64: 64, 32>}, {pipeline_mode = #tpu.pipeline_mode<synchronous>, transform_indices = @transform_21, window_bounds = array<i64: 1, 32>}, {pipeline_mode = #tpu.pipeline_mode<synchronous>, transform_indices = @transform_22, window_bounds = array<i64: 32, 32>}, {pipeline_mode = #tpu.pipeline_mode<synchronous>, transform_indices = @transform_23, window_bounds = array<i64: 1, 32>}, {pipeline_mode = #tpu.pipeline_mode<synchronous>, transform_indices = @transform_24, window_bounds = array<i64: 1, 32>}, {pipeline_mode = #tpu.pipeline_mode<synchronous>, transform_indices = @transform_25, window_bounds = array<i64: 1, 32>}, {pipeline_mode = #tpu.pipeline_mode<synchronous>, transform_indices = @transform_26, window_bounds = array<i64: 32, 128>}, {pipeline_mode = #tpu.pipeline_mode<synchronous>, transform_indices = @transform_27, window_bounds = array<i64: 8, 128>}, {transform_indices = @transform_28, window_bounds = array<i64: 1, 8, 128>}]} {
    %c0 = arith.constant 0 : index
    %c0_0 = arith.constant 0 : index
    %c0_1 = arith.constant 0 : index
    %0 = vector.load %arg1[%c0, %c0_0, %c0_1] : memref<1x8x1xi32, #tpu.memory_space<vmem>>, vector<1x8x1xi32>
    %1 = vector.shape_cast %0 : vector<1x8x1xi32> to vector<8x1xi32>
    %2 = tpu.iota {dimensions = array<i32: 1>} : vector<8x128xi32>
    %3 = vector.broadcast %1 : vector<8x1xi32> to vector<8x128xi32>
    %4 = arith.cmpi eq, %2, %3 : vector<8x128xi32>
    %cst = arith.constant 1.000000e+00 : f32
    %cst_2 = arith.constant 0.000000e+00 : f32
    %5 = vector.broadcast %cst : f32 to vector<8x128xf32>
    %6 = vector.broadcast %cst_2 : f32 to vector<8x128xf32>
    %7 = arith.select %4, %5, %6 : vector<8x128xi1>, vector<8x128xf32>
    %8 = arith.truncf %7 : vector<8x128xf32> to vector<8x128xbf16>
    %c0_3 = arith.constant 0 : index
    %c0_4 = arith.constant 0 : index
    %9 = vector.load %arg2[%c0_3, %c0_4] : memref<128x32xbf16, #tpu.memory_space<vmem>>, vector<128x32xbf16>
    %cst_5 = arith.constant dense<0.000000e+00> : vector<8x32xf32>
    %10 = tpu.matmul %8, %9, %cst_5 {dimension_numbers = #tpu.dot_dimension_numbers<[1], [0], [0], [1], [0, 0, 1, 1], [], []>} : vector<8x128xbf16>, vector<128x32xbf16>, vector<8x32xf32> -> vector<8x32xf32>
    %c0_6 = arith.constant 0 : index
    %c0_7 = arith.constant 0 : index
    %11 = vector.load %arg3[%c0_6, %c0_7] : memref<8x32xbf16, #tpu.memory_space<vmem>>, vector<8x32xbf16>
    %12 = arith.extf %11 : vector<8x32xbf16> to vector<8x32xf32>
    %13 = arith.addf %10, %12 : vector<8x32xf32>
    %c0_8 = arith.constant 0 : index
    %c0_9 = arith.constant 0 : index
    %14 = vector.load %arg4[%c0_8, %c0_9] : memref<1x32xbf16, #tpu.memory_space<vmem>>, vector<1x32xbf16>
    %c0_10 = arith.constant 0 : index
    %c0_11 = arith.constant 0 : index
    %15 = vector.load %arg5[%c0_10, %c0_11] : memref<1x32xbf16, #tpu.memory_space<vmem>>, vector<1x32xbf16>
    %cst_12 = arith.constant dense<0.000000e+00> : vector<8xf32>
    %16 = vector.multi_reduction <add>, %13, %cst_12 [1] : vector<8x32xf32> to vector<8xf32>
    %17 = vector.shape_cast %16 : vector<8xf32> to vector<8x1xf32>
    %cst_13 = arith.constant 3.200000e+01 : f32
    %18 = vector.broadcast %cst_13 : f32 to vector<8x1xf32>
    %19 = arith.divf %17, %18 : vector<8x1xf32>
    %20 = vector.broadcast %19 : vector<8x1xf32> to vector<8x32xf32>
    %21 = arith.subf %13, %20 : vector<8x32xf32>
    %22 = arith.mulf %21, %21 : vector<8x32xf32>
    %cst_14 = arith.constant dense<0.000000e+00> : vector<8xf32>
    %23 = vector.multi_reduction <add>, %22, %cst_14 [1] : vector<8x32xf32> to vector<8xf32>
    %24 = vector.shape_cast %23 : vector<8xf32> to vector<8x1xf32>
    %cst_15 = arith.constant 3.200000e+01 : f32
    %25 = vector.broadcast %cst_15 : f32 to vector<8x1xf32>
    %26 = arith.divf %24, %25 : vector<8x1xf32>
    %cst_16 = arith.constant 9.99999996E-13 : f32
    %27 = vector.broadcast %cst_16 : f32 to vector<8x1xf32>
    %28 = arith.addf %26, %27 : vector<8x1xf32>
    %29 = math.rsqrt %28 : vector<8x1xf32>
    %30 = vector.broadcast %29 : vector<8x1xf32> to vector<8x32xf32>
    %31 = arith.mulf %21, %30 : vector<8x32xf32>
    %32 = arith.extf %14 : vector<1x32xbf16> to vector<1x32xf32>
    %33 = vector.broadcast %32 : vector<1x32xf32> to vector<8x32xf32>
    %34 = arith.mulf %31, %33 : vector<8x32xf32>
    %35 = arith.extf %15 : vector<1x32xbf16> to vector<1x32xf32>
    %36 = vector.broadcast %35 : vector<1x32xf32> to vector<8x32xf32>
    %37 = arith.addf %34, %36 : vector<8x32xf32>
    %38 = arith.truncf %37 : vector<8x32xf32> to vector<8x32xbf16>
    %c0_17 = arith.constant 0 : index
    %c0_18 = arith.constant 0 : index
    %39 = vector.load %arg6[%c0_17, %c0_18] : memref<32x64xbf16, #tpu.memory_space<vmem>>, vector<32x64xbf16>
    %cst_19 = arith.constant dense<0.000000e+00> : vector<8x64xf32>
    %40 = tpu.matmul %38, %39, %cst_19 {dimension_numbers = #tpu.dot_dimension_numbers<[1], [0], [0], [1], [0, 0, 1, 1], [], []>} : vector<8x32xbf16>, vector<32x64xbf16>, vector<8x64xf32> -> vector<8x64xf32>
    %c0_20 = arith.constant 0 : index
    %c0_21 = arith.constant 0 : index
    %41 = vector.load %arg7[%c0_20, %c0_21] : memref<1x64xbf16, #tpu.memory_space<vmem>>, vector<1x64xbf16>
    %42 = arith.extf %41 : vector<1x64xbf16> to vector<1x64xf32>
    %43 = vector.broadcast %42 : vector<1x64xf32> to vector<8x64xf32>
    %44 = arith.addf %40, %43 : vector<8x64xf32>
    %c0_22 = arith.constant 0 : index
    %c0_23 = arith.constant 0 : index
    %c0_24 = arith.constant 0 : index
    %45 = vector.load %arg8[%c0_22, %c0_23, %c0_24] : memref<2x1x64xbf16, #tpu.memory_space<vmem>>, vector<1x1x64xbf16>
    %46 = vector.shape_cast %45 : vector<1x1x64xbf16> to vector<1x64xbf16>
    %c0_25 = arith.constant 0 : index
    %c0_26 = arith.constant 0 : index
    %c0_27 = arith.constant 0 : index
    %47 = vector.load %arg9[%c0_25, %c0_26, %c0_27] : memref<2x1x64xbf16, #tpu.memory_space<vmem>>, vector<1x1x64xbf16>
    %48 = vector.shape_cast %47 : vector<1x1x64xbf16> to vector<1x64xbf16>
    %cst_28 = arith.constant dense<0.000000e+00> : vector<8xf32>
    %49 = vector.multi_reduction <add>, %44, %cst_28 [1] : vector<8x64xf32> to vector<8xf32>
    %50 = vector.shape_cast %49 : vector<8xf32> to vector<8x1xf32>
    %cst_29 = arith.constant 6.400000e+01 : f32
    %51 = vector.broadcast %cst_29 : f32 to vector<8x1xf32>
    %52 = arith.divf %50, %51 : vector<8x1xf32>
    %53 = vector.broadcast %52 : vector<8x1xf32> to vector<8x64xf32>
    %54 = arith.subf %44, %53 : vector<8x64xf32>
    %55 = arith.mulf %54, %54 : vector<8x64xf32>
    %cst_30 = arith.constant dense<0.000000e+00> : vector<8xf32>
    %56 = vector.multi_reduction <add>, %55, %cst_30 [1] : vector<8x64xf32> to vector<8xf32>
    %57 = vector.shape_cast %56 : vector<8xf32> to vector<8x1xf32>
    %cst_31 = arith.constant 6.400000e+01 : f32
    %58 = vector.broadcast %cst_31 : f32 to vector<8x1xf32>
    %59 = arith.divf %57, %58 : vector<8x1xf32>
    %cst_32 = arith.constant 9.99999974E-6 : f32
    %60 = vector.broadcast %cst_32 : f32 to vector<8x1xf32>
    %61 = arith.addf %59, %60 : vector<8x1xf32>
    %62 = math.rsqrt %61 : vector<8x1xf32>
    %63 = vector.broadcast %62 : vector<8x1xf32> to vector<8x64xf32>
    %64 = arith.mulf %54, %63 : vector<8x64xf32>
    %65 = arith.extf %46 : vector<1x64xbf16> to vector<1x64xf32>
    %66 = vector.broadcast %65 : vector<1x64xf32> to vector<8x64xf32>
    %67 = arith.mulf %64, %66 : vector<8x64xf32>
    %68 = arith.extf %48 : vector<1x64xbf16> to vector<1x64xf32>
    %69 = vector.broadcast %68 : vector<1x64xf32> to vector<8x64xf32>
    %70 = arith.addf %67, %69 : vector<8x64xf32>
    %71 = arith.truncf %70 : vector<8x64xf32> to vector<8x64xbf16>
    %c0_33 = arith.constant 0 : index
    %c0_34 = arith.constant 0 : index
    %c0_35 = arith.constant 0 : index
    %72 = vector.load %arg10[%c0_33, %c0_34, %c0_35] : memref<2x64x192xbf16, #tpu.memory_space<vmem>>, vector<1x64x192xbf16>
    %73 = vector.shape_cast %72 : vector<1x64x192xbf16> to vector<64x192xbf16>
    %cst_36 = arith.constant dense<0.000000e+00> : vector<8x192xf32>
    %74 = tpu.matmul %71, %73, %cst_36 {dimension_numbers = #tpu.dot_dimension_numbers<[1], [0], [0], [1], [0, 0, 1, 1], [], []>} : vector<8x64xbf16>, vector<64x192xbf16>, vector<8x192xf32> -> vector<8x192xf32>
    %75 = vector.extract_strided_slice %74 {offsets = [0, 0], sizes = [8, 16], strides = [1, 1]} : vector<8x192xf32> to vector<8x16xf32>
    %76 = vector.extract_strided_slice %74 {offsets = [0, 16], sizes = [8, 16], strides = [1, 1]} : vector<8x192xf32> to vector<8x16xf32>
    %77 = vector.extract_strided_slice %74 {offsets = [0, 32], sizes = [8, 16], strides = [1, 1]} : vector<8x192xf32> to vector<8x16xf32>
    %78 = vector.extract_strided_slice %74 {offsets = [0, 48], sizes = [8, 16], strides = [1, 1]} : vector<8x192xf32> to vector<8x16xf32>
    %79 = vector.shape_cast %75 : vector<8x16xf32> to vector<1x8x16xf32>
    %80 = vector.shape_cast %76 : vector<8x16xf32> to vector<1x8x16xf32>
    %81 = vector.shape_cast %77 : vector<8x16xf32> to vector<1x8x16xf32>
    %82 = vector.shape_cast %78 : vector<8x16xf32> to vector<1x8x16xf32>
    %83 = tpu.concatenate %79, %80, %81, %82 in 0 : vector<1x8x16xf32>, vector<1x8x16xf32>, vector<1x8x16xf32>, vector<1x8x16xf32> -> vector<4x8x16xf32>
    %84 = arith.truncf %83 : vector<4x8x16xf32> to vector<4x8x16xbf16>
    %85 = vector.extract_strided_slice %74 {offsets = [0, 64], sizes = [8, 16], strides = [1, 1]} : vector<8x192xf32> to vector<8x16xf32>
    %86 = vector.extract_strided_slice %74 {offsets = [0, 80], sizes = [8, 16], strides = [1, 1]} : vector<8x192xf32> to vector<8x16xf32>
    %87 = vector.extract_strided_slice %74 {offsets = [0, 96], sizes = [8, 16], strides = [1, 1]} : vector<8x192xf32> to vector<8x16xf32>
    %88 = vector.extract_strided_slice %74 {offsets = [0, 112], sizes = [8, 16], strides = [1, 1]} : vector<8x192xf32> to vector<8x16xf32>
    %89 = vector.shape_cast %85 : vector<8x16xf32> to vector<1x8x16xf32>
    %90 = vector.shape_cast %86 : vector<8x16xf32> to vector<1x8x16xf32>
    %91 = vector.shape_cast %87 : vector<8x16xf32> to vector<1x8x16xf32>
    %92 = vector.shape_cast %88 : vector<8x16xf32> to vector<1x8x16xf32>
    %93 = tpu.concatenate %89, %90, %91, %92 in 0 : vector<1x8x16xf32>, vector<1x8x16xf32>, vector<1x8x16xf32>, vector<1x8x16xf32> -> vector<4x8x16xf32>
    %94 = arith.truncf %93 : vector<4x8x16xf32> to vector<4x8x16xbf16>
    %95 = vector.extract_strided_slice %74 {offsets = [0, 128], sizes = [8, 16], strides = [1, 1]} : vector<8x192xf32> to vector<8x16xf32>
    %96 = vector.extract_strided_slice %74 {offsets = [0, 144], sizes = [8, 16], strides = [1, 1]} : vector<8x192xf32> to vector<8x16xf32>
    %97 = vector.extract_strided_slice %74 {offsets = [0, 160], sizes = [8, 16], strides = [1, 1]} : vector<8x192xf32> to vector<8x16xf32>
    %98 = vector.extract_strided_slice %74 {offsets = [0, 176], sizes = [8, 16], strides = [1, 1]} : vector<8x192xf32> to vector<8x16xf32>
    %99 = vector.shape_cast %95 : vector<8x16xf32> to vector<1x8x16xf32>
    %100 = vector.shape_cast %96 : vector<8x16xf32> to vector<1x8x16xf32>
    %101 = vector.shape_cast %97 : vector<8x16xf32> to vector<1x8x16xf32>
    %102 = vector.shape_cast %98 : vector<8x16xf32> to vector<1x8x16xf32>
    %103 = tpu.concatenate %99, %100, %101, %102 in 0 : vector<1x8x16xf32>, vector<1x8x16xf32>, vector<1x8x16xf32>, vector<1x8x16xf32> -> vector<4x8x16xf32>
    %104 = arith.truncf %103 : vector<4x8x16xf32> to vector<4x8x16xbf16>
    "tpu.trace_start"() <{level = 10 : i32, message = "hnd,hmd->hnm"}> : () -> ()
    %cst_37 = arith.constant dense<0.000000e+00> : vector<4x8x8xf32>
    %105 = tpu.matmul %84, %94, %cst_37 {dimension_numbers = #tpu.dot_dimension_numbers<[2], [2], [1], [1], [0, 0, 0, 1, 1, 1], [0], [0]>} : vector<4x8x16xbf16>, vector<4x8x16xbf16>, vector<4x8x8xf32> -> vector<4x8x8xf32>
    "tpu.trace_stop"() : () -> ()
    %cst_38 = arith.constant 2.500000e-01 : f32
    %106 = vector.broadcast %cst_38 : f32 to vector<4x8x8xf32>
    %107 = arith.mulf %105, %106 : vector<4x8x8xf32>
    %cst_39 = arith.constant dense<0xFF800000> : vector<4x8xf32>
    %108 = vector.multi_reduction <maximumf>, %107, %cst_39 [2] : vector<4x8x8xf32> to vector<4x8xf32>
    %109 = vector.shape_cast %108 : vector<4x8xf32> to vector<4x8x1xf32>
    %110 = vector.broadcast %109 : vector<4x8x1xf32> to vector<4x8x8xf32>
    %111 = arith.subf %107, %110 : vector<4x8x8xf32>
    %112 = math.exp %111 : vector<4x8x8xf32>
    %cst_40 = arith.constant dense<0.000000e+00> : vector<4x8xf32>
    %113 = vector.multi_reduction <add>, %112, %cst_40 [2] : vector<4x8x8xf32> to vector<4x8xf32>
    %114 = vector.shape_cast %113 : vector<4x8xf32> to vector<4x8x1xf32>
    %115 = vector.broadcast %114 : vector<4x8x1xf32> to vector<4x8x8xf32>
    %116 = arith.divf %112, %115 : vector<4x8x8xf32>
    %117 = arith.truncf %116 : vector<4x8x8xf32> to vector<4x8x8xbf16>
    "tpu.trace_start"() <{level = 10 : i32, message = "hnm,hmd->hnd"}> : () -> ()
    %cst_41 = arith.constant dense<0.000000e+00> : vector<4x8x16xf32>
    %118 = tpu.matmul %117, %104, %cst_41 {dimension_numbers = #tpu.dot_dimension_numbers<[2], [1], [1], [2], [0, 0, 0, 1, 1, 2], [0], [0]>} : vector<4x8x8xbf16>, vector<4x8x16xbf16>, vector<4x8x16xf32> -> vector<4x8x16xf32>
    "tpu.trace_stop"() : () -> ()
    %119 = vector.extract_strided_slice %118 {offsets = [0, 0, 0], sizes = [1, 8, 16], strides = [1, 1, 1]} : vector<4x8x16xf32> to vector<1x8x16xf32>
    %120 = vector.shape_cast %119 : vector<1x8x16xf32> to vector<8x16xf32>
    %121 = vector.extract_strided_slice %118 {offsets = [1, 0, 0], sizes = [1, 8, 16], strides = [1, 1, 1]} : vector<4x8x16xf32> to vector<1x8x16xf32>
    %122 = vector.shape_cast %121 : vector<1x8x16xf32> to vector<8x16xf32>
    %123 = vector.extract_strided_slice %118 {offsets = [2, 0, 0], sizes = [1, 8, 16], strides = [1, 1, 1]} : vector<4x8x16xf32> to vector<1x8x16xf32>
    %124 = vector.shape_cast %123 : vector<1x8x16xf32> to vector<8x16xf32>
    %125 = vector.extract_strided_slice %118 {offsets = [3, 0, 0], sizes = [1, 8, 16], strides = [1, 1, 1]} : vector<4x8x16xf32> to vector<1x8x16xf32>
    %126 = vector.shape_cast %125 : vector<1x8x16xf32> to vector<8x16xf32>
    %127 = tpu.concatenate %120, %122, %124, %126 in 1 : vector<8x16xf32>, vector<8x16xf32>, vector<8x16xf32>, vector<8x16xf32> -> vector<8x64xf32>
    %128 = arith.truncf %127 : vector<8x64xf32> to vector<8x64xbf16>
    %c0_42 = arith.constant 0 : index
    %c0_43 = arith.constant 0 : index
    %c0_44 = arith.constant 0 : index
    %129 = vector.load %arg11[%c0_42, %c0_43, %c0_44] : memref<2x64x64xbf16, #tpu.memory_space<vmem>>, vector<1x64x64xbf16>
    %130 = vector.shape_cast %129 : vector<1x64x64xbf16> to vector<64x64xbf16>
    %cst_45 = arith.constant dense<0.000000e+00> : vector<8x64xf32>
    %131 = tpu.matmul %128, %130, %cst_45 {dimension_numbers = #tpu.dot_dimension_numbers<[1], [0], [0], [1], [0, 0, 1, 1], [], []>} : vector<8x64xbf16>, vector<64x64xbf16>, vector<8x64xf32> -> vector<8x64xf32>
    %132 = arith.addf %44, %131 : vector<8x64xf32>
    %c0_46 = arith.constant 0 : index
    %c0_47 = arith.constant 0 : index
    %c0_48 = arith.constant 0 : index
    %133 = vector.load %arg12[%c0_46, %c0_47, %c0_48] : memref<2x1x64xbf16, #tpu.memory_space<vmem>>, vector<1x1x64xbf16>
    %134 = vector.shape_cast %133 : vector<1x1x64xbf16> to vector<1x64xbf16>
    %135 = arith.extf %134 : vector<1x64xbf16> to vector<1x64xf32>
    %136 = vector.broadcast %135 : vector<1x64xf32> to vector<8x64xf32>
    %137 = arith.addf %132, %136 : vector<8x64xf32>
    %c0_49 = arith.constant 0 : index
    %c0_50 = arith.constant 0 : index
    %c0_51 = arith.constant 0 : index
    %138 = vector.load %arg13[%c0_49, %c0_50, %c0_51] : memref<2x1x64xbf16, #tpu.memory_space<vmem>>, vector<1x1x64xbf16>
    %139 = vector.shape_cast %138 : vector<1x1x64xbf16> to vector<1x64xbf16>
    %c0_52 = arith.constant 0 : index
    %c0_53 = arith.constant 0 : index
    %c0_54 = arith.constant 0 : index
    %140 = vector.load %arg14[%c0_52, %c0_53, %c0_54] : memref<2x1x64xbf16, #tpu.memory_space<vmem>>, vector<1x1x64xbf16>
    %141 = vector.shape_cast %140 : vector<1x1x64xbf16> to vector<1x64xbf16>
    %cst_55 = arith.constant dense<0.000000e+00> : vector<8xf32>
    %142 = vector.multi_reduction <add>, %137, %cst_55 [1] : vector<8x64xf32> to vector<8xf32>
    %143 = vector.shape_cast %142 : vector<8xf32> to vector<8x1xf32>
    %cst_56 = arith.constant 6.400000e+01 : f32
    %144 = vector.broadcast %cst_56 : f32 to vector<8x1xf32>
    %145 = arith.divf %143, %144 : vector<8x1xf32>
    %146 = vector.broadcast %145 : vector<8x1xf32> to vector<8x64xf32>
    %147 = arith.subf %137, %146 : vector<8x64xf32>
    %148 = arith.mulf %147, %147 : vector<8x64xf32>
    %cst_57 = arith.constant dense<0.000000e+00> : vector<8xf32>
    %149 = vector.multi_reduction <add>, %148, %cst_57 [1] : vector<8x64xf32> to vector<8xf32>
    %150 = vector.shape_cast %149 : vector<8xf32> to vector<8x1xf32>
    %cst_58 = arith.constant 6.400000e+01 : f32
    %151 = vector.broadcast %cst_58 : f32 to vector<8x1xf32>
    %152 = arith.divf %150, %151 : vector<8x1xf32>
    %cst_59 = arith.constant 9.99999974E-6 : f32
    %153 = vector.broadcast %cst_59 : f32 to vector<8x1xf32>
    %154 = arith.addf %152, %153 : vector<8x1xf32>
    %155 = math.rsqrt %154 : vector<8x1xf32>
    %156 = vector.broadcast %155 : vector<8x1xf32> to vector<8x64xf32>
    %157 = arith.mulf %147, %156 : vector<8x64xf32>
    %158 = arith.extf %139 : vector<1x64xbf16> to vector<1x64xf32>
    %159 = vector.broadcast %158 : vector<1x64xf32> to vector<8x64xf32>
    %160 = arith.mulf %157, %159 : vector<8x64xf32>
    %161 = arith.extf %141 : vector<1x64xbf16> to vector<1x64xf32>
    %162 = vector.broadcast %161 : vector<1x64xf32> to vector<8x64xf32>
    %163 = arith.addf %160, %162 : vector<8x64xf32>
    %164 = arith.truncf %163 : vector<8x64xf32> to vector<8x64xbf16>
    %c0_60 = arith.constant 0 : index
    %c0_61 = arith.constant 0 : index
    %c0_62 = arith.constant 0 : index
    %165 = vector.load %arg15[%c0_60, %c0_61, %c0_62] : memref<2x64x256xbf16, #tpu.memory_space<vmem>>, vector<1x64x256xbf16>
    %166 = vector.shape_cast %165 : vector<1x64x256xbf16> to vector<64x256xbf16>
    %cst_63 = arith.constant dense<0.000000e+00> : vector<8x256xf32>
    %167 = tpu.matmul %164, %166, %cst_63 {dimension_numbers = #tpu.dot_dimension_numbers<[1], [0], [0], [1], [0, 0, 1, 1], [], []>} : vector<8x64xbf16>, vector<64x256xbf16>, vector<8x256xf32> -> vector<8x256xf32>
    %c0_64 = arith.constant 0 : index
    %c0_65 = arith.constant 0 : index
    %c0_66 = arith.constant 0 : index
    %168 = vector.load %arg16[%c0_64, %c0_65, %c0_66] : memref<2x1x256xbf16, #tpu.memory_space<vmem>>, vector<1x1x256xbf16>
    %169 = vector.shape_cast %168 : vector<1x1x256xbf16> to vector<1x256xbf16>
    %170 = arith.extf %169 : vector<1x256xbf16> to vector<1x256xf32>
    %171 = vector.broadcast %170 : vector<1x256xf32> to vector<8x256xf32>
    %172 = arith.addf %167, %171 : vector<8x256xf32>
    %cst_67 = arith.constant 5.000000e-01 : f32
    %173 = vector.broadcast %cst_67 : f32 to vector<8x256xf32>
    %174 = arith.mulf %173, %172 : vector<8x256xf32>
    %cst_68 = arith.constant 0.707106769 : f32
    %175 = vector.broadcast %cst_68 : f32 to vector<8x256xf32>
    %176 = arith.mulf %172, %175 : vector<8x256xf32>
    %177 = math.erf %176 : vector<8x256xf32>
    %cst_69 = arith.constant 1.000000e+00 : f32
    %178 = vector.broadcast %cst_69 : f32 to vector<8x256xf32>
    %179 = arith.addf %178, %177 : vector<8x256xf32>
    %180 = arith.mulf %174, %179 : vector<8x256xf32>
    %181 = arith.truncf %180 : vector<8x256xf32> to vector<8x256xbf16>
    %c0_70 = arith.constant 0 : index
    %c0_71 = arith.constant 0 : index
    %c0_72 = arith.constant 0 : index
    %182 = vector.load %arg17[%c0_70, %c0_71, %c0_72] : memref<2x256x64xbf16, #tpu.memory_space<vmem>>, vector<1x256x64xbf16>
    %183 = vector.shape_cast %182 : vector<1x256x64xbf16> to vector<256x64xbf16>
    %cst_73 = arith.constant dense<0.000000e+00> : vector<8x64xf32>
    %184 = tpu.matmul %181, %183, %cst_73 {dimension_numbers = #tpu.dot_dimension_numbers<[1], [0], [0], [1], [0, 0, 1, 1], [], []>} : vector<8x256xbf16>, vector<256x64xbf16>, vector<8x64xf32> -> vector<8x64xf32>
    %c0_74 = arith.constant 0 : index
    %c0_75 = arith.constant 0 : index
    %c0_76 = arith.constant 0 : index
    %185 = vector.load %arg18[%c0_74, %c0_75, %c0_76] : memref<2x1x64xbf16, #tpu.memory_space<vmem>>, vector<1x1x64xbf16>
    %186 = vector.shape_cast %185 : vector<1x1x64xbf16> to vector<1x64xbf16>
    %187 = arith.extf %186 : vector<1x64xbf16> to vector<1x64xf32>
    %188 = vector.broadcast %187 : vector<1x64xf32> to vector<8x64xf32>
    %189 = arith.addf %184, %188 : vector<8x64xf32>
    %190 = arith.addf %137, %189 : vector<8x64xf32>
    %c1 = arith.constant 1 : index
    %c0_77 = arith.constant 0 : index
    %c0_78 = arith.constant 0 : index
    %191 = vector.load %arg8[%c1, %c0_77, %c0_78] : memref<2x1x64xbf16, #tpu.memory_space<vmem>>, vector<1x1x64xbf16>
    %192 = vector.shape_cast %191 : vector<1x1x64xbf16> to vector<1x64xbf16>
    %c1_79 = arith.constant 1 : index
    %c0_80 = arith.constant 0 : index
    %c0_81 = arith.constant 0 : index
    %193 = vector.load %arg9[%c1_79, %c0_80, %c0_81] : memref<2x1x64xbf16, #tpu.memory_space<vmem>>, vector<1x1x64xbf16>
    %194 = vector.shape_cast %193 : vector<1x1x64xbf16> to vector<1x64xbf16>
    %cst_82 = arith.constant dense<0.000000e+00> : vector<8xf32>
    %195 = vector.multi_reduction <add>, %190, %cst_82 [1] : vector<8x64xf32> to vector<8xf32>
    %196 = vector.shape_cast %195 : vector<8xf32> to vector<8x1xf32>
    %cst_83 = arith.constant 6.400000e+01 : f32
    %197 = vector.broadcast %cst_83 : f32 to vector<8x1xf32>
    %198 = arith.divf %196, %197 : vector<8x1xf32>
    %199 = vector.broadcast %198 : vector<8x1xf32> to vector<8x64xf32>
    %200 = arith.subf %190, %199 : vector<8x64xf32>
    %201 = arith.mulf %200, %200 : vector<8x64xf32>
    %cst_84 = arith.constant dense<0.000000e+00> : vector<8xf32>
    %202 = vector.multi_reduction <add>, %201, %cst_84 [1] : vector<8x64xf32> to vector<8xf32>
    %203 = vector.shape_cast %202 : vector<8xf32> to vector<8x1xf32>
    %cst_85 = arith.constant 6.400000e+01 : f32
    %204 = vector.broadcast %cst_85 : f32 to vector<8x1xf32>
    %205 = arith.divf %203, %204 : vector<8x1xf32>
    %cst_86 = arith.constant 9.99999974E-6 : f32
    %206 = vector.broadcast %cst_86 : f32 to vector<8x1xf32>
    %207 = arith.addf %205, %206 : vector<8x1xf32>
    %208 = math.rsqrt %207 : vector<8x1xf32>
    %209 = vector.broadcast %208 : vector<8x1xf32> to vector<8x64xf32>
    %210 = arith.mulf %200, %209 : vector<8x64xf32>
    %211 = arith.extf %192 : vector<1x64xbf16> to vector<1x64xf32>
    %212 = vector.broadcast %211 : vector<1x64xf32> to vector<8x64xf32>
    %213 = arith.mulf %210, %212 : vector<8x64xf32>
    %214 = arith.extf %194 : vector<1x64xbf16> to vector<1x64xf32>
    %215 = vector.broadcast %214 : vector<1x64xf32> to vector<8x64xf32>
    %216 = arith.addf %213, %215 : vector<8x64xf32>
    %217 = arith.truncf %216 : vector<8x64xf32> to vector<8x64xbf16>
    %c1_87 = arith.constant 1 : index
    %c0_88 = arith.constant 0 : index
    %c0_89 = arith.constant 0 : index
    %218 = vector.load %arg10[%c1_87, %c0_88, %c0_89] : memref<2x64x192xbf16, #tpu.memory_space<vmem>>, vector<1x64x192xbf16>
    %219 = vector.shape_cast %218 : vector<1x64x192xbf16> to vector<64x192xbf16>
    %cst_90 = arith.constant dense<0.000000e+00> : vector<8x192xf32>
    %220 = tpu.matmul %217, %219, %cst_90 {dimension_numbers = #tpu.dot_dimension_numbers<[1], [0], [0], [1], [0, 0, 1, 1], [], []>} : vector<8x64xbf16>, vector<64x192xbf16>, vector<8x192xf32> -> vector<8x192xf32>
    %221 = vector.extract_strided_slice %220 {offsets = [0, 0], sizes = [8, 16], strides = [1, 1]} : vector<8x192xf32> to vector<8x16xf32>
    %222 = vector.extract_strided_slice %220 {offsets = [0, 16], sizes = [8, 16], strides = [1, 1]} : vector<8x192xf32> to vector<8x16xf32>
    %223 = vector.extract_strided_slice %220 {offsets = [0, 32], sizes = [8, 16], strides = [1, 1]} : vector<8x192xf32> to vector<8x16xf32>
    %224 = vector.extract_strided_slice %220 {offsets = [0, 48], sizes = [8, 16], strides = [1, 1]} : vector<8x192xf32> to vector<8x16xf32>
    %225 = vector.shape_cast %221 : vector<8x16xf32> to vector<1x8x16xf32>
    %226 = vector.shape_cast %222 : vector<8x16xf32> to vector<1x8x16xf32>
    %227 = vector.shape_cast %223 : vector<8x16xf32> to vector<1x8x16xf32>
    %228 = vector.shape_cast %224 : vector<8x16xf32> to vector<1x8x16xf32>
    %229 = tpu.concatenate %225, %226, %227, %228 in 0 : vector<1x8x16xf32>, vector<1x8x16xf32>, vector<1x8x16xf32>, vector<1x8x16xf32> -> vector<4x8x16xf32>
    %230 = arith.truncf %229 : vector<4x8x16xf32> to vector<4x8x16xbf16>
    %231 = vector.extract_strided_slice %220 {offsets = [0, 64], sizes = [8, 16], strides = [1, 1]} : vector<8x192xf32> to vector<8x16xf32>
    %232 = vector.extract_strided_slice %220 {offsets = [0, 80], sizes = [8, 16], strides = [1, 1]} : vector<8x192xf32> to vector<8x16xf32>
    %233 = vector.extract_strided_slice %220 {offsets = [0, 96], sizes = [8, 16], strides = [1, 1]} : vector<8x192xf32> to vector<8x16xf32>
    %234 = vector.extract_strided_slice %220 {offsets = [0, 112], sizes = [8, 16], strides = [1, 1]} : vector<8x192xf32> to vector<8x16xf32>
    %235 = vector.shape_cast %231 : vector<8x16xf32> to vector<1x8x16xf32>
    %236 = vector.shape_cast %232 : vector<8x16xf32> to vector<1x8x16xf32>
    %237 = vector.shape_cast %233 : vector<8x16xf32> to vector<1x8x16xf32>
    %238 = vector.shape_cast %234 : vector<8x16xf32> to vector<1x8x16xf32>
    %239 = tpu.concatenate %235, %236, %237, %238 in 0 : vector<1x8x16xf32>, vector<1x8x16xf32>, vector<1x8x16xf32>, vector<1x8x16xf32> -> vector<4x8x16xf32>
    %240 = arith.truncf %239 : vector<4x8x16xf32> to vector<4x8x16xbf16>
    %241 = vector.extract_strided_slice %220 {offsets = [0, 128], sizes = [8, 16], strides = [1, 1]} : vector<8x192xf32> to vector<8x16xf32>
    %242 = vector.extract_strided_slice %220 {offsets = [0, 144], sizes = [8, 16], strides = [1, 1]} : vector<8x192xf32> to vector<8x16xf32>
    %243 = vector.extract_strided_slice %220 {offsets = [0, 160], sizes = [8, 16], strides = [1, 1]} : vector<8x192xf32> to vector<8x16xf32>
    %244 = vector.extract_strided_slice %220 {offsets = [0, 176], sizes = [8, 16], strides = [1, 1]} : vector<8x192xf32> to vector<8x16xf32>
    %245 = vector.shape_cast %241 : vector<8x16xf32> to vector<1x8x16xf32>
    %246 = vector.shape_cast %242 : vector<8x16xf32> to vector<1x8x16xf32>
    %247 = vector.shape_cast %243 : vector<8x16xf32> to vector<1x8x16xf32>
    %248 = vector.shape_cast %244 : vector<8x16xf32> to vector<1x8x16xf32>
    %249 = tpu.concatenate %245, %246, %247, %248 in 0 : vector<1x8x16xf32>, vector<1x8x16xf32>, vector<1x8x16xf32>, vector<1x8x16xf32> -> vector<4x8x16xf32>
    %250 = arith.truncf %249 : vector<4x8x16xf32> to vector<4x8x16xbf16>
    "tpu.trace_start"() <{level = 10 : i32, message = "hnd,hmd->hnm"}> : () -> ()
    %cst_91 = arith.constant dense<0.000000e+00> : vector<4x8x8xf32>
    %251 = tpu.matmul %230, %240, %cst_91 {dimension_numbers = #tpu.dot_dimension_numbers<[2], [2], [1], [1], [0, 0, 0, 1, 1, 1], [0], [0]>} : vector<4x8x16xbf16>, vector<4x8x16xbf16>, vector<4x8x8xf32> -> vector<4x8x8xf32>
    "tpu.trace_stop"() : () -> ()
    %cst_92 = arith.constant 2.500000e-01 : f32
    %252 = vector.broadcast %cst_92 : f32 to vector<4x8x8xf32>
    %253 = arith.mulf %251, %252 : vector<4x8x8xf32>
    %cst_93 = arith.constant dense<0xFF800000> : vector<4x8xf32>
    %254 = vector.multi_reduction <maximumf>, %253, %cst_93 [2] : vector<4x8x8xf32> to vector<4x8xf32>
    %255 = vector.shape_cast %254 : vector<4x8xf32> to vector<4x8x1xf32>
    %256 = vector.broadcast %255 : vector<4x8x1xf32> to vector<4x8x8xf32>
    %257 = arith.subf %253, %256 : vector<4x8x8xf32>
    %258 = math.exp %257 : vector<4x8x8xf32>
    %cst_94 = arith.constant dense<0.000000e+00> : vector<4x8xf32>
    %259 = vector.multi_reduction <add>, %258, %cst_94 [2] : vector<4x8x8xf32> to vector<4x8xf32>
    %260 = vector.shape_cast %259 : vector<4x8xf32> to vector<4x8x1xf32>
    %261 = vector.broadcast %260 : vector<4x8x1xf32> to vector<4x8x8xf32>
    %262 = arith.divf %258, %261 : vector<4x8x8xf32>
    %263 = arith.truncf %262 : vector<4x8x8xf32> to vector<4x8x8xbf16>
    "tpu.trace_start"() <{level = 10 : i32, message = "hnm,hmd->hnd"}> : () -> ()
    %cst_95 = arith.constant dense<0.000000e+00> : vector<4x8x16xf32>
    %264 = tpu.matmul %263, %250, %cst_95 {dimension_numbers = #tpu.dot_dimension_numbers<[2], [1], [1], [2], [0, 0, 0, 1, 1, 2], [0], [0]>} : vector<4x8x8xbf16>, vector<4x8x16xbf16>, vector<4x8x16xf32> -> vector<4x8x16xf32>
    "tpu.trace_stop"() : () -> ()
    %265 = vector.extract_strided_slice %264 {offsets = [0, 0, 0], sizes = [1, 8, 16], strides = [1, 1, 1]} : vector<4x8x16xf32> to vector<1x8x16xf32>
    %266 = vector.shape_cast %265 : vector<1x8x16xf32> to vector<8x16xf32>
    %267 = vector.extract_strided_slice %264 {offsets = [1, 0, 0], sizes = [1, 8, 16], strides = [1, 1, 1]} : vector<4x8x16xf32> to vector<1x8x16xf32>
    %268 = vector.shape_cast %267 : vector<1x8x16xf32> to vector<8x16xf32>
    %269 = vector.extract_strided_slice %264 {offsets = [2, 0, 0], sizes = [1, 8, 16], strides = [1, 1, 1]} : vector<4x8x16xf32> to vector<1x8x16xf32>
    %270 = vector.shape_cast %269 : vector<1x8x16xf32> to vector<8x16xf32>
    %271 = vector.extract_strided_slice %264 {offsets = [3, 0, 0], sizes = [1, 8, 16], strides = [1, 1, 1]} : vector<4x8x16xf32> to vector<1x8x16xf32>
    %272 = vector.shape_cast %271 : vector<1x8x16xf32> to vector<8x16xf32>
    %273 = tpu.concatenate %266, %268, %270, %272 in 1 : vector<8x16xf32>, vector<8x16xf32>, vector<8x16xf32>, vector<8x16xf32> -> vector<8x64xf32>
    %274 = arith.truncf %273 : vector<8x64xf32> to vector<8x64xbf16>
    %c1_96 = arith.constant 1 : index
    %c0_97 = arith.constant 0 : index
    %c0_98 = arith.constant 0 : index
    %275 = vector.load %arg11[%c1_96, %c0_97, %c0_98] : memref<2x64x64xbf16, #tpu.memory_space<vmem>>, vector<1x64x64xbf16>
    %276 = vector.shape_cast %275 : vector<1x64x64xbf16> to vector<64x64xbf16>
    %cst_99 = arith.constant dense<0.000000e+00> : vector<8x64xf32>
    %277 = tpu.matmul %274, %276, %cst_99 {dimension_numbers = #tpu.dot_dimension_numbers<[1], [0], [0], [1], [0, 0, 1, 1], [], []>} : vector<8x64xbf16>, vector<64x64xbf16>, vector<8x64xf32> -> vector<8x64xf32>
    %278 = arith.addf %190, %277 : vector<8x64xf32>
    %c1_100 = arith.constant 1 : index
    %c0_101 = arith.constant 0 : index
    %c0_102 = arith.constant 0 : index
    %279 = vector.load %arg12[%c1_100, %c0_101, %c0_102] : memref<2x1x64xbf16, #tpu.memory_space<vmem>>, vector<1x1x64xbf16>
    %280 = vector.shape_cast %279 : vector<1x1x64xbf16> to vector<1x64xbf16>
    %281 = arith.extf %280 : vector<1x64xbf16> to vector<1x64xf32>
    %282 = vector.broadcast %281 : vector<1x64xf32> to vector<8x64xf32>
    %283 = arith.addf %278, %282 : vector<8x64xf32>
    %c1_103 = arith.constant 1 : index
    %c0_104 = arith.constant 0 : index
    %c0_105 = arith.constant 0 : index
    %284 = vector.load %arg13[%c1_103, %c0_104, %c0_105] : memref<2x1x64xbf16, #tpu.memory_space<vmem>>, vector<1x1x64xbf16>
    %285 = vector.shape_cast %284 : vector<1x1x64xbf16> to vector<1x64xbf16>
    %c1_106 = arith.constant 1 : index
    %c0_107 = arith.constant 0 : index
    %c0_108 = arith.constant 0 : index
    %286 = vector.load %arg14[%c1_106, %c0_107, %c0_108] : memref<2x1x64xbf16, #tpu.memory_space<vmem>>, vector<1x1x64xbf16>
    %287 = vector.shape_cast %286 : vector<1x1x64xbf16> to vector<1x64xbf16>
    %cst_109 = arith.constant dense<0.000000e+00> : vector<8xf32>
    %288 = vector.multi_reduction <add>, %283, %cst_109 [1] : vector<8x64xf32> to vector<8xf32>
    %289 = vector.shape_cast %288 : vector<8xf32> to vector<8x1xf32>
    %cst_110 = arith.constant 6.400000e+01 : f32
    %290 = vector.broadcast %cst_110 : f32 to vector<8x1xf32>
    %291 = arith.divf %289, %290 : vector<8x1xf32>
    %292 = vector.broadcast %291 : vector<8x1xf32> to vector<8x64xf32>
    %293 = arith.subf %283, %292 : vector<8x64xf32>
    %294 = arith.mulf %293, %293 : vector<8x64xf32>
    %cst_111 = arith.constant dense<0.000000e+00> : vector<8xf32>
    %295 = vector.multi_reduction <add>, %294, %cst_111 [1] : vector<8x64xf32> to vector<8xf32>
    %296 = vector.shape_cast %295 : vector<8xf32> to vector<8x1xf32>
    %cst_112 = arith.constant 6.400000e+01 : f32
    %297 = vector.broadcast %cst_112 : f32 to vector<8x1xf32>
    %298 = arith.divf %296, %297 : vector<8x1xf32>
    %cst_113 = arith.constant 9.99999974E-6 : f32
    %299 = vector.broadcast %cst_113 : f32 to vector<8x1xf32>
    %300 = arith.addf %298, %299 : vector<8x1xf32>
    %301 = math.rsqrt %300 : vector<8x1xf32>
    %302 = vector.broadcast %301 : vector<8x1xf32> to vector<8x64xf32>
    %303 = arith.mulf %293, %302 : vector<8x64xf32>
    %304 = arith.extf %285 : vector<1x64xbf16> to vector<1x64xf32>
    %305 = vector.broadcast %304 : vector<1x64xf32> to vector<8x64xf32>
    %306 = arith.mulf %303, %305 : vector<8x64xf32>
    %307 = arith.extf %287 : vector<1x64xbf16> to vector<1x64xf32>
    %308 = vector.broadcast %307 : vector<1x64xf32> to vector<8x64xf32>
    %309 = arith.addf %306, %308 : vector<8x64xf32>
    %310 = arith.truncf %309 : vector<8x64xf32> to vector<8x64xbf16>
    %c1_114 = arith.constant 1 : index
    %c0_115 = arith.constant 0 : index
    %c0_116 = arith.constant 0 : index
    %311 = vector.load %arg15[%c1_114, %c0_115, %c0_116] : memref<2x64x256xbf16, #tpu.memory_space<vmem>>, vector<1x64x256xbf16>
    %312 = vector.shape_cast %311 : vector<1x64x256xbf16> to vector<64x256xbf16>
    %cst_117 = arith.constant dense<0.000000e+00> : vector<8x256xf32>
    %313 = tpu.matmul %310, %312, %cst_117 {dimension_numbers = #tpu.dot_dimension_numbers<[1], [0], [0], [1], [0, 0, 1, 1], [], []>} : vector<8x64xbf16>, vector<64x256xbf16>, vector<8x256xf32> -> vector<8x256xf32>
    %c1_118 = arith.constant 1 : index
    %c0_119 = arith.constant 0 : index
    %c0_120 = arith.constant 0 : index
    %314 = vector.load %arg16[%c1_118, %c0_119, %c0_120] : memref<2x1x256xbf16, #tpu.memory_space<vmem>>, vector<1x1x256xbf16>
    %315 = vector.shape_cast %314 : vector<1x1x256xbf16> to vector<1x256xbf16>
    %316 = arith.extf %315 : vector<1x256xbf16> to vector<1x256xf32>
    %317 = vector.broadcast %316 : vector<1x256xf32> to vector<8x256xf32>
    %318 = arith.addf %313, %317 : vector<8x256xf32>
    %cst_121 = arith.constant 5.000000e-01 : f32
    %319 = vector.broadcast %cst_121 : f32 to vector<8x256xf32>
    %320 = arith.mulf %319, %318 : vector<8x256xf32>
    %cst_122 = arith.constant 0.707106769 : f32
    %321 = vector.broadcast %cst_122 : f32 to vector<8x256xf32>
    %322 = arith.mulf %318, %321 : vector<8x256xf32>
    %323 = math.erf %322 : vector<8x256xf32>
    %cst_123 = arith.constant 1.000000e+00 : f32
    %324 = vector.broadcast %cst_123 : f32 to vector<8x256xf32>
    %325 = arith.addf %324, %323 : vector<8x256xf32>
    %326 = arith.mulf %320, %325 : vector<8x256xf32>
    %327 = arith.truncf %326 : vector<8x256xf32> to vector<8x256xbf16>
    %c1_124 = arith.constant 1 : index
    %c0_125 = arith.constant 0 : index
    %c0_126 = arith.constant 0 : index
    %328 = vector.load %arg17[%c1_124, %c0_125, %c0_126] : memref<2x256x64xbf16, #tpu.memory_space<vmem>>, vector<1x256x64xbf16>
    %329 = vector.shape_cast %328 : vector<1x256x64xbf16> to vector<256x64xbf16>
    %cst_127 = arith.constant dense<0.000000e+00> : vector<8x64xf32>
    %330 = tpu.matmul %327, %329, %cst_127 {dimension_numbers = #tpu.dot_dimension_numbers<[1], [0], [0], [1], [0, 0, 1, 1], [], []>} : vector<8x256xbf16>, vector<256x64xbf16>, vector<8x64xf32> -> vector<8x64xf32>
    %c1_128 = arith.constant 1 : index
    %c0_129 = arith.constant 0 : index
    %c0_130 = arith.constant 0 : index
    %331 = vector.load %arg18[%c1_128, %c0_129, %c0_130] : memref<2x1x64xbf16, #tpu.memory_space<vmem>>, vector<1x1x64xbf16>
    %332 = vector.shape_cast %331 : vector<1x1x64xbf16> to vector<1x64xbf16>
    %333 = arith.extf %332 : vector<1x64xbf16> to vector<1x64xf32>
    %334 = vector.broadcast %333 : vector<1x64xf32> to vector<8x64xf32>
    %335 = arith.addf %330, %334 : vector<8x64xf32>
    %336 = arith.addf %283, %335 : vector<8x64xf32>
    %c0_131 = arith.constant 0 : index
    %c0_132 = arith.constant 0 : index
    %337 = vector.load %arg19[%c0_131, %c0_132] : memref<1x64xbf16, #tpu.memory_space<vmem>>, vector<1x64xbf16>
    %c0_133 = arith.constant 0 : index
    %c0_134 = arith.constant 0 : index
    %338 = vector.load %arg20[%c0_133, %c0_134] : memref<1x64xbf16, #tpu.memory_space<vmem>>, vector<1x64xbf16>
    %cst_135 = arith.constant dense<0.000000e+00> : vector<8xf32>
    %339 = vector.multi_reduction <add>, %336, %cst_135 [1] : vector<8x64xf32> to vector<8xf32>
    %340 = vector.shape_cast %339 : vector<8xf32> to vector<8x1xf32>
    %cst_136 = arith.constant 6.400000e+01 : f32
    %341 = vector.broadcast %cst_136 : f32 to vector<8x1xf32>
    %342 = arith.divf %340, %341 : vector<8x1xf32>
    %343 = vector.broadcast %342 : vector<8x1xf32> to vector<8x64xf32>
    %344 = arith.subf %336, %343 : vector<8x64xf32>
    %345 = arith.mulf %344, %344 : vector<8x64xf32>
    %cst_137 = arith.constant dense<0.000000e+00> : vector<8xf32>
    %346 = vector.multi_reduction <add>, %345, %cst_137 [1] : vector<8x64xf32> to vector<8xf32>
    %347 = vector.shape_cast %346 : vector<8xf32> to vector<8x1xf32>
    %cst_138 = arith.constant 6.400000e+01 : f32
    %348 = vector.broadcast %cst_138 : f32 to vector<8x1xf32>
    %349 = arith.divf %347, %348 : vector<8x1xf32>
    %cst_139 = arith.constant 9.99999974E-6 : f32
    %350 = vector.broadcast %cst_139 : f32 to vector<8x1xf32>
    %351 = arith.addf %349, %350 : vector<8x1xf32>
    %352 = math.rsqrt %351 : vector<8x1xf32>
    %353 = vector.broadcast %352 : vector<8x1xf32> to vector<8x64xf32>
    %354 = arith.mulf %344, %353 : vector<8x64xf32>
    %355 = arith.extf %337 : vector<1x64xbf16> to vector<1x64xf32>
    %356 = vector.broadcast %355 : vector<1x64xf32> to vector<8x64xf32>
    %357 = arith.mulf %354, %356 : vector<8x64xf32>
    %358 = arith.extf %338 : vector<1x64xbf16> to vector<1x64xf32>
    %359 = vector.broadcast %358 : vector<1x64xf32> to vector<8x64xf32>
    %360 = arith.addf %357, %359 : vector<8x64xf32>
    %361 = arith.truncf %360 : vector<8x64xf32> to vector<8x64xbf16>
    %c0_140 = arith.constant 0 : index
    %c0_141 = arith.constant 0 : index
    %362 = vector.load %arg21[%c0_140, %c0_141] : memref<64x32xbf16, #tpu.memory_space<vmem>>, vector<64x32xbf16>
    %cst_142 = arith.constant dense<0.000000e+00> : vector<8x32xf32>
    %363 = tpu.matmul %361, %362, %cst_142 {dimension_numbers = #tpu.dot_dimension_numbers<[1], [0], [0], [1], [0, 0, 1, 1], [], []>} : vector<8x64xbf16>, vector<64x32xbf16>, vector<8x32xf32> -> vector<8x32xf32>
    %c0_143 = arith.constant 0 : index
    %c0_144 = arith.constant 0 : index
    %364 = vector.load %arg22[%c0_143, %c0_144] : memref<1x32xbf16, #tpu.memory_space<vmem>>, vector<1x32xbf16>
    %365 = arith.extf %364 : vector<1x32xbf16> to vector<1x32xf32>
    %366 = vector.broadcast %365 : vector<1x32xf32> to vector<8x32xf32>
    %367 = arith.addf %363, %366 : vector<8x32xf32>
    %368 = arith.truncf %367 : vector<8x32xf32> to vector<8x32xbf16>
    %c0_145 = arith.constant 0 : index
    %c0_146 = arith.constant 0 : index
    %369 = vector.load %arg23[%c0_145, %c0_146] : memref<32x32xbf16, #tpu.memory_space<vmem>>, vector<32x32xbf16>
    %cst_147 = arith.constant dense<0.000000e+00> : vector<8x32xf32>
    %370 = tpu.matmul %368, %369, %cst_147 {dimension_numbers = #tpu.dot_dimension_numbers<[1], [0], [0], [1], [0, 0, 1, 1], [], []>} : vector<8x32xbf16>, vector<32x32xbf16>, vector<8x32xf32> -> vector<8x32xf32>
    %c0_148 = arith.constant 0 : index
    %c0_149 = arith.constant 0 : index
    %371 = vector.load %arg24[%c0_148, %c0_149] : memref<1x32xbf16, #tpu.memory_space<vmem>>, vector<1x32xbf16>
    %372 = arith.extf %371 : vector<1x32xbf16> to vector<1x32xf32>
    %373 = vector.broadcast %372 : vector<1x32xf32> to vector<8x32xf32>
    %374 = arith.addf %370, %373 : vector<8x32xf32>
    %cst_150 = arith.constant 5.000000e-01 : f32
    %375 = vector.broadcast %cst_150 : f32 to vector<8x32xf32>
    %376 = arith.mulf %375, %374 : vector<8x32xf32>
    %cst_151 = arith.constant 0.707106769 : f32
    %377 = vector.broadcast %cst_151 : f32 to vector<8x32xf32>
    %378 = arith.mulf %374, %377 : vector<8x32xf32>
    %379 = math.erf %378 : vector<8x32xf32>
    %cst_152 = arith.constant 1.000000e+00 : f32
    %380 = vector.broadcast %cst_152 : f32 to vector<8x32xf32>
    %381 = arith.addf %380, %379 : vector<8x32xf32>
    %382 = arith.mulf %376, %381 : vector<8x32xf32>
    %c0_153 = arith.constant 0 : index
    %c0_154 = arith.constant 0 : index
    %383 = vector.load %arg25[%c0_153, %c0_154] : memref<1x32xbf16, #tpu.memory_space<vmem>>, vector<1x32xbf16>
    %c0_155 = arith.constant 0 : index
    %c0_156 = arith.constant 0 : index
    %384 = vector.load %arg26[%c0_155, %c0_156] : memref<1x32xbf16, #tpu.memory_space<vmem>>, vector<1x32xbf16>
    %cst_157 = arith.constant dense<0.000000e+00> : vector<8xf32>
    %385 = vector.multi_reduction <add>, %382, %cst_157 [1] : vector<8x32xf32> to vector<8xf32>
    %386 = vector.shape_cast %385 : vector<8xf32> to vector<8x1xf32>
    %cst_158 = arith.constant 3.200000e+01 : f32
    %387 = vector.broadcast %cst_158 : f32 to vector<8x1xf32>
    %388 = arith.divf %386, %387 : vector<8x1xf32>
    %389 = vector.broadcast %388 : vector<8x1xf32> to vector<8x32xf32>
    %390 = arith.subf %382, %389 : vector<8x32xf32>
    %391 = arith.mulf %390, %390 : vector<8x32xf32>
    %cst_159 = arith.constant dense<0.000000e+00> : vector<8xf32>
    %392 = vector.multi_reduction <add>, %391, %cst_159 [1] : vector<8x32xf32> to vector<8xf32>
    %393 = vector.shape_cast %392 : vector<8xf32> to vector<8x1xf32>
    %cst_160 = arith.constant 3.200000e+01 : f32
    %394 = vector.broadcast %cst_160 : f32 to vector<8x1xf32>
    %395 = arith.divf %393, %394 : vector<8x1xf32>
    %cst_161 = arith.constant 9.99999996E-13 : f32
    %396 = vector.broadcast %cst_161 : f32 to vector<8x1xf32>
    %397 = arith.addf %395, %396 : vector<8x1xf32>
    %398 = math.rsqrt %397 : vector<8x1xf32>
    %399 = vector.broadcast %398 : vector<8x1xf32> to vector<8x32xf32>
    %400 = arith.mulf %390, %399 : vector<8x32xf32>
    %401 = arith.extf %383 : vector<1x32xbf16> to vector<1x32xf32>
    %402 = vector.broadcast %401 : vector<1x32xf32> to vector<8x32xf32>
    %403 = arith.mulf %400, %402 : vector<8x32xf32>
    %404 = arith.extf %384 : vector<1x32xbf16> to vector<1x32xf32>
    %405 = vector.broadcast %404 : vector<1x32xf32> to vector<8x32xf32>
    %406 = arith.addf %403, %405 : vector<8x32xf32>
    %407 = arith.truncf %406 : vector<8x32xf32> to vector<8x32xbf16>
    %c0_162 = arith.constant 0 : index
    %c0_163 = arith.constant 0 : index
    %408 = vector.load %arg27[%c0_162, %c0_163] : memref<32x128xbf16, #tpu.memory_space<vmem>>, vector<32x128xbf16>
    %cst_164 = arith.constant dense<0.000000e+00> : vector<8x128xf32>
    %409 = tpu.matmul %407, %408, %cst_164 {dimension_numbers = #tpu.dot_dimension_numbers<[1], [0], [0], [1], [0, 0, 1, 1], [], []>} : vector<8x32xbf16>, vector<32x128xbf16>, vector<8x128xf32> -> vector<8x128xf32>
    %c0_165 = arith.constant 0 : index
    %c0_166 = arith.constant 0 : index
    %410 = vector.load %arg28[%c0_165, %c0_166] : memref<8x128xf32, #tpu.memory_space<vmem>>, vector<8x128xf32>
    %411 = arith.addf %409, %410 : vector<8x128xf32>
    %c0_167 = arith.constant 0 : index
    %c0_168 = arith.constant 0 : index
    %c0_169 = arith.constant 0 : index
    %412 = vector.load %arg29[%c0_167, %c0_168, %c0_169] : memref<1x8x128xf32, #tpu.memory_space<vmem>>, vector<1x8x128xf32>
    %413 = vector.shape_cast %412 : vector<1x8x128xf32> to vector<8x128xf32>
    %414 = vector.shape_cast %411 : vector<8x128xf32> to vector<1x8x128xf32>
    tpu.vector_store %arg29[%c0_167, %c0_168, %c0_169], %414 {strides = array<i32>} : memref<1x8x128xf32, #tpu.memory_space<vmem>>, vector<1x8x128xf32>,
    return
  }
  func.func @transform_0(%arg0: i32) -> (i32, i32, i32) {
    %c0_i32 = arith.constant 0 : i32
    %c0_i32_0 = arith.constant 0 : i32
    %c0_i32_1 = arith.constant 0 : i32
    return %arg0, %c0_i32, %c0_i32_0 : i32, i32, i32
  }
  func.func @transform_1(%arg0: i32) -> (i32, i32) {
    %c0_i32 = arith.constant 0 : i32
    %c0_i32_0 = arith.constant 0 : i32
    %c0_i32_1 = arith.constant 0 : i32
    return %c0_i32, %c0_i32_0 : i32, i32
  }
  func.func @transform_2(%arg0: i32) -> (i32, i32) {
    %c0_i32 = arith.constant 0 : i32
    %c0_i32_0 = arith.constant 0 : i32
    %c0_i32_1 = arith.constant 0 : i32
    return %c0_i32, %c0_i32_0 : i32, i32
  }
  func.func @transform_3(%arg0: i32) -> (i32, i32) {
    %c0_i32 = arith.constant 0 : i32
    %c0_i32_0 = arith.constant 0 : i32
    %c0_i32_1 = arith.constant 0 : i32
    return %c0_i32, %c0_i32_0 : i32, i32
  }
  func.func @transform_4(%arg0: i32) -> (i32, i32) {
    %c0_i32 = arith.constant 0 : i32
    %c0_i32_0 = arith.constant 0 : i32
    %c0_i32_1 = arith.constant 0 : i32
    return %c0_i32, %c0_i32_0 : i32, i32
  }
  func.func @transform_5(%arg0: i32) -> (i32, i32) {
    %c0_i32 = arith.constant 0 : i32
    %c0_i32_0 = arith.constant 0 : i32
    %c0_i32_1 = arith.constant 0 : i32
    return %c0_i32, %c0_i32_0 : i32, i32
  }
  func.func @transform_6(%arg0: i32) -> (i32, i32) {
    %c0_i32 = arith.constant 0 : i32
    %c0_i32_0 = arith.constant 0 : i32
    %c0_i32_1 = arith.constant 0 : i32
    return %c0_i32, %c0_i32_0 : i32, i32
  }
  func.func @transform_7(%arg0: i32) -> (i32, i32, i32) {
    %c0_i32 = arith.constant 0 : i32
    %c0_i32_0 = arith.constant 0 : i32
    %c0_i32_1 = arith.constant 0 : i32
    %c0_i32_2 = arith.constant 0 : i32
    return %c0_i32, %c0_i32_0, %c0_i32_1 : i32, i32, i32
  }
  func.func @transform_8(%arg0: i32) -> (i32, i32, i32) {
    %c0_i32 = arith.constant 0 : i32
    %c0_i32_0 = arith.constant 0 : i32
    %c0_i32_1 = arith.constant 0 : i32
    %c0_i32_2 = arith.constant 0 : i32
    return %c0_i32, %c0_i32_0, %c0_i32_1 : i32, i32, i32
  }
  func.func @transform_9(%arg0: i32) -> (i32, i32, i32) {
    %c0_i32 = arith.constant 0 : i32
    %c0_i32_0 = arith.constant 0 : i32
    %c0_i32_1 = arith.constant 0 : i32
    %c0_i32_2 = arith.constant 0 : i32
    return %c0_i32, %c0_i32_0, %c0_i32_1 : i32, i32, i32
  }
  func.func @transform_10(%arg0: i32) -> (i32, i32, i32) {
    %c0_i32 = arith.constant 0 : i32
    %c0_i32_0 = arith.constant 0 : i32
    %c0_i32_1 = arith.constant 0 : i32
    %c0_i32_2 = arith.constant 0 : i32
    return %c0_i32, %c0_i32_0, %c0_i32_1 : i32, i32, i32
  }
  func.func @transform_11(%arg0: i32) -> (i32, i32, i32) {
    %c0_i32 = arith.constant 0 : i32
    %c0_i32_0 = arith.constant 0 : i32
    %c0_i32_1 = arith.constant 0 : i32
    %c0_i32_2 = arith.constant 0 : i32
    return %c0_i32, %c0_i32_0, %c0_i32_1 : i32, i32, i32
  }
  func.func @transform_12(%arg0: i32) -> (i32, i32, i32) {
    %c0_i32 = arith.constant 0 : i32
    %c0_i32_0 = arith.constant 0 : i32
    %c0_i32_1 = arith.constant 0 : i32
    %c0_i32_2 = arith.constant 0 : i32
    return %c0_i32, %c0_i32_0, %c0_i32_1 : i32, i32, i32
  }
  func.func @transform_13(%arg0: i32) -> (i32, i32, i32) {
    %c0_i32 = arith.constant 0 : i32
    %c0_i32_0 = arith.constant 0 : i32
    %c0_i32_1 = arith.constant 0 : i32
    %c0_i32_2 = arith.constant 0 : i32
    return %c0_i32, %c0_i32_0, %c0_i32_1 : i32, i32, i32
  }
  func.func @transform_14(%arg0: i32) -> (i32, i32, i32) {
    %c0_i32 = arith.constant 0 : i32
    %c0_i32_0 = arith.constant 0 : i32
    %c0_i32_1 = arith.constant 0 : i32
    %c0_i32_2 = arith.constant 0 : i32
    return %c0_i32, %c0_i32_0, %c0_i32_1 : i32, i32, i32
  }
  func.func @transform_15(%arg0: i32) -> (i32, i32, i32) {
    %c0_i32 = arith.constant 0 : i32
    %c0_i32_0 = arith.constant 0 : i32
    %c0_i32_1 = arith.constant 0 : i32
    %c0_i32_2 = arith.constant 0 : i32
    return %c0_i32, %c0_i32_0, %c0_i32_1 : i32, i32, i32
  }
  func.func @transform_16(%arg0: i32) -> (i32, i32, i32) {
    %c0_i32 = arith.constant 0 : i32
    %c0_i32_0 = arith.constant 0 : i32
    %c0_i32_1 = arith.constant 0 : i32
    %c0_i32_2 = arith.constant 0 : i32
    return %c0_i32, %c0_i32_0, %c0_i32_1 : i32, i32, i32
  }
  func.func @transform_17(%arg0: i32) -> (i32, i32, i32) {
    %c0_i32 = arith.constant 0 : i32
    %c0_i32_0 = arith.constant 0 : i32
    %c0_i32_1 = arith.constant 0 : i32
    %c0_i32_2 = arith.constant 0 : i32
    return %c0_i32, %c0_i32_0, %c0_i32_1 : i32, i32, i32
  }
  func.func @transform_18(%arg0: i32) -> (i32, i32) {
    %c0_i32 = arith.constant 0 : i32
    %c0_i32_0 = arith.constant 0 : i32
    %c0_i32_1 = arith.constant 0 : i32
    return %c0_i32, %c0_i32_0 : i32, i32
  }
  func.func @transform_19(%arg0: i32) -> (i32, i32) {
    %c0_i32 = arith.constant 0 : i32
    %c0_i32_0 = arith.constant 0 : i32
    %c0_i32_1 = arith.constant 0 : i32
    return %c0_i32, %c0_i32_0 : i32, i32
  }
  func.func @transform_20(%arg0: i32) -> (i32, i32) {
    %c0_i32 = arith.constant 0 : i32
    %c0_i32_0 = arith.constant 0 : i32
    %c0_i32_1 = arith.constant 0 : i32
    return %c0_i32, %c0_i32_0 : i32, i32
  }
  func.func @transform_21(%arg0: i32) -> (i32, i32) {
    %c0_i32 = arith.constant 0 : i32
    %c0_i32_0 = arith.constant 0 : i32
    %c0_i32_1 = arith.constant 0 : i32
    return %c0_i32, %c0_i32_0 : i32, i32
  }
  func.func @transform_22(%arg0: i32) -> (i32, i32) {
    %c0_i32 = arith.constant 0 : i32
    %c0_i32_0 = arith.constant 0 : i32
    %c0_i32_1 = arith.constant 0 : i32
    return %c0_i32, %c0_i32_0 : i32, i32
  }
  func.func @transform_23(%arg0: i32) -> (i32, i32) {
    %c0_i32 = arith.constant 0 : i32
    %c0_i32_0 = arith.constant 0 : i32
    %c0_i32_1 = arith.constant 0 : i32
    return %c0_i32, %c0_i32_0 : i32, i32
  }
  func.func @transform_24(%arg0: i32) -> (i32, i32) {
    %c0_i32 = arith.constant 0 : i32
    %c0_i32_0 = arith.constant 0 : i32
    %c0_i32_1 = arith.constant 0 : i32
    return %c0_i32, %c0_i32_0 : i32, i32
  }
  func.func @transform_25(%arg0: i32) -> (i32, i32) {
    %c0_i32 = arith.constant 0 : i32
    %c0_i32_0 = arith.constant 0 : i32
    %c0_i32_1 = arith.constant 0 : i32
    return %c0_i32, %c0_i32_0 : i32, i32
  }
  func.func @transform_26(%arg0: i32) -> (i32, i32) {
    %c0_i32 = arith.constant 0 : i32
    %c0_i32_0 = arith.constant 0 : i32
    %c0_i32_1 = arith.constant 0 : i32
    return %c0_i32, %c0_i32_0 : i32, i32
  }
  func.func @transform_27(%arg0: i32) -> (i32, i32) {
    %c0_i32 = arith.constant 0 : i32
    %c0_i32_0 = arith.constant 0 : i32
    %c0_i32_1 = arith.constant 0 : i32
    return %c0_i32, %c0_i32_0 : i32, i32
  }
  func.func @transform_28(%arg0: i32) -> (i32, i32, i32) {
    %c0_i32 = arith.constant 0 : i32
    %c0_i32_0 = arith.constant 0 : i32
    %c0_i32_1 = arith.constant 0 : i32
    return %arg0, %c0_i32, %c0_i32_0 : i32, i32, i32
  }
}

</mosaic_0001>

<llo_original>
// kernel: bidirectional_transformer_forward.1
$region0: #{bidirectional_transformer_forward.1}
  #allocation0 [shape = 'u32[]', space=smem, size = 0x4, offset = 0x4, fixed_abs, tag = 'smem constant byte address 0x4 - core index']
  #allocation1 [shape = 'u32[144,128]{1,0:T(1,128)}', space=vmem, size = 0x12000, scoped, tag = 'internal scratch']
  %s0 = inlined_call_operand.vmem [shape: s32[2,8,1], index: 0, kind: input, shape index: {}]
  %s1 = inlined_call_operand.vmem [shape: bf16[128,32], index: 1, kind: input, shape index: {}]
  %s2 = inlined_call_operand.vmem [shape: bf16[8,32], index: 2, kind: input, shape index: {}]
  %s3 = inlined_call_operand.vmem [shape: bf16[1,32], index: 3, kind: input, shape index: {}]
  %s4 = inlined_call_operand.vmem [shape: bf16[1,32], index: 4, kind: input, shape index: {}]
  %s5 = inlined_call_operand.vmem [shape: bf16[32,64], index: 5, kind: input, shape index: {}]
  %s6 = inlined_call_operand.vmem [shape: bf16[1,64], index: 6, kind: input, shape index: {}]
  %s7 = inlined_call_operand.vmem [shape: bf16[2,1,64], index: 7, kind: input, shape index: {}]
  %s8 = inlined_call_operand.vmem [shape: bf16[2,1,64], index: 8, kind: input, shape index: {}]
  %s9 = inlined_call_operand.vmem [shape: bf16[2,64,192], index: 9, kind: input, shape index: {}]
  %s10 = inlined_call_operand.vmem [shape: bf16[2,64,64], index: 10, kind: input, shape index: {}]
  %s11 = inlined_call_operand.vmem [shape: bf16[2,1,64], index: 11, kind: input, shape index: {}]
  %s12 = inlined_call_operand.vmem [shape: bf16[2,1,64], index: 12, kind: input, shape index: {}]
  %s13 = inlined_call_operand.vmem [shape: bf16[2,1,64], index: 13, kind: input, shape index: {}]
  %s14 = inlined_call_operand.vmem [shape: bf16[2,64,256], index: 14, kind: input, shape index: {}]
  %s15 = inlined_call_operand.vmem [shape: bf16[2,1,256], index: 15, kind: input, shape index: {}]
  %s16 = inlined_call_operand.vmem [shape: bf16[2,256,64], index: 16, kind: input, shape index: {}]
  %s17 = inlined_call_operand.vmem [shape: bf16[2,1,64], index: 17, kind: input, shape index: {}]
  %s18 = inlined_call_operand.vmem [shape: bf16[1,64], index: 18, kind: input, shape index: {}]
  %s19 = inlined_call_operand.vmem [shape: bf16[1,64], index: 19, kind: input, shape index: {}]
  %s20 = inlined_call_operand.vmem [shape: bf16[64,32], index: 20, kind: input, shape index: {}]
  %s21 = inlined_call_operand.vmem [shape: bf16[1,32], index: 21, kind: input, shape index: {}]
  %s22 = inlined_call_operand.vmem [shape: bf16[32,32], index: 22, kind: input, shape index: {}]
  %s23 = inlined_call_operand.vmem [shape: bf16[1,32], index: 23, kind: input, shape index: {}]
  %s24 = inlined_call_operand.vmem [shape: bf16[1,32], index: 24, kind: input, shape index: {}]
  %s25 = inlined_call_operand.vmem [shape: bf16[1,32], index: 25, kind: input, shape index: {}]
  %s26 = inlined_call_operand.vmem [shape: bf16[32,128], index: 26, kind: input, shape index: {}]
  %s27 = inlined_call_operand.vmem [shape: f32[8,128], index: 27, kind: input, shape index: {}]
  %s28 = inlined_call_operand.hbm [shape: f32[2,8,128], index: 28, kind: output, shape index: {}]
  %s29 = sld [smem:[#allocation0]]
  $region145: #{bidirectional_transformer_forward.1} parent=0
    _
  %s31 = ssub.s32 1, %s29
  %s32 = scalar_select 0, %s31, %s29
  $region1: #{bidirectional_transformer_forward.1} parent=0
    #allocation2 [shape = 'u8[8192]{0}', space=vmem, size = 0x2000, scoped, tag = 'output window, operand 0']
    #allocation3 [shape = 's32[2]{0}', space=sflag, size = 0x8, scoped, tag = 'scoped memory for bidirectional_transformer_forward.1']
    %33 = vsyncpa [#allocation3], 0
    %s34 = scalar_lea.sflag [#allocation3], 1
    %35 = vsyncpa %s34, 0
    loop: start=0, step=1, limit=4
    $region2: #{bidirectional_transformer_forward.1} parent=1 // loop_pre_header
      _
    $region3: #{bidirectional_transformer_forward.1} parent=1 // loop_header
      %s37 = sphi 0, %s41
      %p38 = scmp.ge.s32.totalorder %s37, 4
      %s47 = sphi 0, %s49
      %s50 = sphi 0, %s47
      %s51 = sphi 0, %s50
      %s67 = sphi 0, %s51
      %s71 = sphi 0, %s71
      %s73 = sphi 0, %s71
      %s74 = sphi 0, %s73
      %s88 = sphi 0, %s74
      %s92 = sphi 0, %s92
      %s94 = sphi 0, %s92
      %s95 = sphi 0, %s94
      %s109 = sphi 0, %s95
      %s113 = sphi 0, %s113
      %s115 = sphi 0, %s113
      %s116 = sphi 0, %s115
      %s130 = sphi 0, %s116
      %s134 = sphi 0, %s134
      %s136 = sphi 0, %s134
      %s137 = sphi 0, %s136
      %s151 = sphi 0, %s137
      %s155 = sphi 0, %s155
      %s157 = sphi 0, %s155
      %s158 = sphi 0, %s157
      %s172 = sphi 0, %s158
      %s176 = sphi 0, %s176
      %s178 = sphi 0, %s176
      %s179 = sphi 0, %s178
      %s193 = sphi 0, %s179
      %s197 = sphi 0, %s197
      %s199 = sphi 0, %s197
      %s200 = sphi 0, %s199
      %s214 = sphi 0, %s200
      %s218 = sphi 0, %s218
      %s220 = sphi 0, %s218
      %s221 = sphi 0, %s220
      %s235 = sphi 0, %s221
      %s239 = sphi 0, %s239
      %s241 = sphi 0, %s239
      %s242 = sphi 0, %s241
      %s256 = sphi 0, %s242
      %s260 = sphi 0, %s260
      %s262 = sphi 0, %s260
      %s263 = sphi 0, %s262
      %s277 = sphi 0, %s263
      %s281 = sphi 0, %s281
      %s283 = sphi 0, %s281
      %s284 = sphi 0, %s283
      %s298 = sphi 0, %s284
      %s302 = sphi 0, %s302
      %s304 = sphi 0, %s302
      %s305 = sphi 0, %s304
      %s319 = sphi 0, %s305
      %s323 = sphi 0, %s323
      %s325 = sphi 0, %s323
      %s326 = sphi 0, %s325
      %s340 = sphi 0, %s326
      %s344 = sphi 0, %s344
      %s346 = sphi 0, %s344
      %s347 = sphi 0, %s346
      %s361 = sphi 0, %s347
      %s365 = sphi 0, %s365
      %s367 = sphi 0, %s365
      %s368 = sphi 0, %s367
      %s382 = sphi 0, %s368
      %s386 = sphi 0, %s386
      %s388 = sphi 0, %s386
      %s389 = sphi 0, %s388
      %s403 = sphi 0, %s389
      %s407 = sphi 0, %s407
      %s409 = sphi 0, %s407
      %s410 = sphi 0, %s409
      %s424 = sphi 0, %s410
      %s428 = sphi 0, %s428
      %s430 = sphi 0, %s428
      %s431 = sphi 0, %s430
      %s445 = sphi 0, %s431
      %s449 = sphi 0, %s449
      %s451 = sphi 0, %s449
      %s452 = sphi 0, %s451
      %s466 = sphi 0, %s452
      %s470 = sphi 0, %s470
      %s472 = sphi 0, %s470
      %s473 = sphi 0, %s472
      %s487 = sphi 0, %s473
      %s491 = sphi 0, %s491
      %s493 = sphi 0, %s491
      %s494 = sphi 0, %s493
      %s508 = sphi 0, %s494
      %s512 = sphi 0, %s512
      %s514 = sphi 0, %s512
      %s515 = sphi 0, %s514
      %s529 = sphi 0, %s515
      %s533 = sphi 0, %s533
      %s535 = sphi 0, %s533
      %s536 = sphi 0, %s535
      %s550 = sphi 0, %s536
      %s554 = sphi 0, %s554
      %s556 = sphi 0, %s554
      %s557 = sphi 0, %s556
      %s571 = sphi 0, %s557
      %s575 = sphi 0, %s575
      %s577 = sphi 0, %s575
      %s578 = sphi 0, %s577
      %s592 = sphi 0, %s578
      %s596 = sphi 0, %s596
      %s598 = sphi 0, %s596
      %s599 = sphi 0, %s598
      %s613 = sphi 0, %s599
      %s617 = sphi 0, %s617
      %s619 = sphi 0, %s617
      %s620 = sphi 0, %s619
      %s634 = sphi 0, %s620
      %s640 = sphi 0, %s642
      %s643 = sphi 0, %s640
      %s644 = sphi 0, %s643
      %s660 = sphi 0, %s644
    $region4: #{bidirectional_transformer_forward.1} parent=1 // loop_header_branch
      %40 = sbr.rel (%p38) target = $region8
    $region5: #{bidirectional_transformer_forward.1} parent=1 // loop_body
      %s42 = ssub.s32 %s37, 1
      %s43 = ssub.s32 %s37, 2
      %s44 = sadd.s32 %s37, 1
      %s45 = ssub.s32 %s37, %s44
      %p46 = scmp.eq.s32.totalorder %s45, 0
      %s48 = sadd.s32 %s47, 1
      %s49 = scalar_select %p46, %s47, %s48
      %p52 = pneg %p46
      %p53 = scmp.eq.s32.totalorder %s37, 1
      %p54 = por %p52, %p53
      %p55 = scmp.ne.s32.totalorder %s47, %s50
      %p56 = scmp.eq.s32.totalorder %s37, 0
      %p57 = por %p55, %p56
      %p58 = scmp.ne.s32.totalorder %s47, %s50
      %p59 = scmp.eq.s32.totalorder %s42, 1
      %p60 = por %p58, %p59
      %p61 = scmp.ne.s32.totalorder %s50, %s51
      %p62 = scmp.eq.s32.totalorder %s42, 0
      %p63 = por %p61, %p62
      %p64 = scmp.ne.s32.totalorder %s50, %s51
      %p65 = scmp.eq.s32.totalorder %s43, 1
      %p66 = por %p64, %p65
      %p68 = scmp.ne.s32.totalorder %s51, %s67
      %p69 = scmp.eq.s32.totalorder %s43, 0
      %p70 = por %p68, %p69
      %s72 = sadd.s32 %s71, 1
      %p75 = scmp.eq.s32.totalorder %s37, 1
      %p76 = scmp.ne.s32.totalorder %s71, %s73
      %p77 = scmp.eq.s32.totalorder %s37, 0
      %p78 = por %p76, %p77
      %p79 = scmp.ne.s32.totalorder %s71, %s73
      %p80 = scmp.eq.s32.totalorder %s42, 1
      %p81 = por %p79, %p80
      %p82 = scmp.ne.s32.totalorder %s73, %s74
      %p83 = scmp.eq.s32.totalorder %s42, 0
      %p84 = por %p82, %p83
      %p85 = scmp.ne.s32.totalorder %s73, %s74
      %p86 = scmp.eq.s32.totalorder %s43, 1
      %p87 = por %p85, %p86
      %p89 = scmp.ne.s32.totalorder %s74, %s88
      %p90 = scmp.eq.s32.totalorder %s43, 0
      %p91 = por %p89, %p90
      %s93 = sadd.s32 %s92, 1
      %p96 = scmp.eq.s32.totalorder %s37, 1
      %p97 = scmp.ne.s32.totalorder %s92, %s94
      %p98 = scmp.eq.s32.totalorder %s37, 0
      %p99 = por %p97, %p98
      %p100 = scmp.ne.s32.totalorder %s92, %s94
      %p101 = scmp.eq.s32.totalorder %s42, 1
      %p102 = por %p100, %p101
      %p103 = scmp.ne.s32.totalorder %s94, %s95
      %p104 = scmp.eq.s32.totalorder %s42, 0
      %p105 = por %p103, %p104
      %p106 = scmp.ne.s32.totalorder %s94, %s95
      %p107 = scmp.eq.s32.totalorder %s43, 1
      %p108 = por %p106, %p107
      %p110 = scmp.ne.s32.totalorder %s95, %s109
      %p111 = scmp.eq.s32.totalorder %s43, 0
      %p112 = por %p110, %p111
      %s114 = sadd.s32 %s113, 1
      %p117 = scmp.eq.s32.totalorder %s37, 1
      %p118 = scmp.ne.s32.totalorder %s113, %s115
      %p119 = scmp.eq.s32.totalorder %s37, 0
      %p120 = por %p118, %p119
      %p121 = scmp.ne.s32.totalorder %s113, %s115
      %p122 = scmp.eq.s32.totalorder %s42, 1
      %p123 = por %p121, %p122
      %p124 = scmp.ne.s32.totalorder %s115, %s116
      %p125 = scmp.eq.s32.totalorder %s42, 0
      %p126 = por %p124, %p125
      %p127 = scmp.ne.s32.totalorder %s115, %s116
      %p128 = scmp.eq.s32.totalorder %s43, 1
      %p129 = por %p127, %p128
      %p131 = scmp.ne.s32.totalorder %s116, %s130
      %p132 = scmp.eq.s32.totalorder %s43, 0
      %p133 = por %p131, %p132
      %s135 = sadd.s32 %s134, 1
      %p138 = scmp.eq.s32.totalorder %s37, 1
      %p139 = scmp.ne.s32.totalorder %s134, %s136
      %p140 = scmp.eq.s32.totalorder %s37, 0
      %p141 = por %p139, %p140
      %p142 = scmp.ne.s32.totalorder %s134, %s136
      %p143 = scmp.eq.s32.totalorder %s42, 1
      %p144 = por %p142, %p143
      %p145 = scmp.ne.s32.totalorder %s136, %s137
      %p146 = scmp.eq.s32.totalorder %s42, 0
      %p147 = por %p145, %p146
      %p148 = scmp.ne.s32.totalorder %s136, %s137
      %p149 = scmp.eq.s32.totalorder %s43, 1
      %p150 = por %p148, %p149
      %p152 = scmp.ne.s32.totalorder %s137, %s151
      %p153 = scmp.eq.s32.totalorder %s43, 0
      %p154 = por %p152, %p153
      %s156 = sadd.s32 %s155, 1
      %p159 = scmp.eq.s32.totalorder %s37, 1
      %p160 = scmp.ne.s32.totalorder %s155, %s157
      %p161 = scmp.eq.s32.totalorder %s37, 0
      %p162 = por %p160, %p161
      %p163 = scmp.ne.s32.totalorder %s155, %s157
      %p164 = scmp.eq.s32.totalorder %s42, 1
      %p165 = por %p163, %p164
      %p166 = scmp.ne.s32.totalorder %s157, %s158
      %p167 = scmp.eq.s32.totalorder %s42, 0
      %p168 = por %p166, %p167
      %p169 = scmp.ne.s32.totalorder %s157, %s158
      %p170 = scmp.eq.s32.totalorder %s43, 1
      %p171 = por %p169, %p170
      %p173 = scmp.ne.s32.totalorder %s158, %s172
      %p174 = scmp.eq.s32.totalorder %s43, 0
      %p175 = por %p173, %p174
      %s177 = sadd.s32 %s176, 1
      %p180 = scmp.eq.s32.totalorder %s37, 1
      %p181 = scmp.ne.s32.totalorder %s176, %s178
      %p182 = scmp.eq.s32.totalorder %s37, 0
      %p183 = por %p181, %p182
      %p184 = scmp.ne.s32.totalorder %s176, %s178
      %p185 = scmp.eq.s32.totalorder %s42, 1
      %p186 = por %p184, %p185
      %p187 = scmp.ne.s32.totalorder %s178, %s179
      %p188 = scmp.eq.s32.totalorder %s42, 0
      %p189 = por %p187, %p188
      %p190 = scmp.ne.s32.totalorder %s178, %s179
      %p191 = scmp.eq.s32.totalorder %s43, 1
      %p192 = por %p190, %p191
      %p194 = scmp.ne.s32.totalorder %s179, %s193
      %p195 = scmp.eq.s32.totalorder %s43, 0
      %p196 = por %p194, %p195
      %s198 = sadd.s32 %s197, 1
      %p201 = scmp.eq.s32.totalorder %s37, 1
      %p202 = scmp.ne.s32.totalorder %s197, %s199
      %p203 = scmp.eq.s32.totalorder %s37, 0
      %p204 = por %p202, %p203
      %p205 = scmp.ne.s32.totalorder %s197, %s199
      %p206 = scmp.eq.s32.totalorder %s42, 1
      %p207 = por %p205, %p206
      %p208 = scmp.ne.s32.totalorder %s199, %s200
      %p209 = scmp.eq.s32.totalorder %s42, 0
      %p210 = por %p208, %p209
      %p211 = scmp.ne.s32.totalorder %s199, %s200
      %p212 = scmp.eq.s32.totalorder %s43, 1
      %p213 = por %p211, %p212
      %p215 = scmp.ne.s32.totalorder %s200, %s214
      %p216 = scmp.eq.s32.totalorder %s43, 0
      %p217 = por %p215, %p216
      %s219 = sadd.s32 %s218, 1
      %p222 = scmp.eq.s32.totalorder %s37, 1
      %p223 = scmp.ne.s32.totalorder %s218, %s220
      %p224 = scmp.eq.s32.totalorder %s37, 0
      %p225 = por %p223, %p224
      %p226 = scmp.ne.s32.totalorder %s218, %s220
      %p227 = scmp.eq.s32.totalorder %s42, 1
      %p228 = por %p226, %p227
      %p229 = scmp.ne.s32.totalorder %s220, %s221
      %p230 = scmp.eq.s32.totalorder %s42, 0
      %p231 = por %p229, %p230
      %p232 = scmp.ne.s32.totalorder %s220, %s221
      %p233 = scmp.eq.s32.totalorder %s43, 1
      %p234 = por %p232, %p233
      %p236 = scmp.ne.s32.totalorder %s221, %s235
      %p237 = scmp.eq.s32.totalorder %s43, 0
      %p238 = por %p236, %p237
      %s240 = sadd.s32 %s239, 1
      %p243 = scmp.eq.s32.totalorder %s37, 1
      %p244 = scmp.ne.s32.totalorder %s239, %s241
      %p245 = scmp.eq.s32.totalorder %s37, 0
      %p246 = por %p244, %p245
      %p247 = scmp.ne.s32.totalorder %s239, %s241
      %p248 = scmp.eq.s32.totalorder %s42, 1
      %p249 = por %p247, %p248
      %p250 = scmp.ne.s32.totalorder %s241, %s242
      %p251 = scmp.eq.s32.totalorder %s42, 0
      %p252 = por %p250, %p251
      %p253 = scmp.ne.s32.totalorder %s241, %s242
      %p254 = scmp.eq.s32.totalorder %s43, 1
      %p255 = por %p253, %p254
      %p257 = scmp.ne.s32.totalorder %s242, %s256
      %p258 = scmp.eq.s32.totalorder %s43, 0
      %p259 = por %p257, %p258
      %s261 = sadd.s32 %s260, 1
      %p264 = scmp.eq.s32.totalorder %s37, 1
      %p265 = scmp.ne.s32.totalorder %s260, %s262
      %p266 = scmp.eq.s32.totalorder %s37, 0
      %p267 = por %p265, %p266
      %p268 = scmp.ne.s32.totalorder %s260, %s262
      %p269 = scmp.eq.s32.totalorder %s42, 1
      %p270 = por %p268, %p269
      %p271 = scmp.ne.s32.totalorder %s262, %s263
      %p272 = scmp.eq.s32.totalorder %s42, 0
      %p273 = por %p271, %p272
      %p274 = scmp.ne.s32.totalorder %s262, %s263
      %p275 = scmp.eq.s32.totalorder %s43, 1
      %p276 = por %p274, %p275
      %p278 = scmp.ne.s32.totalorder %s263, %s277
      %p279 = scmp.eq.s32.totalorder %s43, 0
      %p280 = por %p278, %p279
      %s282 = sadd.s32 %s281, 1
      %p285 = scmp.eq.s32.totalorder %s37, 1
      %p286 = scmp.ne.s32.totalorder %s281, %s283
      %p287 = scmp.eq.s32.totalorder %s37, 0
      %p288 = por %p286, %p287
      %p289 = scmp.ne.s32.totalorder %s281, %s283
      %p290 = scmp.eq.s32.totalorder %s42, 1
      %p291 = por %p289, %p290
      %p292 = scmp.ne.s32.totalorder %s283, %s284
      %p293 = scmp.eq.s32.totalorder %s42, 0
      %p294 = por %p292, %p293
      %p295 = scmp.ne.s32.totalorder %s283, %s284
      %p296 = scmp.eq.s32.totalorder %s43, 1
      %p297 = por %p295, %p296
      %p299 = scmp.ne.s32.totalorder %s284, %s298
      %p300 = scmp.eq.s32.totalorder %s43, 0
      %p301 = por %p299, %p300
      %s303 = sadd.s32 %s302, 1
      %p306 = scmp.eq.s32.totalorder %s37, 1
      %p307 = scmp.ne.s32.totalorder %s302, %s304
      %p308 = scmp.eq.s32.totalorder %s37, 0
      %p309 = por %p307, %p308
      %p310 = scmp.ne.s32.totalorder %s302, %s304
      %p311 = scmp.eq.s32.totalorder %s42, 1
      %p312 = por %p310, %p311
      %p313 = scmp.ne.s32.totalorder %s304, %s305
      %p314 = scmp.eq.s32.totalorder %s42, 0
      %p315 = por %p313, %p314
      %p316 = scmp.ne.s32.totalorder %s304, %s305
      %p317 = scmp.eq.s32.totalorder %s43, 1
      %p318 = por %p316, %p317
      %p320 = scmp.ne.s32.totalorder %s305, %s319
      %p321 = scmp.eq.s32.totalorder %s43, 0
      %p322 = por %p320, %p321
      %s324 = sadd.s32 %s323, 1
      %p327 = scmp.eq.s32.totalorder %s37, 1
      %p328 = scmp.ne.s32.totalorder %s323, %s325
      %p329 = scmp.eq.s32.totalorder %s37, 0
      %p330 = por %p328, %p329
      %p331 = scmp.ne.s32.totalorder %s323, %s325
      %p332 = scmp.eq.s32.totalorder %s42, 1
      %p333 = por %p331, %p332
      %p334 = scmp.ne.s32.totalorder %s325, %s326
      %p335 = scmp.eq.s32.totalorder %s42, 0
      %p336 = por %p334, %p335
      %p337 = scmp.ne.s32.totalorder %s325, %s326
      %p338 = scmp.eq.s32.totalorder %s43, 1
      %p339 = por %p337, %p338
      %p341 = scmp.ne.s32.totalorder %s326, %s340
      %p342 = scmp.eq.s32.totalorder %s43, 0
      %p343 = por %p341, %p342
      %s345 = sadd.s32 %s344, 1
      %p348 = scmp.eq.s32.totalorder %s37, 1
      %p349 = scmp.ne.s32.totalorder %s344, %s346
      %p350 = scmp.eq.s32.totalorder %s37, 0
      %p351 = por %p349, %p350
      %p352 = scmp.ne.s32.totalorder %s344, %s346
      %p353 = scmp.eq.s32.totalorder %s42, 1
      %p354 = por %p352, %p353
      %p355 = scmp.ne.s32.totalorder %s346, %s347
      %p356 = scmp.eq.s32.totalorder %s42, 0
      %p357 = por %p355, %p356
      %p358 = scmp.ne.s32.totalorder %s346, %s347
      %p359 = scmp.eq.s32.totalorder %s43, 1
      %p360 = por %p358, %p359
      %p362 = scmp.ne.s32.totalorder %s347, %s361
      %p363 = scmp.eq.s32.totalorder %s43, 0
      %p364 = por %p362, %p363
      %s366 = sadd.s32 %s365, 1
      %p369 = scmp.eq.s32.totalorder %s37, 1
      %p370 = scmp.ne.s32.totalorder %s365, %s367
      %p371 = scmp.eq.s32.totalorder %s37, 0
      %p372 = por %p370, %p371
      %p373 = scmp.ne.s32.totalorder %s365, %s367
      %p374 = scmp.eq.s32.totalorder %s42, 1
      %p375 = por %p373, %p374
      %p376 = scmp.ne.s32.totalorder %s367, %s368
      %p377 = scmp.eq.s32.totalorder %s42, 0
      %p378 = por %p376, %p377
      %p379 = scmp.ne.s32.totalorder %s367, %s368
      %p380 = scmp.eq.s32.totalorder %s43, 1
      %p381 = por %p379, %p380
      %p383 = scmp.ne.s32.totalorder %s368, %s382
      %p384 = scmp.eq.s32.totalorder %s43, 0
      %p385 = por %p383, %p384
      %s387 = sadd.s32 %s386, 1
      %p390 = scmp.eq.s32.totalorder %s37, 1
      %p391 = scmp.ne.s32.totalorder %s386, %s388
      %p392 = scmp.eq.s32.totalorder %s37, 0
      %p393 = por %p391, %p392
      %p394 = scmp.ne.s32.totalorder %s386, %s388
      %p395 = scmp.eq.s32.totalorder %s42, 1
      %p396 = por %p394, %p395
      %p397 = scmp.ne.s32.totalorder %s388, %s389
      %p398 = scmp.eq.s32.totalorder %s42, 0
      %p399 = por %p397, %p398
      %p400 = scmp.ne.s32.totalorder %s388, %s389
      %p401 = scmp.eq.s32.totalorder %s43, 1
      %p402 = por %p400, %p401
      %p404 = scmp.ne.s32.totalorder %s389, %s403
      %p405 = scmp.eq.s32.totalorder %s43, 0
      %p406 = por %p404, %p405
      %s408 = sadd.s32 %s407, 1
      %p411 = scmp.eq.s32.totalorder %s37, 1
      %p412 = scmp.ne.s32.totalorder %s407, %s409
      %p413 = scmp.eq.s32.totalorder %s37, 0
      %p414 = por %p412, %p413
      %p415 = scmp.ne.s32.totalorder %s407, %s409
      %p416 = scmp.eq.s32.totalorder %s42, 1
      %p417 = por %p415, %p416
      %p418 = scmp.ne.s32.totalorder %s409, %s410
      %p419 = scmp.eq.s32.totalorder %s42, 0
      %p420 = por %p418, %p419
      %p421 = scmp.ne.s32.totalorder %s409, %s410
      %p422 = scmp.eq.s32.totalorder %s43, 1
      %p423 = por %p421, %p422
      %p425 = scmp.ne.s32.totalorder %s410, %s424
      %p426 = scmp.eq.s32.totalorder %s43, 0
      %p427 = por %p425, %p426
      %s429 = sadd.s32 %s428, 1
      %p432 = scmp.eq.s32.totalorder %s37, 1
      %p433 = scmp.ne.s32.totalorder %s428, %s430
      %p434 = scmp.eq.s32.totalorder %s37, 0
      %p435 = por %p433, %p434
      %p436 = scmp.ne.s32.totalorder %s428, %s430
      %p437 = scmp.eq.s32.totalorder %s42, 1
      %p438 = por %p436, %p437
      %p439 = scmp.ne.s32.totalorder %s430, %s431
      %p440 = scmp.eq.s32.totalorder %s42, 0
      %p441 = por %p439, %p440
      %p442 = scmp.ne.s32.totalorder %s430, %s431
      %p443 = scmp.eq.s32.totalorder %s43, 1
      %p444 = por %p442, %p443
      %p446 = scmp.ne.s32.totalorder %s431, %s445
      %p447 = scmp.eq.s32.totalorder %s43, 0
      %p448 = por %p446, %p447
      %s450 = sadd.s32 %s449, 1
      %p453 = scmp.eq.s32.totalorder %s37, 1
      %p454 = scmp.ne.s32.totalorder %s449, %s451
      %p455 = scmp.eq.s32.totalorder %s37, 0
      %p456 = por %p454, %p455
      %p457 = scmp.ne.s32.totalorder %s449, %s451
      %p458 = scmp.eq.s32.totalorder %s42, 1
      %p459 = por %p457, %p458
      %p460 = scmp.ne.s32.totalorder %s451, %s452
      %p461 = scmp.eq.s32.totalorder %s42, 0
      %p462 = por %p460, %p461
      %p463 = scmp.ne.s32.totalorder %s451, %s452
      %p464 = scmp.eq.s32.totalorder %s43, 1
      %p465 = por %p463, %p464
      %p467 = scmp.ne.s32.totalorder %s452, %s466
      %p468 = scmp.eq.s32.totalorder %s43, 0
      %p469 = por %p467, %p468
      %s471 = sadd.s32 %s470, 1
      %p474 = scmp.eq.s32.totalorder %s37, 1
      %p475 = scmp.ne.s32.totalorder %s470, %s472
      %p476 = scmp.eq.s32.totalorder %s37, 0
      %p477 = por %p475, %p476
      %p478 = scmp.ne.s32.totalorder %s470, %s472
      %p479 = scmp.eq.s32.totalorder %s42, 1
      %p480 = por %p478, %p479
      %p481 = scmp.ne.s32.totalorder %s472, %s473
      %p482 = scmp.eq.s32.totalorder %s42, 0
      %p483 = por %p481, %p482
      %p484 = scmp.ne.s32.totalorder %s472, %s473
      %p485 = scmp.eq.s32.totalorder %s43, 1
      %p486 = por %p484, %p485
      %p488 = scmp.ne.s32.totalorder %s473, %s487
      %p489 = scmp.eq.s32.totalorder %s43, 0
      %p490 = por %p488, %p489
      %s492 = sadd.s32 %s491, 1
      %p495 = scmp.eq.s32.totalorder %s37, 1
      %p496 = scmp.ne.s32.totalorder %s491, %s493
      %p497 = scmp.eq.s32.totalorder %s37, 0
      %p498 = por %p496, %p497
      %p499 = scmp.ne.s32.totalorder %s491, %s493
      %p500 = scmp.eq.s32.totalorder %s42, 1
      %p501 = por %p499, %p500
      %p502 = scmp.ne.s32.totalorder %s493, %s494
      %p503 = scmp.eq.s32.totalorder %s42, 0
      %p504 = por %p502, %p503
      %p505 = scmp.ne.s32.totalorder %s493, %s494
      %p506 = scmp.eq.s32.totalorder %s43, 1
      %p507 = por %p505, %p506
      %p509 = scmp.ne.s32.totalorder %s494, %s508
      %p510 = scmp.eq.s32.totalorder %s43, 0
      %p511 = por %p509, %p510
      %s513 = sadd.s32 %s512, 1
      %p516 = scmp.eq.s32.totalorder %s37, 1
      %p517 = scmp.ne.s32.totalorder %s512, %s514
      %p518 = scmp.eq.s32.totalorder %s37, 0
      %p519 = por %p517, %p518
      %p520 = scmp.ne.s32.totalorder %s512, %s514
      %p521 = scmp.eq.s32.totalorder %s42, 1
      %p522 = por %p520, %p521
      %p523 = scmp.ne.s32.totalorder %s514, %s515
      %p524 = scmp.eq.s32.totalorder %s42, 0
      %p525 = por %p523, %p524
      %p526 = scmp.ne.s32.totalorder %s514, %s515
      %p527 = scmp.eq.s32.totalorder %s43, 1
      %p528 = por %p526, %p527
      %p530 = scmp.ne.s32.totalorder %s515, %s529
      %p531 = scmp.eq.s32.totalorder %s43, 0
      %p532 = por %p530, %p531
      %s534 = sadd.s32 %s533, 1
      %p537 = scmp.eq.s32.totalorder %s37, 1
      %p538 = scmp.ne.s32.totalorder %s533, %s535
      %p539 = scmp.eq.s32.totalorder %s37, 0
      %p540 = por %p538, %p539
      %p541 = scmp.ne.s32.totalorder %s533, %s535
      %p542 = scmp.eq.s32.totalorder %s42, 1
      %p543 = por %p541, %p542
      %p544 = scmp.ne.s32.totalorder %s535, %s536
      %p545 = scmp.eq.s32.totalorder %s42, 0
      %p546 = por %p544, %p545
      %p547 = scmp.ne.s32.totalorder %s535, %s536
      %p548 = scmp.eq.s32.totalorder %s43, 1
      %p549 = por %p547, %p548
      %p551 = scmp.ne.s32.totalorder %s536, %s550
      %p552 = scmp.eq.s32.totalorder %s43, 0
      %p553 = por %p551, %p552
      %s555 = sadd.s32 %s554, 1
      %p558 = scmp.eq.s32.totalorder %s37, 1
      %p559 = scmp.ne.s32.totalorder %s554, %s556
      %p560 = scmp.eq.s32.totalorder %s37, 0
      %p561 = por %p559, %p560
      %p562 = scmp.ne.s32.totalorder %s554, %s556
      %p563 = scmp.eq.s32.totalorder %s42, 1
      %p564 = por %p562, %p563
      %p565 = scmp.ne.s32.totalorder %s556, %s557
      %p566 = scmp.eq.s32.totalorder %s42, 0
      %p567 = por %p565, %p566
      %p568 = scmp.ne.s32.totalorder %s556, %s557
      %p569 = scmp.eq.s32.totalorder %s43, 1
      %p570 = por %p568, %p569
      %p572 = scmp.ne.s32.totalorder %s557, %s571
      %p573 = scmp.eq.s32.totalorder %s43, 0
      %p574 = por %p572, %p573
      %s576 = sadd.s32 %s575, 1
      %p579 = scmp.eq.s32.totalorder %s37, 1
      %p580 = scmp.ne.s32.totalorder %s575, %s577
      %p581 = scmp.eq.s32.totalorder %s37, 0
      %p582 = por %p580, %p581
      %p583 = scmp.ne.s32.totalorder %s575, %s577
      %p584 = scmp.eq.s32.totalorder %s42, 1
      %p585 = por %p583, %p584
      %p586 = scmp.ne.s32.totalorder %s577, %s578
      %p587 = scmp.eq.s32.totalorder %s42, 0
      %p588 = por %p586, %p587
      %p589 = scmp.ne.s32.totalorder %s577, %s578
      %p590 = scmp.eq.s32.totalorder %s43, 1
      %p591 = por %p589, %p590
      %p593 = scmp.ne.s32.totalorder %s578, %s592
      %p594 = scmp.eq.s32.totalorder %s43, 0
      %p595 = por %p593, %p594
      %s597 = sadd.s32 %s596, 1
      %p600 = scmp.eq.s32.totalorder %s37, 1
      %p601 = scmp.ne.s32.totalorder %s596, %s598
      %p602 = scmp.eq.s32.totalorder %s37, 0
      %p603 = por %p601, %p602
      %p604 = scmp.ne.s32.totalorder %s596, %s598
      %p605 = scmp.eq.s32.totalorder %s42, 1
      %p606 = por %p604, %p605
      %p607 = scmp.ne.s32.totalorder %s598, %s599
      %p608 = scmp.eq.s32.totalorder %s42, 0
      %p609 = por %p607, %p608
      %p610 = scmp.ne.s32.totalorder %s598, %s599
      %p611 = scmp.eq.s32.totalorder %s43, 1
      %p612 = por %p610, %p611
      %p614 = scmp.ne.s32.totalorder %s599, %s613
      %p615 = scmp.eq.s32.totalorder %s43, 0
      %p616 = por %p614, %p615
      %s618 = sadd.s32 %s617, 1
      %p621 = scmp.eq.s32.totalorder %s37, 1
      %p622 = scmp.ne.s32.totalorder %s617, %s619
      %p623 = scmp.eq.s32.totalorder %s37, 0
      %p624 = por %p622, %p623
      %p625 = scmp.ne.s32.totalorder %s617, %s619
      %p626 = scmp.eq.s32.totalorder %s42, 1
      %p627 = por %p625, %p626
      %p628 = scmp.ne.s32.totalorder %s619, %s620
      %p629 = scmp.eq.s32.totalorder %s42, 0
      %p630 = por %p628, %p629
      %p631 = scmp.ne.s32.totalorder %s619, %s620
      %p632 = scmp.eq.s32.totalorder %s43, 1
      %p633 = por %p631, %p632
      %p635 = scmp.ne.s32.totalorder %s620, %s634
      %p636 = scmp.eq.s32.totalorder %s43, 0
      %p637 = por %p635, %p636
      %s638 = ssub.s32 %s37, %s44
      %p639 = scmp.eq.s32.totalorder %s638, 0
      %s641 = sadd.s32 %s640, 1
      %s642 = scalar_select %p639, %s640, %s641
      %p645 = pneg %p639
      %p646 = scmp.eq.s32.totalorder %s37, 1
      %p647 = por %p645, %p646
      %p648 = scmp.ne.s32.totalorder %s640, %s643
      %p649 = scmp.eq.s32.totalorder %s37, 0
      %p650 = por %p648, %p649
      %p651 = scmp.ne.s32.totalorder %s640, %s643
      %p652 = scmp.eq.s32.totalorder %s42, 1
      %p653 = por %p651, %p652
      %p654 = scmp.ne.s32.totalorder %s643, %s644
      %p655 = scmp.eq.s32.totalorder %s42, 0
      %p656 = por %p654, %p655
      %p657 = scmp.ne.s32.totalorder %s643, %s644
      %p658 = scmp.eq.s32.totalorder %s43, 1
      %p659 = por %p657, %p658
      %p661 = scmp.ne.s32.totalorder %s644, %s660
      %p662 = scmp.eq.s32.totalorder %s43, 0
      %p663 = por %p661, %p662
      %p664 = scmp.le.s32.totalorder 1, %s37
      %p665 = scmp.lt.s32.totalorder %s37, 3
      %p666 = pnand %p664, %p665
      %p667 = pneg %p666
      // Predicated region
      $region9: #{bidirectional_transformer_forward.1} parent=5 // pred_check
        _
      $region10: #{bidirectional_transformer_forward.1} parent=5 // pred_check_branch
        %669 = sbr.rel (%p666) target = $region12
      $region11: #{bidirectional_transformer_forward.1} parent=5 // pred_region
        %s670 = ssub.s32 %s37, 1
        // Predicated region
        $region13: #{bidirectional_transformer_forward.1} parent=11 // pred_check
          %p671 = pneg %p84
        $region14: #{bidirectional_transformer_forward.1} parent=11 // pred_check_branch
          %673 = sbr.rel (%p671) target = $region16
        $region15: #{bidirectional_transformer_forward.1} parent=11 // pred_region
          _
        $region16: #{bidirectional_transformer_forward.1} parent=11 // pred_fallthru
          _
        // Predicated region
        $region17: #{bidirectional_transformer_forward.1} parent=11 // pred_check
          %p674 = pneg %p105
        $region18: #{bidirectional_transformer_forward.1} parent=11 // pred_check_branch
          %676 = sbr.rel (%p674) target = $region20
        $region19: #{bidirectional_transformer_forward.1} parent=11 // pred_region
          _
        $region20: #{bidirectional_transformer_forward.1} parent=11 // pred_fallthru
          _
        // Predicated region
        $region21: #{bidirectional_transformer_forward.1} parent=11 // pred_check
          %p677 = pneg %p126
        $region22: #{bidirectional_transformer_forward.1} parent=11 // pred_check_branch
          %679 = sbr.rel (%p677) target = $region24
        $region23: #{bidirectional_transformer_forward.1} parent=11 // pred_region
          _
        $region24: #{bidirectional_transformer_forward.1} parent=11 // pred_fallthru
          _
        // Predicated region
        $region25: #{bidirectional_transformer_forward.1} parent=11 // pred_check
          %p680 = pneg %p147
        $region26: #{bidirectional_transformer_forward.1} parent=11 // pred_check_branch
          %682 = sbr.rel (%p680) target = $region28
        $region27: #{bidirectional_transformer_forward.1} parent=11 // pred_region
          _
        $region28: #{bidirectional_transformer_forward.1} parent=11 // pred_fallthru
          _
        // Predicated region
        $region29: #{bidirectional_transformer_forward.1} parent=11 // pred_check
          %p683 = pneg %p168
        $region30: #{bidirectional_transformer_forward.1} parent=11 // pred_check_branch
          %685 = sbr.rel (%p683) target = $region32
        $region31: #{bidirectional_transformer_forward.1} parent=11 // pred_region
          _
        $region32: #{bidirectional_transformer_forward.1} parent=11 // pred_fallthru
          _
        // Predicated region
        $region33: #{bidirectional_transformer_forward.1} parent=11 // pred_check
          %p686 = pneg %p189
        $region34: #{bidirectional_transformer_forward.1} parent=11 // pred_check_branch
          %688 = sbr.rel (%p686) target = $region36
        $region35: #{bidirectional_transformer_forward.1} parent=11 // pred_region
          _
        $region36: #{bidirectional_transformer_forward.1} parent=11 // pred_fallthru
          _
        // Predicated region
        $region37: #{bidirectional_transformer_forward.1} parent=11 // pred_check
          %p689 = pneg %p210
        $region38: #{bidirectional_transformer_forward.1} parent=11 // pred_check_branch
          %691 = sbr.rel (%p689) target = $region40
        $region39: #{bidirectional_transformer_forward.1} parent=11 // pred_region
          _
        $region40: #{bidirectional_transformer_forward.1} parent=11 // pred_fallthru
          _
        // Predicated region
        $region41: #{bidirectional_transformer_forward.1} parent=11 // pred_check
          %p692 = pneg %p231
        $region42: #{bidirectional_transformer_forward.1} parent=11 // pred_check_branch
          %694 = sbr.rel (%p692) target = $region44
        $region43: #{bidirectional_transformer_forward.1} parent=11 // pred_region
          _
        $region44: #{bidirectional_transformer_forward.1} parent=11 // pred_fallthru
          _
        // Predicated region
        $region45: #{bidirectional_transformer_forward.1} parent=11 // pred_check
          %p695 = pneg %p252
        $region46: #{bidirectional_transformer_forward.1} parent=11 // pred_check_branch
          %697 = sbr.rel (%p695) target = $region48
        $region47: #{bidirectional_transformer_forward.1} parent=11 // pred_region
          _
        $region48: #{bidirectional_transformer_forward.1} parent=11 // pred_fallthru
          _
        // Predicated region
        $region49: #{bidirectional_transformer_forward.1} parent=11 // pred_check
          %p698 = pneg %p273
        $region50: #{bidirectional_transformer_forward.1} parent=11 // pred_check_branch
          %700 = sbr.rel (%p698) target = $region52
        $region51: #{bidirectional_transformer_forward.1} parent=11 // pred_region
          _
        $region52: #{bidirectional_transformer_forward.1} parent=11 // pred_fallthru
          _
        // Predicated region
        $region53: #{bidirectional_transformer_forward.1} parent=11 // pred_check
          %p701 = pneg %p294
        $region54: #{bidirectional_transformer_forward.1} parent=11 // pred_check_branch
          %703 = sbr.rel (%p701) target = $region56
        $region55: #{bidirectional_transformer_forward.1} parent=11 // pred_region
          _
        $region56: #{bidirectional_transformer_forward.1} parent=11 // pred_fallthru
          _
        // Predicated region
        $region57: #{bidirectional_transformer_forward.1} parent=11 // pred_check
          %p704 = pneg %p315
        $region58: #{bidirectional_transformer_forward.1} parent=11 // pred_check_branch
          %706 = sbr.rel (%p704) target = $region60
        $region59: #{bidirectional_transformer_forward.1} parent=11 // pred_region
          _
        $region60: #{bidirectional_transformer_forward.1} parent=11 // pred_fallthru
          _
        // Predicated region
        $region61: #{bidirectional_transformer_forward.1} parent=11 // pred_check
          %p707 = pneg %p336
        $region62: #{bidirectional_transformer_forward.1} parent=11 // pred_check_branch
          %709 = sbr.rel (%p707) target = $region64
        $region63: #{bidirectional_transformer_forward.1} parent=11 // pred_region
          _
        $region64: #{bidirectional_transformer_forward.1} parent=11 // pred_fallthru
          _
        // Predicated region
        $region65: #{bidirectional_transformer_forward.1} parent=11 // pred_check
          %p710 = pneg %p357
        $region66: #{bidirectional_transformer_forward.1} parent=11 // pred_check_branch
          %712 = sbr.rel (%p710) target = $region68
        $region67: #{bidirectional_transformer_forward.1} parent=11 // pred_region
          _
        $region68: #{bidirectional_transformer_forward.1} parent=11 // pred_fallthru
          _
        // Predicated region
        $region69: #{bidirectional_transformer_forward.1} parent=11 // pred_check
          %p713 = pneg %p378
        $region70: #{bidirectional_transformer_forward.1} parent=11 // pred_check_branch
          %715 = sbr.rel (%p713) target = $region72
        $region71: #{bidirectional_transformer_forward.1} parent=11 // pred_region
          _
        $region72: #{bidirectional_transformer_forward.1} parent=11 // pred_fallthru
          _
        // Predicated region
        $region73: #{bidirectional_transformer_forward.1} parent=11 // pred_check
          %p716 = pneg %p399
        $region74: #{bidirectional_transformer_forward.1} parent=11 // pred_check_branch
          %718 = sbr.rel (%p716) target = $region76
        $region75: #{bidirectional_transformer_forward.1} parent=11 // pred_region
          _
        $region76: #{bidirectional_transformer_forward.1} parent=11 // pred_fallthru
          _
        // Predicated region
        $region77: #{bidirectional_transformer_forward.1} parent=11 // pred_check
          %p719 = pneg %p420
        $region78: #{bidirectional_transformer_forward.1} parent=11 // pred_check_branch
          %721 = sbr.rel (%p719) target = $region80
        $region79: #{bidirectional_transformer_forward.1} parent=11 // pred_region
          _
        $region80: #{bidirectional_transformer_forward.1} parent=11 // pred_fallthru
          _
        // Predicated region
        $region81: #{bidirectional_transformer_forward.1} parent=11 // pred_check
          %p722 = pneg %p441
        $region82: #{bidirectional_transformer_forward.1} parent=11 // pred_check_branch
          %724 = sbr.rel (%p722) target = $region84
        $region83: #{bidirectional_transformer_forward.1} parent=11 // pred_region
          _
        $region84: #{bidirectional_transformer_forward.1} parent=11 // pred_fallthru
          _
        // Predicated region
        $region85: #{bidirectional_transformer_forward.1} parent=11 // pred_check
          %p725 = pneg %p462
        $region86: #{bidirectional_transformer_forward.1} parent=11 // pred_check_branch
          %727 = sbr.rel (%p725) target = $region88
        $region87: #{bidirectional_transformer_forward.1} parent=11 // pred_region
          _
        $region88: #{bidirectional_transformer_forward.1} parent=11 // pred_fallthru
          _
        // Predicated region
        $region89: #{bidirectional_transformer_forward.1} parent=11 // pred_check
          %p728 = pneg %p483
        $region90: #{bidirectional_transformer_forward.1} parent=11 // pred_check_branch
          %730 = sbr.rel (%p728) target = $region92
        $region91: #{bidirectional_transformer_forward.1} parent=11 // pred_region
          _
        $region92: #{bidirectional_transformer_forward.1} parent=11 // pred_fallthru
          _
        // Predicated region
        $region93: #{bidirectional_transformer_forward.1} parent=11 // pred_check
          %p731 = pneg %p504
        $region94: #{bidirectional_transformer_forward.1} parent=11 // pred_check_branch
          %733 = sbr.rel (%p731) target = $region96
        $region95: #{bidirectional_transformer_forward.1} parent=11 // pred_region
          _
        $region96: #{bidirectional_transformer_forward.1} parent=11 // pred_fallthru
          _
        // Predicated region
        $region97: #{bidirectional_transformer_forward.1} parent=11 // pred_check
          %p734 = pneg %p525
        $region98: #{bidirectional_transformer_forward.1} parent=11 // pred_check_branch
          %736 = sbr.rel (%p734) target = $region100
        $region99: #{bidirectional_transformer_forward.1} parent=11 // pred_region
          _
        $region100: #{bidirectional_transformer_forward.1} parent=11 // pred_fallthru
          _
        // Predicated region
        $region101: #{bidirectional_transformer_forward.1} parent=11 // pred_check
          %p737 = pneg %p546
        $region102: #{bidirectional_transformer_forward.1} parent=11 // pred_check_branch
          %739 = sbr.rel (%p737) target = $region104
        $region103: #{bidirectional_transformer_forward.1} parent=11 // pred_region
          _
        $region104: #{bidirectional_transformer_forward.1} parent=11 // pred_fallthru
          _
        // Predicated region
        $region105: #{bidirectional_transformer_forward.1} parent=11 // pred_check
          %p740 = pneg %p567
        $region106: #{bidirectional_transformer_forward.1} parent=11 // pred_check_branch
          %742 = sbr.rel (%p740) target = $region108
        $region107: #{bidirectional_transformer_forward.1} parent=11 // pred_region
          _
        $region108: #{bidirectional_transformer_forward.1} parent=11 // pred_fallthru
          _
        // Predicated region
        $region109: #{bidirectional_transformer_forward.1} parent=11 // pred_check
          %p743 = pneg %p588
        $region110: #{bidirectional_transformer_forward.1} parent=11 // pred_check_branch
          %745 = sbr.rel (%p743) target = $region112
        $region111: #{bidirectional_transformer_forward.1} parent=11 // pred_region
          _
        $region112: #{bidirectional_transformer_forward.1} parent=11 // pred_fallthru
          _
        // Predicated region
        $region113: #{bidirectional_transformer_forward.1} parent=11 // pred_check
          %p746 = pneg %p609
        $region114: #{bidirectional_transformer_forward.1} parent=11 // pred_check_branch
          %748 = sbr.rel (%p746) target = $region116
        $region115: #{bidirectional_transformer_forward.1} parent=11 // pred_region
          _
        $region116: #{bidirectional_transformer_forward.1} parent=11 // pred_fallthru
          _
        // Predicated region
        $region117: #{bidirectional_transformer_forward.1} parent=11 // pred_check
          %p749 = pneg %p630
        $region118: #{bidirectional_transformer_forward.1} parent=11 // pred_check_branch
          %751 = sbr.rel (%p749) target = $region120
        $region119: #{bidirectional_transformer_forward.1} parent=11 // pred_region
          _
        $region120: #{bidirectional_transformer_forward.1} parent=11 // pred_fallthru
          _
      $region12: #{bidirectional_transformer_forward.1} parent=5 // pred_fallthru
        _
      %p752 = scmp.lt.s32.totalorder %s37, 2
      // Predicated region
      $region121: #{bidirectional_transformer_forward.1} parent=5 // pred_check
        %p753 = pneg %p752
      $region122: #{bidirectional_transformer_forward.1} parent=5 // pred_check_branch
        %755 = sbr.rel (%p753) target = $region124
      $region123: #{bidirectional_transformer_forward.1} parent=5 // pred_region
        // Predicated region
        $region125: #{bidirectional_transformer_forward.1} parent=123 // pred_check
          %p756 = pneg %p57
        $region126: #{bidirectional_transformer_forward.1} parent=123 // pred_check_branch
          %758 = sbr.rel (%p756) target = $region128
        $region127: #{bidirectional_transformer_forward.1} parent=123 // pred_region
          %p759 = scmp.lt.s32.totalorder %s37, 1
          %s760 = scalar_select %p759, %s37, 1
          %s761 = smul.addr %s760, 8
          %s762 = scalar_lea.vmem %s0, %s761
        $region128: #{bidirectional_transformer_forward.1} parent=123 // pred_fallthru
          _
      $region124: #{bidirectional_transformer_forward.1} parent=5 // pred_fallthru
        _
      %p763 = scmp.le.s32.totalorder 1, %s37
      %p764 = scmp.lt.s32.totalorder %s37, 3
      %p765 = pnand %p763, %p764
      %p766 = pneg %p765
      // Predicated region
      $region129: #{bidirectional_transformer_forward.1} parent=5 // pred_check
        _
      $region130: #{bidirectional_transformer_forward.1} parent=5 // pred_check_branch
        %768 = sbr.rel (%p765) target = $region132
      $region131: #{bidirectional_transformer_forward.1} parent=5 // pred_region
        %s769 = ssub.s32 %s37, 1
        %p770 = scmp.lt.s32.totalorder %s42, 1
        %s771 = scalar_select %p770, %s42, 1
        %s772 = smul.addr %s771, 8
        %s773 = scalar_lea.vmem %s0, %s772
        %p774 = pneg %p63
        %p775 = pneg %p60
        %p776 = pneg %p84
        %p777 = pneg %p81
        %p778 = pneg %p105
        %p779 = pneg %p102
        %p780 = pneg %p126
        %p781 = pneg %p123
        %p782 = pneg %p147
        %p783 = pneg %p144
        %p784 = pneg %p168
        %p785 = pneg %p165
        %p786 = pneg %p189
        %p787 = pneg %p186
        %p788 = pneg %p210
        %p789 = pneg %p207
        %p790 = pneg %p231
        %p791 = pneg %p228
        %p792 = pneg %p252
        %p793 = pneg %p249
        %p794 = pneg %p273
        %p795 = pneg %p270
        %p796 = pneg %p294
        %p797 = pneg %p291
        %p798 = pneg %p315
        %p799 = pneg %p312
        %p800 = pneg %p336
        %p801 = pneg %p333
        %p802 = pneg %p357
        %p803 = pneg %p354
        %p804 = pneg %p378
        %p805 = pneg %p375
        %p806 = pneg %p399
        %p807 = pneg %p396
        %p808 = pneg %p420
        %p809 = pneg %p417
        %p810 = pneg %p441
        %p811 = pneg %p438
        %p812 = pneg %p462
        %p813 = pneg %p459
        %p814 = pneg %p483
        %p815 = pneg %p480
        %p816 = pneg %p504
        %p817 = pneg %p501
        %p818 = pneg %p525
        %p819 = pneg %p522
        %p820 = pneg %p546
        %p821 = pneg %p543
        %p822 = pneg %p567
        %p823 = pneg %p564
        %p824 = pneg %p588
        %p825 = pneg %p585
        %p826 = pneg %p609
        %p827 = pneg %p606
        %p828 = pneg %p630
        %p829 = pneg %p627
        %p830 = pneg %p656
        %p831 = pneg %p653
        %s832 = sand.u32 %s643, 1
        %s833 = scalar_lea.sflag [#allocation3], %s832
        %s834 = sand.u32 %s643, 1
        %s835 = smul.addr %s834, 8
        %s836 = scalar_lea.vmem [#allocation2], %s835
        %p837 = scmp.lt.s32.totalorder %s42, 1
        %s838 = scalar_select %p837, %s42, 1
        %s839 = smul.addr %s838, 8
        %s840 = scalar_lea.vmem %s0, %s839
        %v842 = vld [vmem:[%s840] sm:$0xff]
        %v843 = vlaneseq
        %v844 = vand.u32 %v843, 127
        %845 = vset.pattern.permute.xlu0 0
        %846 = vperm.xlu0 %845, %v842
        %v847 = vpop.permute.xlu0 %846
        %vm848 = vcmp.eq.s32.totalorder %v844, %v847
        %v849 = vsel %vm848, 1.0, 0.0
        %v850 = vpack.c.bf16 %v849, %v849
        %v851 = vld [vmem:[%s1] sm:$0xf]
        %v852 = vld [vmem:[%s1 + $0x4] sm:$0xf]
        %v853 = vld [vmem:[%s1 + $0x8] sm:$0xf]
        %v854 = vld [vmem:[%s1 + $0xc] sm:$0xf]
        %v855 = vld [vmem:[%s1 + $0x10] sm:$0xf]
        %v856 = vld [vmem:[%s1 + $0x14] sm:$0xf]
        %v857 = vld [vmem:[%s1 + $0x18] sm:$0xf]
        %v858 = vld [vmem:[%s1 + $0x1c] sm:$0xf]
        %v859 = vld [vmem:[%s1 + $0x20] sm:$0xf]
        %v860 = vld [vmem:[%s1 + $0x24] sm:$0xf]
        %v861 = vld [vmem:[%s1 + $0x28] sm:$0xf]
        %v862 = vld [vmem:[%s1 + $0x2c] sm:$0xf]
        %v863 = vld [vmem:[%s1 + $0x30] sm:$0xf]
        %v864 = vld [vmem:[%s1 + $0x34] sm:$0xf]
        %v865 = vld [vmem:[%s1 + $0x38] sm:$0xf]
        %v866 = vld [vmem:[%s1 + $0x3c] sm:$0xf]
        %v867 = vld [vmem:[%s2] sm:$0xf]
        %v868 = vunpack.c.l.bf16 %v867
        %v885 = vunpack.c.l.b16 %v851
        %v886 = vunpack.c.l.b16 %v852
        %v887 = vunpack.c.l.b16 %v853
        %v888 = vunpack.c.l.b16 %v854
        %v889 = vunpack.c.l.b16 %v855
        %v890 = vunpack.c.l.b16 %v856
        %v891 = vunpack.c.l.b16 %v857
        %v892 = vunpack.c.l.b16 %v858
        %v893 = vunpack.c.l.b16 %v859
        %v894 = vunpack.c.l.b16 %v860
        %v895 = vunpack.c.l.b16 %v861
        %v896 = vunpack.c.l.b16 %v862
        %v897 = vunpack.c.l.b16 %v863
        %v898 = vunpack.c.l.b16 %v864
        %v899 = vunpack.c.l.b16 %v865
        %v900 = vunpack.c.l.b16 %v866
        %v901 = vpack.c.b16 %v886, %v885
        %v902 = vpack.c.b16 %v888, %v887
        %v903 = vpack.c.b16 %v890, %v889
        %v904 = vpack.c.b16 %v892, %v891
        %v905 = vpack.c.b16 %v894, %v893
        %v906 = vpack.c.b16 %v896, %v895
        %v907 = vpack.c.b16 %v898, %v897
        %v908 = vpack.c.b16 %v900, %v899
        %917 = vmatprep.subr.bf16.mxu0 0
        %918 = vmatpush1.bf16.msra.mxu0 %v901
        %919 = vmatprep.subr.bf16.mxu0 0
        %920 = vmatpush1.bf16.msra.mxu0 %v902
        %921 = vmatprep.subr.bf16.mxu0 0
        %922 = vmatpush1.bf16.msra.mxu0 %v903
        %923 = vmatprep.subr.bf16.mxu0 0
        %924 = vmatpush1.bf16.msra.mxu0 %v904
        %925 = vmatprep.subr.bf16.mxu0 0
        %926 = vmatpush1.bf16.msra.mxu0 %v905
        %927 = vmatprep.subr.bf16.mxu0 0
        %928 = vmatpush1.bf16.msra.mxu0 %v906
        %929 = vmatprep.subr.bf16.mxu0 0
        %930 = vmatpush1.bf16.msra.mxu0 %v907
        %931 = vmatprep.subr.bf16.mxu0 0
        %932 = vmatpush1.bf16.msra.mxu0 %v908
        %933 = vmatprep.subr.bf16.mxu0 0
        %934 = vmatpush1.bf16.msra.mxu0 0
        %935 = vmatprep.subr.bf16.mxu0 0
        %936 = vmatpush1.bf16.msra.mxu0 0
        %937 = vmatprep.subr.bf16.mxu0 0
        %938 = vmatpush1.bf16.msra.mxu0 0
        %939 = vmatprep.subr.bf16.mxu0 0
        %940 = vmatpush1.bf16.msra.mxu0 0
        %941 = vmatprep.subr.bf16.mxu0 0
        %942 = vmatpush1.bf16.msra.mxu0 0
        %943 = vmatprep.subr.bf16.mxu0 0
        %944 = vmatpush1.bf16.msra.mxu0 0
        %945 = vmatprep.subr.bf16.mxu0 0
        %946 = vmatpush1.bf16.msra.mxu0 0
        %947 = vmatprep.subr.bf16.mxu0 0
        %948 = vmatpush1.bf16.msra.mxu0 0
        %949 = vmatprep.mubr.bf16.mxu0 0
        %950 = vmatmul.mubr.bf16.gmra.mrb[0].mxu0 %v850
        %v951 = vpop.f32.mrb[0].mxu0
        %v952 = vadd.f32 %v868, %v951
        %v953 = vpop.f32.mrb[0].mxu0
        %v954 = vpop.f32.mrb[0].mxu0
        %v955 = vpop.f32.mrb[0].mxu0
        %956 = vdwg.mxu0
        %v957 = vld [vmem:[%s3] sm:$0x1]
        %v958 = vld [vmem:[%s4] sm:$0x1]
        %vm959 = vcmask 261120
        %v960 = vsel %vm959, %v952, 0.0
        %961 = vadd.xlane.f32.xlu0 %v960
        %v962 = vpop.xlane.xlu0 %961
        %v963 = vrcp.pop 32.0
        %v964 = vmul.f32 %v962, %v963
        %v965 = vsub.f32 %v952, %v964
        %v966 = vmul.f32 %v965, %v965
        %v967 = vsel %vm959, %v966, 0.0
        %968 = vadd.xlane.f32.xlu0 %v967
        %v969 = vpop.xlane.xlu0 %968
        %v970 = vmul.f32 %v969, %v963
        %v971 = vadd.f32 %v970, 1e-12
        %v972 = vrsqrt.pop %v971
        %v973 = vmul.f32 %v965, %v972
        %v974 = vunpack.c.l.bf16 %v957
        %v975 = vlaneseq
        %v976 = vshrl.u32 %v975, 7
        %v977 = vsub.s32 0, %v976
        %v978 = vrot.slane %v974, %v977
        %v979 = vmul.f32 %v973, %v978
        %v980 = vunpack.c.l.bf16 %v958
        %v981 = vlaneseq
        %v982 = vshrl.u32 %v981, 7
        %v983 = vsub.s32 0, %v982
        %v984 = vrot.slane %v980, %v983
        %v985 = vadd.f32 %v979, %v984
        %v986 = vpack.c.bf16 %v985, %v985
        %v987 = vld [vmem:[%s5] sm:$0xf]
        %v988 = vld [vmem:[%s5 + $0x4] sm:$0xf]
        %v989 = vld [vmem:[%s5 + $0x8] sm:$0xf]
        %v990 = vld [vmem:[%s5 + $0xc] sm:$0xf]
        %v991 = vld [vmem:[%s6] sm:$0x1]
        %v992 = vunpack.c.l.bf16 %v991
        %v993 = vlaneseq
        %v994 = vshrl.u32 %v993, 7
        %v995 = vsub.s32 0, %v994
        %v996 = vrot.slane %v992, %v995
        %v1001 = vunpack.c.l.b16 %v987
        %v1002 = vunpack.c.l.b16 %v988
        %v1003 = vunpack.c.l.b16 %v989
        %v1004 = vunpack.c.l.b16 %v990
        %v1005 = vpack.c.b16 %v1002, %v1001
        %v1006 = vpack.c.b16 %v1004, %v1003
        %v1010 = vsel %vm959, %v986, 0
        %1012 = vmatprep.subr.bf16.mxu0 0
        %1013 = vmatpush1.bf16.msra.mxu0 %v1005
        %1014 = vmatprep.subr.bf16.mxu0 0
        %1015 = vmatpush1.bf16.msra.mxu0 %v1006
        %1016 = vmatprep.subr.bf16.mxu0 0
        %1017 = vmatpush1.bf16.msra.mxu0 0
        %1018 = vmatprep.subr.bf16.mxu0 0
        %1019 = vmatpush1.bf16.msra.mxu0 0
        %1020 = vmatprep.subr.bf16.mxu0 0
        %1021 = vmatpush1.bf16.msra.mxu0 0
        %1022 = vmatprep.subr.bf16.mxu0 0
        %1023 = vmatpush1.bf16.msra.mxu0 0
        %1024 = vmatprep.subr.bf16.mxu0 0
        %1025 = vmatpush1.bf16.msra.mxu0 0
        %1026 = vmatprep.subr.bf16.mxu0 0
        %1027 = vmatpush1.bf16.msra.mxu0 0
        %1028 = vmatprep.subr.bf16.mxu0 0
        %1029 = vmatpush1.bf16.msra.mxu0 0
        %1030 = vmatprep.subr.bf16.mxu0 0
        %1031 = vmatpush1.bf16.msra.mxu0 0
        %1032 = vmatprep.subr.bf16.mxu0 0
        %1033 = vmatpush1.bf16.msra.mxu0 0
        %1034 = vmatprep.subr.bf16.mxu0 0
        %1035 = vmatpush1.bf16.msra.mxu0 0
        %1036 = vmatprep.subr.bf16.mxu0 0
        %1037 = vmatpush1.bf16.msra.mxu0 0
        %1038 = vmatprep.subr.bf16.mxu0 0
        %1039 = vmatpush1.bf16.msra.mxu0 0
        %1040 = vmatprep.subr.bf16.mxu0 0
        %1041 = vmatpush1.bf16.msra.mxu0 0
        %1042 = vmatprep.subr.bf16.mxu0 0
        %1043 = vmatpush1.bf16.msra.mxu0 0
        %1044 = vmatprep.mubr.bf16.mxu0 0
        %1045 = vmatmul.mubr.bf16.gmra.mrb[0].mxu0 %v1010
        %v1046 = vpop.f32.mrb[0].mxu0
        %v1047 = vadd.f32 %v996, %v1046
        %v1048 = vpop.f32.mrb[0].mxu0
        %v1049 = vpop.f32.mrb[0].mxu0
        %v1050 = vpop.f32.mrb[0].mxu0
        %1051 = vdwg.mxu0
        %v1052 = vld [vmem:[%s7] sm:$0x1]
        %v1053 = vld [vmem:[%s8] sm:$0x1]
        %vm1054 = vcmask 523264
        %v1055 = vsel %vm1054, %v1047, 0.0
        %1056 = vadd.xlane.f32.xlu0 %v1055
        %v1057 = vpop.xlane.xlu0 %1056
        %v1058 = vrcp.pop 64.0
        %v1059 = vmul.f32 %v1057, %v1058
        %v1060 = vsub.f32 %v1047, %v1059
        %v1061 = vmul.f32 %v1060, %v1060
        %v1062 = vsel %vm1054, %v1061, 0.0
        %1063 = vadd.xlane.f32.xlu0 %v1062
        %v1064 = vpop.xlane.xlu0 %1063
        %v1065 = vmul.f32 %v1064, %v1058
        %v1066 = vadd.f32 %v1065, 1e-05
        %v1067 = vrsqrt.pop %v1066
        %v1068 = vmul.f32 %v1060, %v1067
        %v1069 = vunpack.c.l.bf16 %v1052
        %v1070 = vlaneseq
        %v1071 = vshrl.u32 %v1070, 7
        %v1072 = vsub.s32 0, %v1071
        %v1073 = vrot.slane %v1069, %v1072
        %v1074 = vmul.f32 %v1068, %v1073
        %v1075 = vunpack.c.l.bf16 %v1053
        %v1076 = vlaneseq
        %v1077 = vshrl.u32 %v1076, 7
        %v1078 = vsub.s32 0, %v1077
        %v1079 = vrot.slane %v1075, %v1078
        %v1080 = vadd.f32 %v1074, %v1079
        %v1081 = vpack.c.bf16 %v1080, %v1080
        %v1082 = vld [vmem:[%s9] sm:$0xff]
        %v1083 = vld [vmem:[%s9 + $0x8] sm:$0xff]
        %v1084 = vld [vmem:[%s9 + $0x10] sm:$0xff]
        %v1085 = vld [vmem:[%s9 + $0x18] sm:$0xff]
        %v1086 = vld [vmem:[%s9 + $0x20] sm:$0xff]
        %v1087 = vld [vmem:[%s9 + $0x28] sm:$0xff]
        %v1088 = vld [vmem:[%s9 + $0x30] sm:$0xff]
        %v1089 = vld [vmem:[%s9 + $0x38] sm:$0xff]
        %v1098 = vunpack.c.l.b16 %v1082
        %v1099 = vunpack.c.h.b16 %v1082
        %v1100 = vunpack.c.l.b16 %v1083
        %v1101 = vunpack.c.h.b16 %v1083
        %v1102 = vunpack.c.l.b16 %v1084
        %v1103 = vunpack.c.h.b16 %v1084
        %v1104 = vunpack.c.l.b16 %v1085
        %v1105 = vunpack.c.h.b16 %v1085
        %v1106 = vunpack.c.l.b16 %v1086
        %v1107 = vunpack.c.h.b16 %v1086
        %v1108 = vunpack.c.l.b16 %v1087
        %v1109 = vunpack.c.h.b16 %v1087
        %v1110 = vunpack.c.l.b16 %v1088
        %v1111 = vunpack.c.h.b16 %v1088
        %v1112 = vunpack.c.l.b16 %v1089
        %v1113 = vunpack.c.h.b16 %v1089
        %v1114 = vpack.c.b16 %v1100, %v1098
        %v1115 = vpack.c.b16 %v1101, %v1099
        %v1116 = vpack.c.b16 %v1104, %v1102
        %v1117 = vpack.c.b16 %v1105, %v1103
        %v1118 = vpack.c.b16 %v1108, %v1106
        %v1119 = vpack.c.b16 %v1109, %v1107
        %v1120 = vpack.c.b16 %v1112, %v1110
        %v1121 = vpack.c.b16 %v1113, %v1111
        %v1131 = vsel %vm1054, %v1081, 0
        %1133 = vmatprep.subr.bf16.mxu0 %v1115
        %1134 = vmatpush1.bf16.msra.mxu0 %v1114
        %1135 = vmatprep.subr.bf16.mxu0 %v1117
        %1136 = vmatpush1.bf16.msra.mxu0 %v1116
        %1137 = vmatprep.subr.bf16.mxu0 %v1119
        %1138 = vmatpush1.bf16.msra.mxu0 %v1118
        %1139 = vmatprep.subr.bf16.mxu0 %v1121
        %1140 = vmatpush1.bf16.msra.mxu0 %v1120
        %1141 = vmatprep.subr.bf16.mxu0 0
        %1142 = vmatpush1.bf16.msra.mxu0 0
        %1143 = vmatprep.subr.bf16.mxu0 0
        %1144 = vmatpush1.bf16.msra.mxu0 0
        %1145 = vmatprep.subr.bf16.mxu0 0
        %1146 = vmatpush1.bf16.msra.mxu0 0
        %1147 = vmatprep.subr.bf16.mxu0 0
        %1148 = vmatpush1.bf16.msra.mxu0 0
        %1149 = vmatprep.subr.bf16.mxu0 0
        %1150 = vmatpush1.bf16.msra.mxu0 0
        %1151 = vmatprep.subr.bf16.mxu0 0
        %1152 = vmatpush1.bf16.msra.mxu0 0
        %1153 = vmatprep.subr.bf16.mxu0 0
        %1154 = vmatpush1.bf16.msra.mxu0 0
        %1155 = vmatprep.subr.bf16.mxu0 0
        %1156 = vmatpush1.bf16.msra.mxu0 0
        %1157 = vmatprep.subr.bf16.mxu0 0
        %1158 = vmatpush1.bf16.msra.mxu0 0
        %1159 = vmatprep.subr.bf16.mxu0 0
        %1160 = vmatpush1.bf16.msra.mxu0 0
        %1161 = vmatprep.subr.bf16.mxu0 0
        %1162 = vmatpush1.bf16.msra.mxu0 0
        %1163 = vmatprep.subr.bf16.mxu0 0
        %1164 = vmatpush1.bf16.msra.mxu0 0
        %1165 = vmatprep.mubr.bf16.mxu0 0
        %1166 = vmatmul.mubr.bf16.gmra.mrb[0].mxu0 %v1131
        %v1167 = vpop.f32.mrb[0].mxu0
        %v1168 = vadd.f32 0.0, %v1167
        %v1169 = vpop.f32.mrb[0].mxu0
        %v1170 = vadd.f32 0.0, %v1169
        %v1171 = vpop.f32.mrb[0].mxu0
        %v1172 = vpop.f32.mrb[0].mxu0
        %1173 = vdwg.mxu0
        %1175 = vrot.lane.b32.xlu0 %v1168, 112
        %v1176 = vpop.permute.xlu0 %1175
        %1178 = vrot.lane.b32.xlu0 %v1168, 96
        %v1179 = vpop.permute.xlu0 %1178
        %1181 = vrot.lane.b32.xlu0 %v1168, 80
        %v1182 = vpop.permute.xlu0 %1181
        %v1184 = vpack.c.bf16 %v1168, %v1168
        %v1185 = vpack.c.bf16 %v1176, %v1176
        %v1186 = vpack.c.bf16 %v1179, %v1179
        %v1187 = vpack.c.bf16 %v1182, %v1182
        %1189 = vrot.lane.b32.xlu0 %v1170, 112
        %v1190 = vpop.permute.xlu0 %1189
        %1192 = vrot.lane.b32.xlu0 %v1170, 96
        %v1193 = vpop.permute.xlu0 %1192
        %1195 = vrot.lane.b32.xlu0 %v1170, 80
        %v1196 = vpop.permute.xlu0 %1195
        %v1198 = vpack.c.bf16 %v1170, %v1170
        %v1199 = vpack.c.bf16 %v1190, %v1190
        %v1200 = vpack.c.bf16 %v1193, %v1193
        %v1201 = vpack.c.bf16 %v1196, %v1196
        %1203 = vrot.lane.b32.xlu0 %v1184, 64
        %v1204 = vpop.permute.xlu0 %1203
        %vm1205 = vcmask 130048
        %v1207 = vsel %vm1205, %v1184, 0
        %v1210 = vsel %vm1205, %v1204, 0
        %1212 = vmatprep.subr.bf16.mxu0 0
        %1213 = vmatpush1.bf16.xpose.msra.mxu0 %v1210
        %1214 = vmatprep.subr.bf16.mxu0 0
        %1215 = vmatpush1.bf16.xpose.msra.mxu0 0
        %1216 = vmatprep.subr.bf16.mxu0 0
        %1217 = vmatpush1.bf16.xpose.msra.mxu0 0
        %1218 = vmatprep.subr.bf16.mxu0 0
        %1219 = vmatpush1.bf16.xpose.msra.mxu0 0
        %1220 = vmatprep.subr.bf16.mxu0 0
        %1221 = vmatpush1.bf16.xpose.msra.mxu0 0
        %1222 = vmatprep.subr.bf16.mxu0 0
        %1223 = vmatpush1.bf16.xpose.msra.mxu0 0
        %1224 = vmatprep.subr.bf16.mxu0 0
        %1225 = vmatpush1.bf16.xpose.msra.mxu0 0
        %1226 = vmatprep.subr.bf16.mxu0 0
        %1227 = vmatpush1.bf16.xpose.msra.mxu0 0
        %1228 = vmatprep.subr.bf16.mxu0 0
        %1229 = vmatpush1.bf16.xpose.msra.mxu0 0
        %1230 = vmatprep.subr.bf16.mxu0 0
        %1231 = vmatpush1.bf16.xpose.msra.mxu0 0
        %1232 = vmatprep.subr.bf16.mxu0 0
        %1233 = vmatpush1.bf16.xpose.msra.mxu0 0
        %1234 = vmatprep.subr.bf16.mxu0 0
        %1235 = vmatpush1.bf16.xpose.msra.mxu0 0
        %1236 = vmatprep.subr.bf16.mxu0 0
        %1237 = vmatpush1.bf16.xpose.msra.mxu0 0
        %1238 = vmatprep.subr.bf16.mxu0 0
        %1239 = vmatpush1.bf16.xpose.msra.mxu0 0
        %1240 = vmatprep.subr.bf16.mxu0 0
        %1241 = vmatpush1.bf16.xpose.msra.mxu0 0
        %1242 = vmatprep.subr.bf16.mxu0 0
        %1243 = vmatpush1.bf16.xpose.msra.mxu0 0
        %1244 = vmatprep.mubr.bf16.mxu0 0
        %1245 = vmatmul.mubr.bf16.gmra.mrb[0].mxu0 %v1207
        %v1246 = vpop.f32.mrb[0].mxu0
        %v1247 = vadd.f32 0.0, %v1246
        %v1248 = vpop.f32.mrb[0].mxu0
        %v1249 = vpop.f32.mrb[0].mxu0
        %v1250 = vpop.f32.mrb[0].mxu0
        %1251 = vdwg.mxu0
        %1253 = vrot.lane.b32.xlu0 %v1185, 64
        %v1254 = vpop.permute.xlu0 %1253
        %v1256 = vsel %vm1205, %v1185, 0
        %v1259 = vsel %vm1205, %v1254, 0
        %1261 = vmatprep.subr.bf16.mxu0 0
        %1262 = vmatpush1.bf16.xpose.msra.mxu0 %v1259
        %1263 = vmatprep.subr.bf16.mxu0 0
        %1264 = vmatpush1.bf16.xpose.msra.mxu0 0
        %1265 = vmatprep.subr.bf16.mxu0 0
        %1266 = vmatpush1.bf16.xpose.msra.mxu0 0
        %1267 = vmatprep.subr.bf16.mxu0 0
        %1268 = vmatpush1.bf16.xpose.msra.mxu0 0
        %1269 = vmatprep.subr.bf16.mxu0 0
        %1270 = vmatpush1.bf16.xpose.msra.mxu0 0
        %1271 = vmatprep.subr.bf16.mxu0 0
        %1272 = vmatpush1.bf16.xpose.msra.mxu0 0
        %1273 = vmatprep.subr.bf16.mxu0 0
        %1274 = vmatpush1.bf16.xpose.msra.mxu0 0
        %1275 = vmatprep.subr.bf16.mxu0 0
        %1276 = vmatpush1.bf16.xpose.msra.mxu0 0
        %1277 = vmatprep.subr.bf16.mxu0 0
        %1278 = vmatpush1.bf16.xpose.msra.mxu0 0
        %1279 = vmatprep.subr.bf16.mxu0 0
        %1280 = vmatpush1.bf16.xpose.msra.mxu0 0
        %1281 = vmatprep.subr.bf16.mxu0 0
        %1282 = vmatpush1.bf16.xpose.msra.mxu0 0
        %1283 = vmatprep.subr.bf16.mxu0 0
        %1284 = vmatpush1.bf16.xpose.msra.mxu0 0
        %1285 = vmatprep.subr.bf16.mxu0 0
        %1286 = vmatpush1.bf16.xpose.msra.mxu0 0
        %1287 = vmatprep.subr.bf16.mxu0 0
        %1288 = vmatpush1.bf16.xpose.msra.mxu0 0
        %1289 = vmatprep.subr.bf16.mxu0 0
        %1290 = vmatpush1.bf16.xpose.msra.mxu0 0
        %1291 = vmatprep.subr.bf16.mxu0 0
        %1292 = vmatpush1.bf16.xpose.msra.mxu0 0
        %1293 = vmatprep.mubr.bf16.mxu0 0
        %1294 = vmatmul.mubr.bf16.gmra.mrb[0].mxu0 %v1256
        %v1295 = vpop.f32.mrb[0].mxu0
        %v1296 = vadd.f32 0.0, %v1295
        %v1297 = vpop.f32.mrb[0].mxu0
        %v1298 = vpop.f32.mrb[0].mxu0
        %v1299 = vpop.f32.mrb[0].mxu0
        %1300 = vdwg.mxu0
        %1302 = vrot.lane.b32.xlu0 %v1186, 64
        %v1303 = vpop.permute.xlu0 %1302
        %v1305 = vsel %vm1205, %v1186, 0
        %v1308 = vsel %vm1205, %v1303, 0
        %1310 = vmatprep.subr.bf16.mxu0 0
        %1311 = vmatpush1.bf16.xpose.msra.mxu0 %v1308
        %1312 = vmatprep.subr.bf16.mxu0 0
        %1313 = vmatpush1.bf16.xpose.msra.mxu0 0
        %1314 = vmatprep.subr.bf16.mxu0 0
        %1315 = vmatpush1.bf16.xpose.msra.mxu0 0
        %1316 = vmatprep.subr.bf16.mxu0 0
        %1317 = vmatpush1.bf16.xpose.msra.mxu0 0
        %1318 = vmatprep.subr.bf16.mxu0 0
        %1319 = vmatpush1.bf16.xpose.msra.mxu0 0
        %1320 = vmatprep.subr.bf16.mxu0 0
        %1321 = vmatpush1.bf16.xpose.msra.mxu0 0
        %1322 = vmatprep.subr.bf16.mxu0 0
        %1323 = vmatpush1.bf16.xpose.msra.mxu0 0
        %1324 = vmatprep.subr.bf16.mxu0 0
        %1325 = vmatpush1.bf16.xpose.msra.mxu0 0
        %1326 = vmatprep.subr.bf16.mxu0 0
        %1327 = vmatpush1.bf16.xpose.msra.mxu0 0
        %1328 = vmatprep.subr.bf16.mxu0 0
        %1329 = vmatpush1.bf16.xpose.msra.mxu0 0
        %1330 = vmatprep.subr.bf16.mxu0 0
        %1331 = vmatpush1.bf16.xpose.msra.mxu0 0
        %1332 = vmatprep.subr.bf16.mxu0 0
        %1333 = vmatpush1.bf16.xpose.msra.mxu0 0
        %1334 = vmatprep.subr.bf16.mxu0 0
        %1335 = vmatpush1.bf16.xpose.msra.mxu0 0
        %1336 = vmatprep.subr.bf16.mxu0 0
        %1337 = vmatpush1.bf16.xpose.msra.mxu0 0
        %1338 = vmatprep.subr.bf16.mxu0 0
        %1339 = vmatpush1.bf16.xpose.msra.mxu0 0
        %1340 = vmatprep.subr.bf16.mxu0 0
        %1341 = vmatpush1.bf16.xpose.msra.mxu0 0
        %1342 = vmatprep.mubr.bf16.mxu0 0
        %1343 = vmatmul.mubr.bf16.gmra.mrb[0].mxu0 %v1305
        %v1344 = vpop.f32.mrb[0].mxu0
        %v1345 = vadd.f32 0.0, %v1344
        %v1346 = vpop.f32.mrb[0].mxu0
        %v1347 = vpop.f32.mrb[0].mxu0
        %v1348 = vpop.f32.mrb[0].mxu0
        %1349 = vdwg.mxu0
        %1351 = vrot.lane.b32.xlu0 %v1187, 64
        %v1352 = vpop.permute.xlu0 %1351
        %v1354 = vsel %vm1205, %v1187, 0
        %v1357 = vsel %vm1205, %v1352, 0
        %1359 = vmatprep.subr.bf16.mxu0 0
        %1360 = vmatpush1.bf16.xpose.msra.mxu0 %v1357
        %1361 = vmatprep.subr.bf16.mxu0 0
        %1362 = vmatpush1.bf16.xpose.msra.mxu0 0
        %1363 = vmatprep.subr.bf16.mxu0 0
        %1364 = vmatpush1.bf16.xpose.msra.mxu0 0
        %1365 = vmatprep.subr.bf16.mxu0 0
        %1366 = vmatpush1.bf16.xpose.msra.mxu0 0
        %1367 = vmatprep.subr.bf16.mxu0 0
        %1368 = vmatpush1.bf16.xpose.msra.mxu0 0
        %1369 = vmatprep.subr.bf16.mxu0 0
        %1370 = vmatpush1.bf16.xpose.msra.mxu0 0
        %1371 = vmatprep.subr.bf16.mxu0 0
        %1372 = vmatpush1.bf16.xpose.msra.mxu0 0
        %1373 = vmatprep.subr.bf16.mxu0 0
        %1374 = vmatpush1.bf16.xpose.msra.mxu0 0
        %1375 = vmatprep.subr.bf16.mxu0 0
        %1376 = vmatpush1.bf16.xpose.msra.mxu0 0
        %1377 = vmatprep.subr.bf16.mxu0 0
        %1378 = vmatpush1.bf16.xpose.msra.mxu0 0
        %1379 = vmatprep.subr.bf16.mxu0 0
        %1380 = vmatpush1.bf16.xpose.msra.mxu0 0
        %1381 = vmatprep.subr.bf16.mxu0 0
        %1382 = vmatpush1.bf16.xpose.msra.mxu0 0
        %1383 = vmatprep.subr.bf16.mxu0 0
        %1384 = vmatpush1.bf16.xpose.msra.mxu0 0
        %1385 = vmatprep.subr.bf16.mxu0 0
        %1386 = vmatpush1.bf16.xpose.msra.mxu0 0
        %1387 = vmatprep.subr.bf16.mxu0 0
        %1388 = vmatpush1.bf16.xpose.msra.mxu0 0
        %1389 = vmatprep.subr.bf16.mxu0 0
        %1390 = vmatpush1.bf16.xpose.msra.mxu0 0
        %1391 = vmatprep.mubr.bf16.mxu0 0
        %1392 = vmatmul.mubr.bf16.gmra.mrb[0].mxu0 %v1354
        %v1393 = vpop.f32.mrb[0].mxu0
        %v1394 = vadd.f32 0.0, %v1393
        %v1395 = vpop.f32.mrb[0].mxu0
        %v1396 = vpop.f32.mrb[0].mxu0
        %v1397 = vpop.f32.mrb[0].mxu0
        %1398 = vdwg.mxu0
        %v1399 = vmul.f32 %v1247, 0.25
        %v1400 = vmul.f32 %v1296, 0.25
        %v1401 = vmul.f32 %v1345, 0.25
        %v1402 = vmul.f32 %v1394, 0.25
        %vm1403 = vcmask 64512
        %v1404 = vsel %vm1403, %v1399, -inf
        %1405 = vmax.xlane.f32.xlu0 %v1404
        %v1406 = vpop.xlane.xlu0 %1405
        %v1407 = vsel %vm1403, %v1400, -inf
        %1408 = vmax.xlane.f32.xlu0 %v1407
        %v1409 = vpop.xlane.xlu0 %1408
        %v1410 = vsel %vm1403, %v1401, -inf
        %1411 = vmax.xlane.f32.xlu0 %v1410
        %v1412 = vpop.xlane.xlu0 %1411
        %v1413 = vsel %vm1403, %v1402, -inf
        %1414 = vmax.xlane.f32.xlu0 %v1413
        %v1415 = vpop.xlane.xlu0 %1414
        %v1416 = vsub.f32 %v1399, %v1406
        %v1417 = vsub.f32 %v1400, %v1409
        %v1418 = vsub.f32 %v1401, %v1412
        %v1419 = vsub.f32 %v1402, %v1415
        %v1420 = vmul.f32 %v1416, 1.442695
        %v1421 = vpow.pop %v1420
        %v1422 = vmul.f32 %v1417, 1.442695
        %v1423 = vpow.pop %v1422
        %v1424 = vmul.f32 %v1418, 1.442695
        %v1425 = vpow.pop %v1424
        %v1426 = vmul.f32 %v1419, 1.442695
        %v1427 = vpow.pop %v1426
        %v1428 = vsel %vm1403, %v1421, 0.0
        %1429 = vadd.xlane.f32.xlu0 %v1428
        %v1430 = vpop.xlane.xlu0 %1429
        %v1431 = vsel %vm1403, %v1423, 0.0
        %1432 = vadd.xlane.f32.xlu0 %v1431
        %v1433 = vpop.xlane.xlu0 %1432
        %v1434 = vsel %vm1403, %v1425, 0.0
        %1435 = vadd.xlane.f32.xlu0 %v1434
        %v1436 = vpop.xlane.xlu0 %1435
        %v1437 = vsel %vm1403, %v1427, 0.0
        %1438 = vadd.xlane.f32.xlu0 %v1437
        %v1439 = vpop.xlane.xlu0 %1438
        %v1440 = vrcp.pop %v1430
        %v1441 = vmul.f32 %v1421, %v1440
        %v1442 = vrcp.pop %v1433
        %v1443 = vmul.f32 %v1423, %v1442
        %v1444 = vrcp.pop %v1436
        %v1445 = vmul.f32 %v1425, %v1444
        %v1446 = vrcp.pop %v1439
        %v1447 = vmul.f32 %v1427, %v1446
        %v1448 = vpack.c.bf16 %v1441, %v1441
        %v1449 = vpack.c.bf16 %v1443, %v1443
        %v1450 = vpack.c.bf16 %v1445, %v1445
        %v1451 = vpack.c.bf16 %v1447, %v1447
        %v1453 = vsel %vm1403, %v1448, 0
        %vm1455 = vcmask 1043456
        %v1457 = vsel %vm1455, %v1198, 0
        %1459 = vmatprep.subr.bf16.mxu0 0
        %1460 = vmatpush1.bf16.msra.mxu0 %v1457
        %1461 = vmatprep.subr.bf16.mxu0 0
        %1462 = vmatpush1.bf16.msra.mxu0 0
        %1463 = vmatprep.subr.bf16.mxu0 0
        %1464 = vmatpush1.bf16.msra.mxu0 0
        %1465 = vmatprep.subr.bf16.mxu0 0
        %1466 = vmatpush1.bf16.msra.mxu0 0
        %1467 = vmatprep.subr.bf16.mxu0 0
        %1468 = vmatpush1.bf16.msra.mxu0 0
        %1469 = vmatprep.subr.bf16.mxu0 0
        %1470 = vmatpush1.bf16.msra.mxu0 0
        %1471 = vmatprep.subr.bf16.mxu0 0
        %1472 = vmatpush1.bf16.msra.mxu0 0
        %1473 = vmatprep.subr.bf16.mxu0 0
        %1474 = vmatpush1.bf16.msra.mxu0 0
        %1475 = vmatprep.subr.bf16.mxu0 0
        %1476 = vmatpush1.bf16.msra.mxu0 0
        %1477 = vmatprep.subr.bf16.mxu0 0
        %1478 = vmatpush1.bf16.msra.mxu0 0
        %1479 = vmatprep.subr.bf16.mxu0 0
        %1480 = vmatpush1.bf16.msra.mxu0 0
        %1481 = vmatprep.subr.bf16.mxu0 0
        %1482 = vmatpush1.bf16.msra.mxu0 0
        %1483 = vmatprep.subr.bf16.mxu0 0
        %1484 = vmatpush1.bf16.msra.mxu0 0
        %1485 = vmatprep.subr.bf16.mxu0 0
        %1486 = vmatpush1.bf16.msra.mxu0 0
        %1487 = vmatprep.subr.bf16.mxu0 0
        %1488 = vmatpush1.bf16.msra.mxu0 0
        %1489 = vmatprep.subr.bf16.mxu0 0
        %1490 = vmatpush1.bf16.msra.mxu0 0
        %1491 = vmatprep.mubr.bf16.mxu0 0
        %1492 = vmatmul.mubr.bf16.gmra.mrb[0].mxu0 %v1453
        %v1493 = vpop.f32.mrb[0].mxu0
        %v1494 = vadd.f32 0.0, %v1493
        %v1495 = vpop.f32.mrb[0].mxu0
        %v1496 = vpop.f32.mrb[0].mxu0
        %v1497 = vpop.f32.mrb[0].mxu0
        %1498 = vdwg.mxu0
        %v1500 = vsel %vm1403, %v1449, 0
        %v1503 = vsel %vm1455, %v1199, 0
        %1505 = vmatprep.subr.bf16.mxu0 0
        %1506 = vmatpush1.bf16.msra.mxu0 %v1503
        %1507 = vmatprep.subr.bf16.mxu0 0
        %1508 = vmatpush1.bf16.msra.mxu0 0
        %1509 = vmatprep.subr.bf16.mxu0 0
        %1510 = vmatpush1.bf16.msra.mxu0 0
        %1511 = vmatprep.subr.bf16.mxu0 0
        %1512 = vmatpush1.bf16.msra.mxu0 0
        %1513 = vmatprep.subr.bf16.mxu0 0
        %1514 = vmatpush1.bf16.msra.mxu0 0
        %1515 = vmatprep.subr.bf16.mxu0 0
        %1516 = vmatpush1.bf16.msra.mxu0 0
        %1517 = vmatprep.subr.bf16.mxu0 0
        %1518 = vmatpush1.bf16.msra.mxu0 0
        %1519 = vmatprep.subr.bf16.mxu0 0
        %1520 = vmatpush1.bf16.msra.mxu0 0
        %1521 = vmatprep.subr.bf16.mxu0 0
        %1522 = vmatpush1.bf16.msra.mxu0 0
        %1523 = vmatprep.subr.bf16.mxu0 0
        %1524 = vmatpush1.bf16.msra.mxu0 0
        %1525 = vmatprep.subr.bf16.mxu0 0
        %1526 = vmatpush1.bf16.msra.mxu0 0
        %1527 = vmatprep.subr.bf16.mxu0 0
        %1528 = vmatpush1.bf16.msra.mxu0 0
        %1529 = vmatprep.subr.bf16.mxu0 0
        %1530 = vmatpush1.bf16.msra.mxu0 0
        %1531 = vmatprep.subr.bf16.mxu0 0
        %1532 = vmatpush1.bf16.msra.mxu0 0
        %1533 = vmatprep.subr.bf16.mxu0 0
        %1534 = vmatpush1.bf16.msra.mxu0 0
        %1535 = vmatprep.subr.bf16.mxu0 0
        %1536 = vmatpush1.bf16.msra.mxu0 0
        %1537 = vmatprep.mubr.bf16.mxu0 0
        %1538 = vmatmul.mubr.bf16.gmra.mrb[0].mxu0 %v1500
        %v1539 = vpop.f32.mrb[0].mxu0
        %v1540 = vadd.f32 0.0, %v1539
        %v1541 = vpop.f32.mrb[0].mxu0
        %v1542 = vpop.f32.mrb[0].mxu0
        %v1543 = vpop.f32.mrb[0].mxu0
        %1544 = vdwg.mxu0
        %v1546 = vsel %vm1403, %v1450, 0
        %v1549 = vsel %vm1455, %v1200, 0
        %1551 = vmatprep.subr.bf16.mxu0 0
        %1552 = vmatpush1.bf16.msra.mxu0 %v1549
        %1553 = vmatprep.subr.bf16.mxu0 0
        %1554 = vmatpush1.bf16.msra.mxu0 0
        %1555 = vmatprep.subr.bf16.mxu0 0
        %1556 = vmatpush1.bf16.msra.mxu0 0
        %1557 = vmatprep.subr.bf16.mxu0 0
        %1558 = vmatpush1.bf16.msra.mxu0 0
        %1559 = vmatprep.subr.bf16.mxu0 0
        %1560 = vmatpush1.bf16.msra.mxu0 0
        %1561 = vmatprep.subr.bf16.mxu0 0
        %1562 = vmatpush1.bf16.msra.mxu0 0
        %1563 = vmatprep.subr.bf16.mxu0 0
        %1564 = vmatpush1.bf16.msra.mxu0 0
        %1565 = vmatprep.subr.bf16.mxu0 0
        %1566 = vmatpush1.bf16.msra.mxu0 0
        %1567 = vmatprep.subr.bf16.mxu0 0
        %1568 = vmatpush1.bf16.msra.mxu0 0
        %1569 = vmatprep.subr.bf16.mxu0 0
        %1570 = vmatpush1.bf16.msra.mxu0 0
        %1571 = vmatprep.subr.bf16.mxu0 0
        %1572 = vmatpush1.bf16.msra.mxu0 0
        %1573 = vmatprep.subr.bf16.mxu0 0
        %1574 = vmatpush1.bf16.msra.mxu0 0
        %1575 = vmatprep.subr.bf16.mxu0 0
        %1576 = vmatpush1.bf16.msra.mxu0 0
        %1577 = vmatprep.subr.bf16.mxu0 0
        %1578 = vmatpush1.bf16.msra.mxu0 0
        %1579 = vmatprep.subr.bf16.mxu0 0
        %1580 = vmatpush1.bf16.msra.mxu0 0
        %1581 = vmatprep.subr.bf16.mxu0 0
        %1582 = vmatpush1.bf16.msra.mxu0 0
        %1583 = vmatprep.mubr.bf16.mxu0 0
        %1584 = vmatmul.mubr.bf16.gmra.mrb[0].mxu0 %v1546
        %v1585 = vpop.f32.mrb[0].mxu0
        %v1586 = vadd.f32 0.0, %v1585
        %v1587 = vpop.f32.mrb[0].mxu0
        %v1588 = vpop.f32.mrb[0].mxu0
        %v1589 = vpop.f32.mrb[0].mxu0
        %1590 = vdwg.mxu0
        %v1592 = vsel %vm1403, %v1451, 0
        %v1595 = vsel %vm1455, %v1201, 0
        %1597 = vmatprep.subr.bf16.mxu0 0
        %1598 = vmatpush1.bf16.msra.mxu0 %v1595
        %1599 = vmatprep.subr.bf16.mxu0 0
        %1600 = vmatpush1.bf16.msra.mxu0 0
        %1601 = vmatprep.subr.bf16.mxu0 0
        %1602 = vmatpush1.bf16.msra.mxu0 0
        %1603 = vmatprep.subr.bf16.mxu0 0
        %1604 = vmatpush1.bf16.msra.mxu0 0
        %1605 = vmatprep.subr.bf16.mxu0 0
        %1606 = vmatpush1.bf16.msra.mxu0 0
        %1607 = vmatprep.subr.bf16.mxu0 0
        %1608 = vmatpush1.bf16.msra.mxu0 0
        %1609 = vmatprep.subr.bf16.mxu0 0
        %1610 = vmatpush1.bf16.msra.mxu0 0
        %1611 = vmatprep.subr.bf16.mxu0 0
        %1612 = vmatpush1.bf16.msra.mxu0 0
        %1613 = vmatprep.subr.bf16.mxu0 0
        %1614 = vmatpush1.bf16.msra.mxu0 0
        %1615 = vmatprep.subr.bf16.mxu0 0
        %1616 = vmatpush1.bf16.msra.mxu0 0
        %1617 = vmatprep.subr.bf16.mxu0 0
        %1618 = vmatpush1.bf16.msra.mxu0 0
        %1619 = vmatprep.subr.bf16.mxu0 0
        %1620 = vmatpush1.bf16.msra.mxu0 0
        %1621 = vmatprep.subr.bf16.mxu0 0
        %1622 = vmatpush1.bf16.msra.mxu0 0
        %1623 = vmatprep.subr.bf16.mxu0 0
        %1624 = vmatpush1.bf16.msra.mxu0 0
        %1625 = vmatprep.subr.bf16.mxu0 0
        %1626 = vmatpush1.bf16.msra.mxu0 0
        %1627 = vmatprep.subr.bf16.mxu0 0
        %1628 = vmatpush1.bf16.msra.mxu0 0
        %1629 = vmatprep.mubr.bf16.mxu0 0
        %1630 = vmatmul.mubr.bf16.gmra.mrb[0].mxu0 %v1592
        %v1631 = vpop.f32.mrb[0].mxu0
        %v1632 = vadd.f32 0.0, %v1631
        %v1633 = vpop.f32.mrb[0].mxu0
        %v1634 = vpop.f32.mrb[0].mxu0
        %v1635 = vpop.f32.mrb[0].mxu0
        %1636 = vdwg.mxu0
        %1638 = vrot.lane.b32.xlu0 %v1540, 16
        %v1639 = vpop.permute.xlu0 %1638
        %1642 = vrot.lane.b32.xlu0 %v1586, 32
        %v1643 = vpop.permute.xlu0 %1642
        %1646 = vrot.lane.b32.xlu0 %v1632, 48
        %v1647 = vpop.permute.xlu0 %1646
        %v1649 = vsel %vm1205, %v1494, %v1639
        %v1650 = vsel %vm959, %v1649, %v1643
        %vm1651 = vcmask 392192
        %v1652 = vsel %vm1651, %v1650, %v1647
        %v1653 = vpack.c.bf16 %v1652, %v1652
        %v1654 = vld [vmem:[%s10] sm:$0xf]
        %v1655 = vld [vmem:[%s10 + $0x4] sm:$0xf]
        %v1656 = vld [vmem:[%s10 + $0x8] sm:$0xf]
        %v1657 = vld [vmem:[%s10 + $0xc] sm:$0xf]
        %v1658 = vld [vmem:[%s10 + $0x10] sm:$0xf]
        %v1659 = vld [vmem:[%s10 + $0x14] sm:$0xf]
        %v1660 = vld [vmem:[%s10 + $0x18] sm:$0xf]
        %v1661 = vld [vmem:[%s10 + $0x1c] sm:$0xf]
        %v1670 = vunpack.c.l.b16 %v1654
        %v1671 = vunpack.c.l.b16 %v1655
        %v1672 = vunpack.c.l.b16 %v1656
        %v1673 = vunpack.c.l.b16 %v1657
        %v1674 = vunpack.c.l.b16 %v1658
        %v1675 = vunpack.c.l.b16 %v1659
        %v1676 = vunpack.c.l.b16 %v1660
        %v1677 = vunpack.c.l.b16 %v1661
        %v1678 = vpack.c.b16 %v1671, %v1670
        %v1679 = vpack.c.b16 %v1673, %v1672
        %v1680 = vpack.c.b16 %v1675, %v1674
        %v1681 = vpack.c.b16 %v1677, %v1676
        %v1687 = vsel %vm1054, %v1653, 0
        %1689 = vmatprep.subr.bf16.mxu0 0
        %1690 = vmatpush1.bf16.msra.mxu0 %v1678
        %1691 = vmatprep.subr.bf16.mxu0 0
        %1692 = vmatpush1.bf16.msra.mxu0 %v1679
        %1693 = vmatprep.subr.bf16.mxu0 0
        %1694 = vmatpush1.bf16.msra.mxu0 %v1680
        %1695 = vmatprep.subr.bf16.mxu0 0
        %1696 = vmatpush1.bf16.msra.mxu0 %v1681
        %1697 = vmatprep.subr.bf16.mxu0 0
        %1698 = vmatpush1.bf16.msra.mxu0 0
        %1699 = vmatprep.subr.bf16.mxu0 0
        %1700 = vmatpush1.bf16.msra.mxu0 0
        %1701 = vmatprep.subr.bf16.mxu0 0
        %1702 = vmatpush1.bf16.msra.mxu0 0
        %1703 = vmatprep.subr.bf16.mxu0 0
        %1704 = vmatpush1.bf16.msra.mxu0 0
        %1705 = vmatprep.subr.bf16.mxu0 0
        %1706 = vmatpush1.bf16.msra.mxu0 0
        %1707 = vmatprep.subr.bf16.mxu0 0
        %1708 = vmatpush1.bf16.msra.mxu0 0
        %1709 = vmatprep.subr.bf16.mxu0 0
        %1710 = vmatpush1.bf16.msra.mxu0 0
        %1711 = vmatprep.subr.bf16.mxu0 0
        %1712 = vmatpush1.bf16.msra.mxu0 0
        %1713 = vmatprep.subr.bf16.mxu0 0
        %1714 = vmatpush1.bf16.msra.mxu0 0
        %1715 = vmatprep.subr.bf16.mxu0 0
        %1716 = vmatpush1.bf16.msra.mxu0 0
        %1717 = vmatprep.subr.bf16.mxu0 0
        %1718 = vmatpush1.bf16.msra.mxu0 0
        %1719 = vmatprep.subr.bf16.mxu0 0
        %1720 = vmatpush1.bf16.msra.mxu0 0
        %1721 = vmatprep.mubr.bf16.mxu0 0
        %1722 = vmatmul.mubr.bf16.gmra.mrb[0].mxu0 %v1687
        %v1723 = vpop.f32.mrb[0].mxu0
        %v1724 = vadd.f32 0.0, %v1723
        %v1725 = vpop.f32.mrb[0].mxu0
        %v1726 = vpop.f32.mrb[0].mxu0
        %v1727 = vpop.f32.mrb[0].mxu0
        %1728 = vdwg.mxu0
        %v1729 = vadd.f32 %v1047, %v1724
        %v1730 = vld [vmem:[%s11] sm:$0x1]
        %v1731 = vunpack.c.l.bf16 %v1730
        %v1732 = vlaneseq
        %v1733 = vshrl.u32 %v1732, 7
        %v1734 = vsub.s32 0, %v1733
        %v1735 = vrot.slane %v1731, %v1734
        %v1736 = vadd.f32 %v1729, %v1735
        %v1737 = vld [vmem:[%s12] sm:$0x1]
        %v1738 = vld [vmem:[%s13] sm:$0x1]
        %v1739 = vsel %vm1054, %v1736, 0.0
        %1740 = vadd.xlane.f32.xlu0 %v1739
        %v1741 = vpop.xlane.xlu0 %1740
        %v1742 = vmul.f32 %v1741, %v1058
        %v1743 = vsub.f32 %v1736, %v1742
        %v1744 = vmul.f32 %v1743, %v1743
        %v1745 = vsel %vm1054, %v1744, 0.0
        %1746 = vadd.xlane.f32.xlu0 %v1745
        %v1747 = vpop.xlane.xlu0 %1746
        %v1748 = vmul.f32 %v1747, %v1058
        %v1749 = vadd.f32 %v1748, 1e-05
        %v1750 = vrsqrt.pop %v1749
        %v1751 = vmul.f32 %v1743, %v1750
        %v1752 = vunpack.c.l.bf16 %v1737
        %v1753 = vlaneseq
        %v1754 = vshrl.u32 %v1753, 7
        %v1755 = vsub.s32 0, %v1754
        %v1756 = vrot.slane %v1752, %v1755
        %v1757 = vmul.f32 %v1751, %v1756
        %v1758 = vunpack.c.l.bf16 %v1738
        %v1759 = vlaneseq
        %v1760 = vshrl.u32 %v1759, 7
        %v1761 = vsub.s32 0, %v1760
        %v1762 = vrot.slane %v1758, %v1761
        %v1763 = vadd.f32 %v1757, %v1762
        %v1764 = vpack.c.bf16 %v1763, %v1763
        %v1765 = vld [vmem:[%s14] sm:$0xff]
        %v1766 = vld [vmem:[%s14 + $0x8] sm:$0xff]
        %v1767 = vld [vmem:[%s14 + $0x10] sm:$0xff]
        %v1768 = vld [vmem:[%s14 + $0x18] sm:$0xff]
        %v1769 = vld [vmem:[%s14 + $0x20] sm:$0xff]
        %v1770 = vld [vmem:[%s14 + $0x28] sm:$0xff]
        %v1771 = vld [vmem:[%s14 + $0x30] sm:$0xff]
        %v1772 = vld [vmem:[%s14 + $0x38] sm:$0xff]
        %v1773 = vld [vmem:[%s15] sm:$0x3]
        %v1774 = vunpack.c.l.bf16 %v1773
        %v1776 = vlaneseq
        %v1777 = vshrl.u32 %v1776, 7
        %v1778 = vsub.s32 0, %v1777
        %v1779 = vrot.slane %v1774, %v1778
        %v1780 = vlaneseq
        %v1781 = vshrl.u32 %v1780, 7
        %v1782 = vsub.s32 2, %v1781
        %v1783 = vrot.slane %v1774, %v1782
        %v1786 = vlaneseq
        %v1787 = vshrl.u32 %v1786, 7
        %v1788 = vsub.s32 0, %v1787
        %v1789 = vrot.slane %v1779, %v1788
        %v1790 = vlaneseq
        %v1791 = vshrl.u32 %v1790, 7
        %v1792 = vsub.s32 0, %v1791
        %v1793 = vrot.slane %v1783, %v1792
        %v1802 = vunpack.c.l.b16 %v1765
        %v1803 = vunpack.c.h.b16 %v1765
        %v1804 = vunpack.c.l.b16 %v1766
        %v1805 = vunpack.c.h.b16 %v1766
        %v1806 = vunpack.c.l.b16 %v1767
        %v1807 = vunpack.c.h.b16 %v1767
        %v1808 = vunpack.c.l.b16 %v1768
        %v1809 = vunpack.c.h.b16 %v1768
        %v1810 = vunpack.c.l.b16 %v1769
        %v1811 = vunpack.c.h.b16 %v1769
        %v1812 = vunpack.c.l.b16 %v1770
        %v1813 = vunpack.c.h.b16 %v1770
        %v1814 = vunpack.c.l.b16 %v1771
        %v1815 = vunpack.c.h.b16 %v1771
        %v1816 = vunpack.c.l.b16 %v1772
        %v1817 = vunpack.c.h.b16 %v1772
        %v1818 = vpack.c.b16 %v1804, %v1802
        %v1819 = vpack.c.b16 %v1805, %v1803
        %v1820 = vpack.c.b16 %v1808, %v1806
        %v1821 = vpack.c.b16 %v1809, %v1807
        %v1822 = vpack.c.b16 %v1812, %v1810
        %v1823 = vpack.c.b16 %v1813, %v1811
        %v1824 = vpack.c.b16 %v1816, %v1814
        %v1825 = vpack.c.b16 %v1817, %v1815
        %v1835 = vsel %vm1054, %v1764, 0
        %1837 = vmatprep.subr.bf16.mxu0 %v1819
        %1838 = vmatpush1.bf16.msra.mxu0 %v1818
        %1839 = vmatprep.subr.bf16.mxu0 %v1821
        %1840 = vmatpush1.bf16.msra.mxu0 %v1820
        %1841 = vmatprep.subr.bf16.mxu0 %v1823
        %1842 = vmatpush1.bf16.msra.mxu0 %v1822
        %1843 = vmatprep.subr.bf16.mxu0 %v1825
        %1844 = vmatpush1.bf16.msra.mxu0 %v1824
        %1845 = vmatprep.subr.bf16.mxu0 0
        %1846 = vmatpush1.bf16.msra.mxu0 0
        %1847 = vmatprep.subr.bf16.mxu0 0
        %1848 = vmatpush1.bf16.msra.mxu0 0
        %1849 = vmatprep.subr.bf16.mxu0 0
        %1850 = vmatpush1.bf16.msra.mxu0 0
        %1851 = vmatprep.subr.bf16.mxu0 0
        %1852 = vmatpush1.bf16.msra.mxu0 0
        %1853 = vmatprep.subr.bf16.mxu0 0
        %1854 = vmatpush1.bf16.msra.mxu0 0
        %1855 = vmatprep.subr.bf16.mxu0 0
        %1856 = vmatpush1.bf16.msra.mxu0 0
        %1857 = vmatprep.subr.bf16.mxu0 0
        %1858 = vmatpush1.bf16.msra.mxu0 0
        %1859 = vmatprep.subr.bf16.mxu0 0
        %1860 = vmatpush1.bf16.msra.mxu0 0
        %1861 = vmatprep.subr.bf16.mxu0 0
        %1862 = vmatpush1.bf16.msra.mxu0 0
        %1863 = vmatprep.subr.bf16.mxu0 0
        %1864 = vmatpush1.bf16.msra.mxu0 0
        %1865 = vmatprep.subr.bf16.mxu0 0
        %1866 = vmatpush1.bf16.msra.mxu0 0
        %1867 = vmatprep.subr.bf16.mxu0 0
        %1868 = vmatpush1.bf16.msra.mxu0 0
        %1869 = vmatprep.mubr.bf16.mxu0 0
        %1870 = vmatmul.mubr.bf16.gmra.mrb[0].mxu0 %v1835
        %v1871 = vpop.f32.mrb[0].mxu0
        %v1872 = vadd.f32 %v1789, %v1871
        %v1873 = vpop.f32.mrb[0].mxu0
        %v1874 = vadd.f32 %v1793, %v1873
        %v1875 = vpop.f32.mrb[0].mxu0
        %v1876 = vpop.f32.mrb[0].mxu0
        %1877 = vdwg.mxu0
        %v1878 = vmul.f32 %v1872, 0.5
        %v1879 = vmul.f32 %v1874, 0.5
        %v1880 = vmul.f32 %v1872, 0.70710677
        %v1881 = vmul.f32 %v1874, 0.70710677
        %v1882 = verf.f32.pop %v1880
        %v1883 = verf.f32.pop %v1881
        %v1884 = vadd.f32 %v1882, 1.0
        %v1885 = vadd.f32 %v1883, 1.0
        %v1886 = vmul.f32 %v1878, %v1884
        %v1887 = vmul.f32 %v1879, %v1885
        %v1888 = vpack.c.bf16 %v1886, %v1886
        %v1889 = vpack.c.bf16 %v1887, %v1887
        %v1890 = vld [vmem:[%s16] sm:$0xf]
        %v1891 = vld [vmem:[%s16 + $0x4] sm:$0xf]
        %v1892 = vld [vmem:[%s16 + $0x8] sm:$0xf]
        %v1893 = vld [vmem:[%s16 + $0xc] sm:$0xf]
        %v1894 = vld [vmem:[%s16 + $0x10] sm:$0xf]
        %v1895 = vld [vmem:[%s16 + $0x14] sm:$0xf]
        %v1896 = vld [vmem:[%s16 + $0x18] sm:$0xf]
        %v1897 = vld [vmem:[%s16 + $0x1c] sm:$0xf]
        %v1898 = vld [vmem:[%s16 + $0x20] sm:$0xf]
        %v1899 = vld [vmem:[%s16 + $0x24] sm:$0xf]
        %v1900 = vld [vmem:[%s16 + $0x28] sm:$0xf]
        %v1901 = vld [vmem:[%s16 + $0x2c] sm:$0xf]
        %v1902 = vld [vmem:[%s16 + $0x30] sm:$0xf]
        %v1903 = vld [vmem:[%s16 + $0x34] sm:$0xf]
        %v1904 = vld [vmem:[%s16 + $0x38] sm:$0xf]
        %v1905 = vld [vmem:[%s16 + $0x3c] sm:$0xf]
        %v1906 = vld [vmem:[%s16 + $0x40] sm:$0xf]
        %v1907 = vld [vmem:[%s16 + $0x44] sm:$0xf]
        %v1908 = vld [vmem:[%s16 + $0x48] sm:$0xf]
        %v1909 = vld [vmem:[%s16 + $0x4c] sm:$0xf]
        %v1910 = vld [vmem:[%s16 + $0x50] sm:$0xf]
        %v1911 = vld [vmem:[%s16 + $0x54] sm:$0xf]
        %v1912 = vld [vmem:[%s16 + $0x58] sm:$0xf]
        %v1913 = vld [vmem:[%s16 + $0x5c] sm:$0xf]
        %v1914 = vld [vmem:[%s16 + $0x60] sm:$0xf]
        %v1915 = vld [vmem:[%s16 + $0x64] sm:$0xf]
        %v1916 = vld [vmem:[%s16 + $0x68] sm:$0xf]
        %v1917 = vld [vmem:[%s16 + $0x6c] sm:$0xf]
        %v1918 = vld [vmem:[%s16 + $0x70] sm:$0xf]
        %v1919 = vld [vmem:[%s16 + $0x74] sm:$0xf]
        %v1920 = vld [vmem:[%s16 + $0x78] sm:$0xf]
        %v1921 = vld [vmem:[%s16 + $0x7c] sm:$0xf]
        %v1922 = vld [vmem:[%s17] sm:$0x1]
        %v1923 = vunpack.c.l.bf16 %v1922
        %v1924 = vlaneseq
        %v1925 = vshrl.u32 %v1924, 7
        %v1926 = vsub.s32 0, %v1925
        %v1927 = vrot.slane %v1923, %v1926
        %v1960 = vunpack.c.l.b16 %v1890
        %v1961 = vunpack.c.l.b16 %v1891
        %v1962 = vunpack.c.l.b16 %v1892
        %v1963 = vunpack.c.l.b16 %v1893
        %v1964 = vunpack.c.l.b16 %v1894
        %v1965 = vunpack.c.l.b16 %v1895
        %v1966 = vunpack.c.l.b16 %v1896
        %v1967 = vunpack.c.l.b16 %v1897
        %v1968 = vunpack.c.l.b16 %v1898
        %v1969 = vunpack.c.l.b16 %v1899
        %v1970 = vunpack.c.l.b16 %v1900
        %v1971 = vunpack.c.l.b16 %v1901
        %v1972 = vunpack.c.l.b16 %v1902
        %v1973 = vunpack.c.l.b16 %v1903
        %v1974 = vunpack.c.l.b16 %v1904
        %v1975 = vunpack.c.l.b16 %v1905
        %v1976 = vunpack.c.l.b16 %v1906
        %v1977 = vunpack.c.l.b16 %v1907
        %v1978 = vunpack.c.l.b16 %v1908
        %v1979 = vunpack.c.l.b16 %v1909
        %v1980 = vunpack.c.l.b16 %v1910
        %v1981 = vunpack.c.l.b16 %v1911
        %v1982 = vunpack.c.l.b16 %v1912
        %v1983 = vunpack.c.l.b16 %v1913
        %v1984 = vunpack.c.l.b16 %v1914
        %v1985 = vunpack.c.l.b16 %v1915
        %v1986 = vunpack.c.l.b16 %v1916
        %v1987 = vunpack.c.l.b16 %v1917
        %v1988 = vunpack.c.l.b16 %v1918
        %v1989 = vunpack.c.l.b16 %v1919
        %v1990 = vunpack.c.l.b16 %v1920
        %v1991 = vunpack.c.l.b16 %v1921
        %v1992 = vpack.c.b16 %v1961, %v1960
        %v1993 = vpack.c.b16 %v1963, %v1962
        %v1994 = vpack.c.b16 %v1965, %v1964
        %v1995 = vpack.c.b16 %v1967, %v1966
        %v1996 = vpack.c.b16 %v1969, %v1968
        %v1997 = vpack.c.b16 %v1971, %v1970
        %v1998 = vpack.c.b16 %v1973, %v1972
        %v1999 = vpack.c.b16 %v1975, %v1974
        %v2000 = vpack.c.b16 %v1977, %v1976
        %v2001 = vpack.c.b16 %v1979, %v1978
        %v2002 = vpack.c.b16 %v1981, %v1980
        %v2003 = vpack.c.b16 %v1983, %v1982
        %v2004 = vpack.c.b16 %v1985, %v1984
        %v2005 = vpack.c.b16 %v1987, %v1986
        %v2006 = vpack.c.b16 %v1989, %v1988
        %v2007 = vpack.c.b16 %v1991, %v1990
        %2024 = vmatprep.subr.bf16.mxu0 0
        %2025 = vmatpush1.bf16.msra.mxu0 %v1992
        %2026 = vmatprep.subr.bf16.mxu0 0
        %2027 = vmatpush1.bf16.msra.mxu0 %v1993
        %2028 = vmatprep.subr.bf16.mxu0 0
        %2029 = vmatpush1.bf16.msra.mxu0 %v1994
        %2030 = vmatprep.subr.bf16.mxu0 0
        %2031 = vmatpush1.bf16.msra.mxu0 %v1995
        %2032 = vmatprep.subr.bf16.mxu0 0
        %2033 = vmatpush1.bf16.msra.mxu0 %v1996
        %2034 = vmatprep.subr.bf16.mxu0 0
        %2035 = vmatpush1.bf16.msra.mxu0 %v1997
        %2036 = vmatprep.subr.bf16.mxu0 0
        %2037 = vmatpush1.bf16.msra.mxu0 %v1998
        %2038 = vmatprep.subr.bf16.mxu0 0
        %2039 = vmatpush1.bf16.msra.mxu0 %v1999
        %2040 = vmatprep.subr.bf16.mxu0 0
        %2041 = vmatpush1.bf16.msra.mxu0 %v2000
        %2042 = vmatprep.subr.bf16.mxu0 0
        %2043 = vmatpush1.bf16.msra.mxu0 %v2001
        %2044 = vmatprep.subr.bf16.mxu0 0
        %2045 = vmatpush1.bf16.msra.mxu0 %v2002
        %2046 = vmatprep.subr.bf16.mxu0 0
        %2047 = vmatpush1.bf16.msra.mxu0 %v2003
        %2048 = vmatprep.subr.bf16.mxu0 0
        %2049 = vmatpush1.bf16.msra.mxu0 %v2004
        %2050 = vmatprep.subr.bf16.mxu0 0
        %2051 = vmatpush1.bf16.msra.mxu0 %v2005
        %2052 = vmatprep.subr.bf16.mxu0 0
        %2053 = vmatpush1.bf16.msra.mxu0 %v2006
        %2054 = vmatprep.subr.bf16.mxu0 0
        %2055 = vmatpush1.bf16.msra.mxu0 %v2007
        %2056 = vmatprep.mubr.bf16.mxu0 %v1889
        %2057 = vmatmul.mubr.bf16.gmra.mrb[0].mxu0 %v1888
        %v2058 = vpop.f32.mrb[0].mxu0
        %v2059 = vadd.f32 %v1927, %v2058
        %v2060 = vpop.f32.mrb[0].mxu0
        %v2061 = vpop.f32.mrb[0].mxu0
        %v2062 = vpop.f32.mrb[0].mxu0
        %2063 = vdwg.mxu0
        %v2064 = vadd.f32 %v1736, %v2059
        %s2065 = scalar_lea.vmem %s7, 1
        %v2066 = vld [vmem:[%s2065] sm:$0x1]
        %s2067 = scalar_lea.vmem %s8, 1
        %v2068 = vld [vmem:[%s2067] sm:$0x1]
        %v2069 = vsel %vm1054, %v2064, 0.0
        %2070 = vadd.xlane.f32.xlu0 %v2069
        %v2071 = vpop.xlane.xlu0 %2070
        %v2072 = vmul.f32 %v2071, %v1058
        %v2073 = vsub.f32 %v2064, %v2072
        %v2074 = vmul.f32 %v2073, %v2073
        %v2075 = vsel %vm1054, %v2074, 0.0
        %2076 = vadd.xlane.f32.xlu0 %v2075
        %v2077 = vpop.xlane.xlu0 %2076
        %v2078 = vmul.f32 %v2077, %v1058
        %v2079 = vadd.f32 %v2078, 1e-05
        %v2080 = vrsqrt.pop %v2079
        %v2081 = vmul.f32 %v2073, %v2080
        %v2082 = vunpack.c.l.bf16 %v2066
        %v2083 = vlaneseq
        %v2084 = vshrl.u32 %v2083, 7
        %v2085 = vsub.s32 0, %v2084
        %v2086 = vrot.slane %v2082, %v2085
        %v2087 = vmul.f32 %v2081, %v2086
        %v2088 = vunpack.c.l.bf16 %v2068
        %v2089 = vlaneseq
        %v2090 = vshrl.u32 %v2089, 7
        %v2091 = vsub.s32 0, %v2090
        %v2092 = vrot.slane %v2088, %v2091
        %v2093 = vadd.f32 %v2087, %v2092
        %v2094 = vpack.c.bf16 %v2093, %v2093
        %s2095 = scalar_lea.vmem %s9, 64
        %v2096 = vld [vmem:[%s2095] sm:$0xff]
        %v2097 = vld [vmem:[%s2095 + $0x8] sm:$0xff]
        %v2098 = vld [vmem:[%s2095 + $0x10] sm:$0xff]
        %v2099 = vld [vmem:[%s2095 + $0x18] sm:$0xff]
        %v2100 = vld [vmem:[%s2095 + $0x20] sm:$0xff]
        %v2101 = vld [vmem:[%s2095 + $0x28] sm:$0xff]
        %v2102 = vld [vmem:[%s2095 + $0x30] sm:$0xff]
        %v2103 = vld [vmem:[%s2095 + $0x38] sm:$0xff]
        %v2112 = vunpack.c.l.b16 %v2096
        %v2113 = vunpack.c.h.b16 %v2096
        %v2114 = vunpack.c.l.b16 %v2097
        %v2115 = vunpack.c.h.b16 %v2097
        %v2116 = vunpack.c.l.b16 %v2098
        %v2117 = vunpack.c.h.b16 %v2098
        %v2118 = vunpack.c.l.b16 %v2099
        %v2119 = vunpack.c.h.b16 %v2099
        %v2120 = vunpack.c.l.b16 %v2100
        %v2121 = vunpack.c.h.b16 %v2100
        %v2122 = vunpack.c.l.b16 %v2101
        %v2123 = vunpack.c.h.b16 %v2101
        %v2124 = vunpack.c.l.b16 %v2102
        %v2125 = vunpack.c.h.b16 %v2102
        %v2126 = vunpack.c.l.b16 %v2103
        %v2127 = vunpack.c.h.b16 %v2103
        %v2128 = vpack.c.b16 %v2114, %v2112
        %v2129 = vpack.c.b16 %v2115, %v2113
        %v2130 = vpack.c.b16 %v2118, %v2116
        %v2131 = vpack.c.b16 %v2119, %v2117
        %v2132 = vpack.c.b16 %v2122, %v2120
        %v2133 = vpack.c.b16 %v2123, %v2121
        %v2134 = vpack.c.b16 %v2126, %v2124
        %v2135 = vpack.c.b16 %v2127, %v2125
        %v2145 = vsel %vm1054, %v2094, 0
        %2147 = vmatprep.subr.bf16.mxu0 %v2129
        %2148 = vmatpush1.bf16.msra.mxu0 %v2128
        %2149 = vmatprep.subr.bf16.mxu0 %v2131
        %2150 = vmatpush1.bf16.msra.mxu0 %v2130
        %2151 = vmatprep.subr.bf16.mxu0 %v2133
        %2152 = vmatpush1.bf16.msra.mxu0 %v2132
        %2153 = vmatprep.subr.bf16.mxu0 %v2135
        %2154 = vmatpush1.bf16.msra.mxu0 %v2134
        %2155 = vmatprep.subr.bf16.mxu0 0
        %2156 = vmatpush1.bf16.msra.mxu0 0
        %2157 = vmatprep.subr.bf16.mxu0 0
        %2158 = vmatpush1.bf16.msra.mxu0 0
        %2159 = vmatprep.subr.bf16.mxu0 0
        %2160 = vmatpush1.bf16.msra.mxu0 0
        %2161 = vmatprep.subr.bf16.mxu0 0
        %2162 = vmatpush1.bf16.msra.mxu0 0
        %2163 = vmatprep.subr.bf16.mxu0 0
        %2164 = vmatpush1.bf16.msra.mxu0 0
        %2165 = vmatprep.subr.bf16.mxu0 0
        %2166 = vmatpush1.bf16.msra.mxu0 0
        %2167 = vmatprep.subr.bf16.mxu0 0
        %2168 = vmatpush1.bf16.msra.mxu0 0
        %2169 = vmatprep.subr.bf16.mxu0 0
        %2170 = vmatpush1.bf16.msra.mxu0 0
        %2171 = vmatprep.subr.bf16.mxu0 0
        %2172 = vmatpush1.bf16.msra.mxu0 0
        %2173 = vmatprep.subr.bf16.mxu0 0
        %2174 = vmatpush1.bf16.msra.mxu0 0
        %2175 = vmatprep.subr.bf16.mxu0 0
        %2176 = vmatpush1.bf16.msra.mxu0 0
        %2177 = vmatprep.subr.bf16.mxu0 0
        %2178 = vmatpush1.bf16.msra.mxu0 0
        %2179 = vmatprep.mubr.bf16.mxu0 0
        %2180 = vmatmul.mubr.bf16.gmra.mrb[0].mxu0 %v2145
        %v2181 = vpop.f32.mrb[0].mxu0
        %v2182 = vadd.f32 0.0, %v2181
        %v2183 = vpop.f32.mrb[0].mxu0
        %v2184 = vadd.f32 0.0, %v2183
        %v2185 = vpop.f32.mrb[0].mxu0
        %v2186 = vpop.f32.mrb[0].mxu0
        %2187 = vdwg.mxu0
        %2189 = vrot.lane.b32.xlu0 %v2182, 112
        %v2190 = vpop.permute.xlu0 %2189
        %2192 = vrot.lane.b32.xlu0 %v2182, 96
        %v2193 = vpop.permute.xlu0 %2192
        %2195 = vrot.lane.b32.xlu0 %v2182, 80
        %v2196 = vpop.permute.xlu0 %2195
        %v2198 = vpack.c.bf16 %v2182, %v2182
        %v2199 = vpack.c.bf16 %v2190, %v2190
        %v2200 = vpack.c.bf16 %v2193, %v2193
        %v2201 = vpack.c.bf16 %v2196, %v2196
        %2203 = vrot.lane.b32.xlu0 %v2184, 112
        %v2204 = vpop.permute.xlu0 %2203
        %2206 = vrot.lane.b32.xlu0 %v2184, 96
        %v2207 = vpop.permute.xlu0 %2206
        %2209 = vrot.lane.b32.xlu0 %v2184, 80
        %v2210 = vpop.permute.xlu0 %2209
        %v2212 = vpack.c.bf16 %v2184, %v2184
        %v2213 = vpack.c.bf16 %v2204, %v2204
        %v2214 = vpack.c.bf16 %v2207, %v2207
        %v2215 = vpack.c.bf16 %v2210, %v2210
        %2217 = vrot.lane.b32.xlu0 %v2198, 64
        %v2218 = vpop.permute.xlu0 %2217
        %v2220 = vsel %vm1205, %v2198, 0
        %v2223 = vsel %vm1205, %v2218, 0
        %2225 = vmatprep.subr.bf16.mxu0 0
        %2226 = vmatpush1.bf16.xpose.msra.mxu0 %v2223
        %2227 = vmatprep.subr.bf16.mxu0 0
        %2228 = vmatpush1.bf16.xpose.msra.mxu0 0
        %2229 = vmatprep.subr.bf16.mxu0 0
        %2230 = vmatpush1.bf16.xpose.msra.mxu0 0
        %2231 = vmatprep.subr.bf16.mxu0 0
        %2232 = vmatpush1.bf16.xpose.msra.mxu0 0
        %2233 = vmatprep.subr.bf16.mxu0 0
        %2234 = vmatpush1.bf16.xpose.msra.mxu0 0
        %2235 = vmatprep.subr.bf16.mxu0 0
        %2236 = vmatpush1.bf16.xpose.msra.mxu0 0
        %2237 = vmatprep.subr.bf16.mxu0 0
        %2238 = vmatpush1.bf16.xpose.msra.mxu0 0
        %2239 = vmatprep.subr.bf16.mxu0 0
        %2240 = vmatpush1.bf16.xpose.msra.mxu0 0
        %2241 = vmatprep.subr.bf16.mxu0 0
        %2242 = vmatpush1.bf16.xpose.msra.mxu0 0
        %2243 = vmatprep.subr.bf16.mxu0 0
        %2244 = vmatpush1.bf16.xpose.msra.mxu0 0
        %2245 = vmatprep.subr.bf16.mxu0 0
        %2246 = vmatpush1.bf16.xpose.msra.mxu0 0
        %2247 = vmatprep.subr.bf16.mxu0 0
        %2248 = vmatpush1.bf16.xpose.msra.mxu0 0
        %2249 = vmatprep.subr.bf16.mxu0 0
        %2250 = vmatpush1.bf16.xpose.msra.mxu0 0
        %2251 = vmatprep.subr.bf16.mxu0 0
        %2252 = vmatpush1.bf16.xpose.msra.mxu0 0
        %2253 = vmatprep.subr.bf16.mxu0 0
        %2254 = vmatpush1.bf16.xpose.msra.mxu0 0
        %2255 = vmatprep.subr.bf16.mxu0 0
        %2256 = vmatpush1.bf16.xpose.msra.mxu0 0
        %2257 = vmatprep.mubr.bf16.mxu0 0
        %2258 = vmatmul.mubr.bf16.gmra.mrb[0].mxu0 %v2220
        %v2259 = vpop.f32.mrb[0].mxu0
        %v2260 = vadd.f32 0.0, %v2259
        %v2261 = vpop.f32.mrb[0].mxu0
        %v2262 = vpop.f32.mrb[0].mxu0
        %v2263 = vpop.f32.mrb[0].mxu0
        %2264 = vdwg.mxu0
        %2266 = vrot.lane.b32.xlu0 %v2199, 64
        %v2267 = vpop.permute.xlu0 %2266
        %v2269 = vsel %vm1205, %v2199, 0
        %v2272 = vsel %vm1205, %v2267, 0
        %2274 = vmatprep.subr.bf16.mxu0 0
        %2275 = vmatpush1.bf16.xpose.msra.mxu0 %v2272
        %2276 = vmatprep.subr.bf16.mxu0 0
        %2277 = vmatpush1.bf16.xpose.msra.mxu0 0
        %2278 = vmatprep.subr.bf16.mxu0 0
        %2279 = vmatpush1.bf16.xpose.msra.mxu0 0
        %2280 = vmatprep.subr.bf16.mxu0 0
        %2281 = vmatpush1.bf16.xpose.msra.mxu0 0
        %2282 = vmatprep.subr.bf16.mxu0 0
        %2283 = vmatpush1.bf16.xpose.msra.mxu0 0
        %2284 = vmatprep.subr.bf16.mxu0 0
        %2285 = vmatpush1.bf16.xpose.msra.mxu0 0
        %2286 = vmatprep.subr.bf16.mxu0 0
        %2287 = vmatpush1.bf16.xpose.msra.mxu0 0
        %2288 = vmatprep.subr.bf16.mxu0 0
        %2289 = vmatpush1.bf16.xpose.msra.mxu0 0
        %2290 = vmatprep.subr.bf16.mxu0 0
        %2291 = vmatpush1.bf16.xpose.msra.mxu0 0
        %2292 = vmatprep.subr.bf16.mxu0 0
        %2293 = vmatpush1.bf16.xpose.msra.mxu0 0
        %2294 = vmatprep.subr.bf16.mxu0 0
        %2295 = vmatpush1.bf16.xpose.msra.mxu0 0
        %2296 = vmatprep.subr.bf16.mxu0 0
        %2297 = vmatpush1.bf16.xpose.msra.mxu0 0
        %2298 = vmatprep.subr.bf16.mxu0 0
        %2299 = vmatpush1.bf16.xpose.msra.mxu0 0
        %2300 = vmatprep.subr.bf16.mxu0 0
        %2301 = vmatpush1.bf16.xpose.msra.mxu0 0
        %2302 = vmatprep.subr.bf16.mxu0 0
        %2303 = vmatpush1.bf16.xpose.msra.mxu0 0
        %2304 = vmatprep.subr.bf16.mxu0 0
        %2305 = vmatpush1.bf16.xpose.msra.mxu0 0
        %2306 = vmatprep.mubr.bf16.mxu0 0
        %2307 = vmatmul.mubr.bf16.gmra.mrb[0].mxu0 %v2269
        %v2308 = vpop.f32.mrb[0].mxu0
        %v2309 = vadd.f32 0.0, %v2308
        %v2310 = vpop.f32.mrb[0].mxu0
        %v2311 = vpop.f32.mrb[0].mxu0
        %v2312 = vpop.f32.mrb[0].mxu0
        %2313 = vdwg.mxu0
        %2315 = vrot.lane.b32.xlu0 %v2200, 64
        %v2316 = vpop.permute.xlu0 %2315
        %v2318 = vsel %vm1205, %v2200, 0
        %v2321 = vsel %vm1205, %v2316, 0
        %2323 = vmatprep.subr.bf16.mxu0 0
        %2324 = vmatpush1.bf16.xpose.msra.mxu0 %v2321
        %2325 = vmatprep.subr.bf16.mxu0 0
        %2326 = vmatpush1.bf16.xpose.msra.mxu0 0
        %2327 = vmatprep.subr.bf16.mxu0 0
        %2328 = vmatpush1.bf16.xpose.msra.mxu0 0
        %2329 = vmatprep.subr.bf16.mxu0 0
        %2330 = vmatpush1.bf16.xpose.msra.mxu0 0
        %2331 = vmatprep.subr.bf16.mxu0 0
        %2332 = vmatpush1.bf16.xpose.msra.mxu0 0
        %2333 = vmatprep.subr.bf16.mxu0 0
        %2334 = vmatpush1.bf16.xpose.msra.mxu0 0
        %2335 = vmatprep.subr.bf16.mxu0 0
        %2336 = vmatpush1.bf16.xpose.msra.mxu0 0
        %2337 = vmatprep.subr.bf16.mxu0 0
        %2338 = vmatpush1.bf16.xpose.msra.mxu0 0
        %2339 = vmatprep.subr.bf16.mxu0 0
        %2340 = vmatpush1.bf16.xpose.msra.mxu0 0
        %2341 = vmatprep.subr.bf16.mxu0 0
        %2342 = vmatpush1.bf16.xpose.msra.mxu0 0
        %2343 = vmatprep.subr.bf16.mxu0 0
        %2344 = vmatpush1.bf16.xpose.msra.mxu0 0
        %2345 = vmatprep.subr.bf16.mxu0 0
        %2346 = vmatpush1.bf16.xpose.msra.mxu0 0
        %2347 = vmatprep.subr.bf16.mxu0 0
        %2348 = vmatpush1.bf16.xpose.msra.mxu0 0
        %2349 = vmatprep.subr.bf16.mxu0 0
        %2350 = vmatpush1.bf16.xpose.msra.mxu0 0
        %2351 = vmatprep.subr.bf16.mxu0 0
        %2352 = vmatpush1.bf16.xpose.msra.mxu0 0
        %2353 = vmatprep.subr.bf16.mxu0 0
        %2354 = vmatpush1.bf16.xpose.msra.mxu0 0
        %2355 = vmatprep.mubr.bf16.mxu0 0
        %2356 = vmatmul.mubr.bf16.gmra.mrb[0].mxu0 %v2318
        %v2357 = vpop.f32.mrb[0].mxu0
        %v2358 = vadd.f32 0.0, %v2357
        %v2359 = vpop.f32.mrb[0].mxu0
        %v2360 = vpop.f32.mrb[0].mxu0
        %v2361 = vpop.f32.mrb[0].mxu0
        %2362 = vdwg.mxu0
        %2364 = vrot.lane.b32.xlu0 %v2201, 64
        %v2365 = vpop.permute.xlu0 %2364
        %v2367 = vsel %vm1205, %v2201, 0
        %v2370 = vsel %vm1205, %v2365, 0
        %2372 = vmatprep.subr.bf16.mxu0 0
        %2373 = vmatpush1.bf16.xpose.msra.mxu0 %v2370
        %2374 = vmatprep.subr.bf16.mxu0 0
        %2375 = vmatpush1.bf16.xpose.msra.mxu0 0
        %2376 = vmatprep.subr.bf16.mxu0 0
        %2377 = vmatpush1.bf16.xpose.msra.mxu0 0
        %2378 = vmatprep.subr.bf16.mxu0 0
        %2379 = vmatpush1.bf16.xpose.msra.mxu0 0
        %2380 = vmatprep.subr.bf16.mxu0 0
        %2381 = vmatpush1.bf16.xpose.msra.mxu0 0
        %2382 = vmatprep.subr.bf16.mxu0 0
        %2383 = vmatpush1.bf16.xpose.msra.mxu0 0
        %2384 = vmatprep.subr.bf16.mxu0 0
        %2385 = vmatpush1.bf16.xpose.msra.mxu0 0
        %2386 = vmatprep.subr.bf16.mxu0 0
        %2387 = vmatpush1.bf16.xpose.msra.mxu0 0
        %2388 = vmatprep.subr.bf16.mxu0 0
        %2389 = vmatpush1.bf16.xpose.msra.mxu0 0
        %2390 = vmatprep.subr.bf16.mxu0 0
        %2391 = vmatpush1.bf16.xpose.msra.mxu0 0
        %2392 = vmatprep.subr.bf16.mxu0 0
        %2393 = vmatpush1.bf16.xpose.msra.mxu0 0
        %2394 = vmatprep.subr.bf16.mxu0 0
        %2395 = vmatpush1.bf16.xpose.msra.mxu0 0
        %2396 = vmatprep.subr.bf16.mxu0 0
        %2397 = vmatpush1.bf16.xpose.msra.mxu0 0
        %2398 = vmatprep.subr.bf16.mxu0 0
        %2399 = vmatpush1.bf16.xpose.msra.mxu0 0
        %2400 = vmatprep.subr.bf16.mxu0 0
        %2401 = vmatpush1.bf16.xpose.msra.mxu0 0
        %2402 = vmatprep.subr.bf16.mxu0 0
        %2403 = vmatpush1.bf16.xpose.msra.mxu0 0
        %2404 = vmatprep.mubr.bf16.mxu0 0
        %2405 = vmatmul.mubr.bf16.gmra.mrb[0].mxu0 %v2367
        %v2406 = vpop.f32.mrb[0].mxu0
        %v2407 = vadd.f32 0.0, %v2406
        %v2408 = vpop.f32.mrb[0].mxu0
        %v2409 = vpop.f32.mrb[0].mxu0
        %v2410 = vpop.f32.mrb[0].mxu0
        %2411 = vdwg.mxu0
        %v2412 = vmul.f32 %v2260, 0.25
        %v2413 = vmul.f32 %v2309, 0.25
        %v2414 = vmul.f32 %v2358, 0.25
        %v2415 = vmul.f32 %v2407, 0.25
        %v2416 = vsel %vm1403, %v2412, -inf
        %2417 = vmax.xlane.f32.xlu0 %v2416
        %v2418 = vpop.xlane.xlu0 %2417
        %v2419 = vsel %vm1403, %v2413, -inf
        %2420 = vmax.xlane.f32.xlu0 %v2419
        %v2421 = vpop.xlane.xlu0 %2420
        %v2422 = vsel %vm1403, %v2414, -inf
        %2423 = vmax.xlane.f32.xlu0 %v2422
        %v2424 = vpop.xlane.xlu0 %2423
        %v2425 = vsel %vm1403, %v2415, -inf
        %2426 = vmax.xlane.f32.xlu0 %v2425
        %v2427 = vpop.xlane.xlu0 %2426
        %v2428 = vsub.f32 %v2412, %v2418
        %v2429 = vsub.f32 %v2413, %v2421
        %v2430 = vsub.f32 %v2414, %v2424
        %v2431 = vsub.f32 %v2415, %v2427
        %v2432 = vmul.f32 %v2428, 1.442695
        %v2433 = vpow.pop %v2432
        %v2434 = vmul.f32 %v2429, 1.442695
        %v2435 = vpow.pop %v2434
        %v2436 = vmul.f32 %v2430, 1.442695
        %v2437 = vpow.pop %v2436
        %v2438 = vmul.f32 %v2431, 1.442695
        %v2439 = vpow.pop %v2438
        %v2440 = vsel %vm1403, %v2433, 0.0
        %2441 = vadd.xlane.f32.xlu0 %v2440
        %v2442 = vpop.xlane.xlu0 %2441
        %v2443 = vsel %vm1403, %v2435, 0.0
        %2444 = vadd.xlane.f32.xlu0 %v2443
        %v2445 = vpop.xlane.xlu0 %2444
        %v2446 = vsel %vm1403, %v2437, 0.0
        %2447 = vadd.xlane.f32.xlu0 %v2446
        %v2448 = vpop.xlane.xlu0 %2447
        %v2449 = vsel %vm1403, %v2439, 0.0
        %2450 = vadd.xlane.f32.xlu0 %v2449
        %v2451 = vpop.xlane.xlu0 %2450
        %v2452 = vrcp.pop %v2442
        %v2453 = vmul.f32 %v2433, %v2452
        %v2454 = vrcp.pop %v2445
        %v2455 = vmul.f32 %v2435, %v2454
        %v2456 = vrcp.pop %v2448
        %v2457 = vmul.f32 %v2437, %v2456
        %v2458 = vrcp.pop %v2451
        %v2459 = vmul.f32 %v2439, %v2458
        %v2460 = vpack.c.bf16 %v2453, %v2453
        %v2461 = vpack.c.bf16 %v2455, %v2455
        %v2462 = vpack.c.bf16 %v2457, %v2457
        %v2463 = vpack.c.bf16 %v2459, %v2459
        %v2465 = vsel %vm1403, %v2460, 0
        %v2468 = vsel %vm1455, %v2212, 0
        %2470 = vmatprep.subr.bf16.mxu0 0
        %2471 = vmatpush1.bf16.msra.mxu0 %v2468
        %2472 = vmatprep.subr.bf16.mxu0 0
        %2473 = vmatpush1.bf16.msra.mxu0 0
        %2474 = vmatprep.subr.bf16.mxu0 0
        %2475 = vmatpush1.bf16.msra.mxu0 0
        %2476 = vmatprep.subr.bf16.mxu0 0
        %2477 = vmatpush1.bf16.msra.mxu0 0
        %2478 = vmatprep.subr.bf16.mxu0 0
        %2479 = vmatpush1.bf16.msra.mxu0 0
        %2480 = vmatprep.subr.bf16.mxu0 0
        %2481 = vmatpush1.bf16.msra.mxu0 0
        %2482 = vmatprep.subr.bf16.mxu0 0
        %2483 = vmatpush1.bf16.msra.mxu0 0
        %2484 = vmatprep.subr.bf16.mxu0 0
        %2485 = vmatpush1.bf16.msra.mxu0 0
        %2486 = vmatprep.subr.bf16.mxu0 0
        %2487 = vmatpush1.bf16.msra.mxu0 0
        %2488 = vmatprep.subr.bf16.mxu0 0
        %2489 = vmatpush1.bf16.msra.mxu0 0
        %2490 = vmatprep.subr.bf16.mxu0 0
        %2491 = vmatpush1.bf16.msra.mxu0 0
        %2492 = vmatprep.subr.bf16.mxu0 0
        %2493 = vmatpush1.bf16.msra.mxu0 0
        %2494 = vmatprep.subr.bf16.mxu0 0
        %2495 = vmatpush1.bf16.msra.mxu0 0
        %2496 = vmatprep.subr.bf16.mxu0 0
        %2497 = vmatpush1.bf16.msra.mxu0 0
        %2498 = vmatprep.subr.bf16.mxu0 0
        %2499 = vmatpush1.bf16.msra.mxu0 0
        %2500 = vmatprep.subr.bf16.mxu0 0
        %2501 = vmatpush1.bf16.msra.mxu0 0
        %2502 = vmatprep.mubr.bf16.mxu0 0
        %2503 = vmatmul.mubr.bf16.gmra.mrb[0].mxu0 %v2465
        %v2504 = vpop.f32.mrb[0].mxu0
        %v2505 = vadd.f32 0.0, %v2504
        %v2506 = vpop.f32.mrb[0].mxu0
        %v2507 = vpop.f32.mrb[0].mxu0
        %v2508 = vpop.f32.mrb[0].mxu0
        %2509 = vdwg.mxu0
        %v2511 = vsel %vm1403, %v2461, 0
        %v2514 = vsel %vm1455, %v2213, 0
        %2516 = vmatprep.subr.bf16.mxu0 0
        %2517 = vmatpush1.bf16.msra.mxu0 %v2514
        %2518 = vmatprep.subr.bf16.mxu0 0
        %2519 = vmatpush1.bf16.msra.mxu0 0
        %2520 = vmatprep.subr.bf16.mxu0 0
        %2521 = vmatpush1.bf16.msra.mxu0 0
        %2522 = vmatprep.subr.bf16.mxu0 0
        %2523 = vmatpush1.bf16.msra.mxu0 0
        %2524 = vmatprep.subr.bf16.mxu0 0
        %2525 = vmatpush1.bf16.msra.mxu0 0
        %2526 = vmatprep.subr.bf16.mxu0 0
        %2527 = vmatpush1.bf16.msra.mxu0 0
        %2528 = vmatprep.subr.bf16.mxu0 0
        %2529 = vmatpush1.bf16.msra.mxu0 0
        %2530 = vmatprep.subr.bf16.mxu0 0
        %2531 = vmatpush1.bf16.msra.mxu0 0
        %2532 = vmatprep.subr.bf16.mxu0 0
        %2533 = vmatpush1.bf16.msra.mxu0 0
        %2534 = vmatprep.subr.bf16.mxu0 0
        %2535 = vmatpush1.bf16.msra.mxu0 0
        %2536 = vmatprep.subr.bf16.mxu0 0
        %2537 = vmatpush1.bf16.msra.mxu0 0
        %2538 = vmatprep.subr.bf16.mxu0 0
        %2539 = vmatpush1.bf16.msra.mxu0 0
        %2540 = vmatprep.subr.bf16.mxu0 0
        %2541 = vmatpush1.bf16.msra.mxu0 0
        %2542 = vmatprep.subr.bf16.mxu0 0
        %2543 = vmatpush1.bf16.msra.mxu0 0
        %2544 = vmatprep.subr.bf16.mxu0 0
        %2545 = vmatpush1.bf16.msra.mxu0 0
        %2546 = vmatprep.subr.bf16.mxu0 0
        %2547 = vmatpush1.bf16.msra.mxu0 0
        %2548 = vmatprep.mubr.bf16.mxu0 0
        %2549 = vmatmul.mubr.bf16.gmra.mrb[0].mxu0 %v2511
        %v2550 = vpop.f32.mrb[0].mxu0
        %v2551 = vadd.f32 0.0, %v2550
        %v2552 = vpop.f32.mrb[0].mxu0
        %v2553 = vpop.f32.mrb[0].mxu0
        %v2554 = vpop.f32.mrb[0].mxu0
        %2555 = vdwg.mxu0
        %v2557 = vsel %vm1403, %v2462, 0
        %v2560 = vsel %vm1455, %v2214, 0
        %2562 = vmatprep.subr.bf16.mxu0 0
        %2563 = vmatpush1.bf16.msra.mxu0 %v2560
        %2564 = vmatprep.subr.bf16.mxu0 0
        %2565 = vmatpush1.bf16.msra.mxu0 0
        %2566 = vmatprep.subr.bf16.mxu0 0
        %2567 = vmatpush1.bf16.msra.mxu0 0
        %2568 = vmatprep.subr.bf16.mxu0 0
        %2569 = vmatpush1.bf16.msra.mxu0 0
        %2570 = vmatprep.subr.bf16.mxu0 0
        %2571 = vmatpush1.bf16.msra.mxu0 0
        %2572 = vmatprep.subr.bf16.mxu0 0
        %2573 = vmatpush1.bf16.msra.mxu0 0
        %2574 = vmatprep.subr.bf16.mxu0 0
        %2575 = vmatpush1.bf16.msra.mxu0 0
        %2576 = vmatprep.subr.bf16.mxu0 0
        %2577 = vmatpush1.bf16.msra.mxu0 0
        %2578 = vmatprep.subr.bf16.mxu0 0
        %2579 = vmatpush1.bf16.msra.mxu0 0
        %2580 = vmatprep.subr.bf16.mxu0 0
        %2581 = vmatpush1.bf16.msra.mxu0 0
        %2582 = vmatprep.subr.bf16.mxu0 0
        %2583 = vmatpush1.bf16.msra.mxu0 0
        %2584 = vmatprep.subr.bf16.mxu0 0
        %2585 = vmatpush1.bf16.msra.mxu0 0
        %2586 = vmatprep.subr.bf16.mxu0 0
        %2587 = vmatpush1.bf16.msra.mxu0 0
        %2588 = vmatprep.subr.bf16.mxu0 0
        %2589 = vmatpush1.bf16.msra.mxu0 0
        %2590 = vmatprep.subr.bf16.mxu0 0
        %2591 = vmatpush1.bf16.msra.mxu0 0
        %2592 = vmatprep.subr.bf16.mxu0 0
        %2593 = vmatpush1.bf16.msra.mxu0 0
        %2594 = vmatprep.mubr.bf16.mxu0 0
        %2595 = vmatmul.mubr.bf16.gmra.mrb[0].mxu0 %v2557
        %v2596 = vpop.f32.mrb[0].mxu0
        %v2597 = vadd.f32 0.0, %v2596
        %v2598 = vpop.f32.mrb[0].mxu0
        %v2599 = vpop.f32.mrb[0].mxu0
        %v2600 = vpop.f32.mrb[0].mxu0
        %2601 = vdwg.mxu0
        %v2603 = vsel %vm1403, %v2463, 0
        %v2606 = vsel %vm1455, %v2215, 0
        %2608 = vmatprep.subr.bf16.mxu0 0
        %2609 = vmatpush1.bf16.msra.mxu0 %v2606
        %2610 = vmatprep.subr.bf16.mxu0 0
        %2611 = vmatpush1.bf16.msra.mxu0 0
        %2612 = vmatprep.subr.bf16.mxu0 0
        %2613 = vmatpush1.bf16.msra.mxu0 0
        %2614 = vmatprep.subr.bf16.mxu0 0
        %2615 = vmatpush1.bf16.msra.mxu0 0
        %2616 = vmatprep.subr.bf16.mxu0 0
        %2617 = vmatpush1.bf16.msra.mxu0 0
        %2618 = vmatprep.subr.bf16.mxu0 0
        %2619 = vmatpush1.bf16.msra.mxu0 0
        %2620 = vmatprep.subr.bf16.mxu0 0
        %2621 = vmatpush1.bf16.msra.mxu0 0
        %2622 = vmatprep.subr.bf16.mxu0 0
        %2623 = vmatpush1.bf16.msra.mxu0 0
        %2624 = vmatprep.subr.bf16.mxu0 0
        %2625 = vmatpush1.bf16.msra.mxu0 0
        %2626 = vmatprep.subr.bf16.mxu0 0
        %2627 = vmatpush1.bf16.msra.mxu0 0
        %2628 = vmatprep.subr.bf16.mxu0 0
        %2629 = vmatpush1.bf16.msra.mxu0 0
        %2630 = vmatprep.subr.bf16.mxu0 0
        %2631 = vmatpush1.bf16.msra.mxu0 0
        %2632 = vmatprep.subr.bf16.mxu0 0
        %2633 = vmatpush1.bf16.msra.mxu0 0
        %2634 = vmatprep.subr.bf16.mxu0 0
        %2635 = vmatpush1.bf16.msra.mxu0 0
        %2636 = vmatprep.subr.bf16.mxu0 0
        %2637 = vmatpush1.bf16.msra.mxu0 0
        %2638 = vmatprep.subr.bf16.mxu0 0
        %2639 = vmatpush1.bf16.msra.mxu0 0
        %2640 = vmatprep.mubr.bf16.mxu0 0
        %2641 = vmatmul.mubr.bf16.gmra.mrb[0].mxu0 %v2603
        %v2642 = vpop.f32.mrb[0].mxu0
        %v2643 = vadd.f32 0.0, %v2642
        %v2644 = vpop.f32.mrb[0].mxu0
        %v2645 = vpop.f32.mrb[0].mxu0
        %v2646 = vpop.f32.mrb[0].mxu0
        %2647 = vdwg.mxu0
        %2649 = vrot.lane.b32.xlu0 %v2551, 16
        %v2650 = vpop.permute.xlu0 %2649
        %2653 = vrot.lane.b32.xlu0 %v2597, 32
        %v2654 = vpop.permute.xlu0 %2653
        %2657 = vrot.lane.b32.xlu0 %v2643, 48
        %v2658 = vpop.permute.xlu0 %2657
        %v2660 = vsel %vm1205, %v2505, %v2650
        %v2661 = vsel %vm959, %v2660, %v2654
        %v2662 = vsel %vm1651, %v2661, %v2658
        %v2663 = vpack.c.bf16 %v2662, %v2662
        %s2664 = scalar_lea.vmem %s10, 32
        %v2665 = vld [vmem:[%s2664] sm:$0xf]
        %v2666 = vld [vmem:[%s2664 + $0x4] sm:$0xf]
        %v2667 = vld [vmem:[%s2664 + $0x8] sm:$0xf]
        %v2668 = vld [vmem:[%s2664 + $0xc] sm:$0xf]
        %v2669 = vld [vmem:[%s2664 + $0x10] sm:$0xf]
        %v2670 = vld [vmem:[%s2664 + $0x14] sm:$0xf]
        %v2671 = vld [vmem:[%s2664 + $0x18] sm:$0xf]
        %v2672 = vld [vmem:[%s2664 + $0x1c] sm:$0xf]
        %v2681 = vunpack.c.l.b16 %v2665
        %v2682 = vunpack.c.l.b16 %v2666
        %v2683 = vunpack.c.l.b16 %v2667
        %v2684 = vunpack.c.l.b16 %v2668
        %v2685 = vunpack.c.l.b16 %v2669
        %v2686 = vunpack.c.l.b16 %v2670
        %v2687 = vunpack.c.l.b16 %v2671
        %v2688 = vunpack.c.l.b16 %v2672
        %v2689 = vpack.c.b16 %v2682, %v2681
        %v2690 = vpack.c.b16 %v2684, %v2683
        %v2691 = vpack.c.b16 %v2686, %v2685
        %v2692 = vpack.c.b16 %v2688, %v2687
        %v2698 = vsel %vm1054, %v2663, 0
        %2700 = vmatprep.subr.bf16.mxu0 0
        %2701 = vmatpush1.bf16.msra.mxu0 %v2689
        %2702 = vmatprep.subr.bf16.mxu0 0
        %2703 = vmatpush1.bf16.msra.mxu0 %v2690
        %2704 = vmatprep.subr.bf16.mxu0 0
        %2705 = vmatpush1.bf16.msra.mxu0 %v2691
        %2706 = vmatprep.subr.bf16.mxu0 0
        %2707 = vmatpush1.bf16.msra.mxu0 %v2692
        %2708 = vmatprep.subr.bf16.mxu0 0
        %2709 = vmatpush1.bf16.msra.mxu0 0
        %2710 = vmatprep.subr.bf16.mxu0 0
        %2711 = vmatpush1.bf16.msra.mxu0 0
        %2712 = vmatprep.subr.bf16.mxu0 0
        %2713 = vmatpush1.bf16.msra.mxu0 0
        %2714 = vmatprep.subr.bf16.mxu0 0
        %2715 = vmatpush1.bf16.msra.mxu0 0
        %2716 = vmatprep.subr.bf16.mxu0 0
        %2717 = vmatpush1.bf16.msra.mxu0 0
        %2718 = vmatprep.subr.bf16.mxu0 0
        %2719 = vmatpush1.bf16.msra.mxu0 0
        %2720 = vmatprep.subr.bf16.mxu0 0
        %2721 = vmatpush1.bf16.msra.mxu0 0
        %2722 = vmatprep.subr.bf16.mxu0 0
        %2723 = vmatpush1.bf16.msra.mxu0 0
        %2724 = vmatprep.subr.bf16.mxu0 0
        %2725 = vmatpush1.bf16.msra.mxu0 0
        %2726 = vmatprep.subr.bf16.mxu0 0
        %2727 = vmatpush1.bf16.msra.mxu0 0
        %2728 = vmatprep.subr.bf16.mxu0 0
        %2729 = vmatpush1.bf16.msra.mxu0 0
        %2730 = vmatprep.subr.bf16.mxu0 0
        %2731 = vmatpush1.bf16.msra.mxu0 0
        %2732 = vmatprep.mubr.bf16.mxu0 0
        %2733 = vmatmul.mubr.bf16.gmra.mrb[0].mxu0 %v2698
        %v2734 = vpop.f32.mrb[0].mxu0
        %v2735 = vadd.f32 0.0, %v2734
        %v2736 = vpop.f32.mrb[0].mxu0
        %v2737 = vpop.f32.mrb[0].mxu0
        %v2738 = vpop.f32.mrb[0].mxu0
        %2739 = vdwg.mxu0
        %v2740 = vadd.f32 %v2064, %v2735
        %s2741 = scalar_lea.vmem %s11, 1
        %v2742 = vld [vmem:[%s2741] sm:$0x1]
        %v2743 = vunpack.c.l.bf16 %v2742
        %v2744 = vlaneseq
        %v2745 = vshrl.u32 %v2744, 7
        %v2746 = vsub.s32 0, %v2745
        %v2747 = vrot.slane %v2743, %v2746
        %v2748 = vadd.f32 %v2740, %v2747
        %s2749 = scalar_lea.vmem %s12, 1
        %v2750 = vld [vmem:[%s2749] sm:$0x1]
        %s2751 = scalar_lea.vmem %s13, 1
        %v2752 = vld [vmem:[%s2751] sm:$0x1]
        %v2753 = vsel %vm1054, %v2748, 0.0
        %2754 = vadd.xlane.f32.xlu0 %v2753
        %v2755 = vpop.xlane.xlu0 %2754
        %v2756 = vmul.f32 %v2755, %v1058
        %v2757 = vsub.f32 %v2748, %v2756
        %v2758 = vmul.f32 %v2757, %v2757
        %v2759 = vsel %vm1054, %v2758, 0.0
        %2760 = vadd.xlane.f32.xlu0 %v2759
        %v2761 = vpop.xlane.xlu0 %2760
        %v2762 = vmul.f32 %v2761, %v1058
        %v2763 = vadd.f32 %v2762, 1e-05
        %v2764 = vrsqrt.pop %v2763
        %v2765 = vmul.f32 %v2757, %v2764
        %v2766 = vunpack.c.l.bf16 %v2750
        %v2767 = vlaneseq
        %v2768 = vshrl.u32 %v2767, 7
        %v2769 = vsub.s32 0, %v2768
        %v2770 = vrot.slane %v2766, %v2769
        %v2771 = vmul.f32 %v2765, %v2770
        %v2772 = vunpack.c.l.bf16 %v2752
        %v2773 = vlaneseq
        %v2774 = vshrl.u32 %v2773, 7
        %v2775 = vsub.s32 0, %v2774
        %v2776 = vrot.slane %v2772, %v2775
        %v2777 = vadd.f32 %v2771, %v2776
        %v2778 = vpack.c.bf16 %v2777, %v2777
        %s2779 = scalar_lea.vmem %s14, 64
        %v2780 = vld [vmem:[%s2779] sm:$0xff]
        %v2781 = vld [vmem:[%s2779 + $0x8] sm:$0xff]
        %v2782 = vld [vmem:[%s2779 + $0x10] sm:$0xff]
        %v2783 = vld [vmem:[%s2779 + $0x18] sm:$0xff]
        %v2784 = vld [vmem:[%s2779 + $0x20] sm:$0xff]
        %v2785 = vld [vmem:[%s2779 + $0x28] sm:$0xff]
        %v2786 = vld [vmem:[%s2779 + $0x30] sm:$0xff]
        %v2787 = vld [vmem:[%s2779 + $0x38] sm:$0xff]
        %s2788 = scalar_lea.vmem %s15, 2
        %v2789 = vld [vmem:[%s2788] sm:$0x3]
        %v2790 = vunpack.c.l.bf16 %v2789
        %v2792 = vlaneseq
        %v2793 = vshrl.u32 %v2792, 7
        %v2794 = vsub.s32 0, %v2793
        %v2795 = vrot.slane %v2790, %v2794
        %v2796 = vlaneseq
        %v2797 = vshrl.u32 %v2796, 7
        %v2798 = vsub.s32 2, %v2797
        %v2799 = vrot.slane %v2790, %v2798
        %v2802 = vlaneseq
        %v2803 = vshrl.u32 %v2802, 7
        %v2804 = vsub.s32 0, %v2803
        %v2805 = vrot.slane %v2795, %v2804
        %v2806 = vlaneseq
        %v2807 = vshrl.u32 %v2806, 7
        %v2808 = vsub.s32 0, %v2807
        %v2809 = vrot.slane %v2799, %v2808
        %v2818 = vunpack.c.l.b16 %v2780
        %v2819 = vunpack.c.h.b16 %v2780
        %v2820 = vunpack.c.l.b16 %v2781
        %v2821 = vunpack.c.h.b16 %v2781
        %v2822 = vunpack.c.l.b16 %v2782
        %v2823 = vunpack.c.h.b16 %v2782
        %v2824 = vunpack.c.l.b16 %v2783
        %v2825 = vunpack.c.h.b16 %v2783
        %v2826 = vunpack.c.l.b16 %v2784
        %v2827 = vunpack.c.h.b16 %v2784
        %v2828 = vunpack.c.l.b16 %v2785
        %v2829 = vunpack.c.h.b16 %v2785
        %v2830 = vunpack.c.l.b16 %v2786
        %v2831 = vunpack.c.h.b16 %v2786
        %v2832 = vunpack.c.l.b16 %v2787
        %v2833 = vunpack.c.h.b16 %v2787
        %v2834 = vpack.c.b16 %v2820, %v2818
        %v2835 = vpack.c.b16 %v2821, %v2819
        %v2836 = vpack.c.b16 %v2824, %v2822
        %v2837 = vpack.c.b16 %v2825, %v2823
        %v2838 = vpack.c.b16 %v2828, %v2826
        %v2839 = vpack.c.b16 %v2829, %v2827
        %v2840 = vpack.c.b16 %v2832, %v2830
        %v2841 = vpack.c.b16 %v2833, %v2831
        %v2851 = vsel %vm1054, %v2778, 0
        %2853 = vmatprep.subr.bf16.mxu0 %v2835
        %2854 = vmatpush1.bf16.msra.mxu0 %v2834
        %2855 = vmatprep.subr.bf16.mxu0 %v2837
        %2856 = vmatpush1.bf16.msra.mxu0 %v2836
        %2857 = vmatprep.subr.bf16.mxu0 %v2839
        %2858 = vmatpush1.bf16.msra.mxu0 %v2838
        %2859 = vmatprep.subr.bf16.mxu0 %v2841
        %2860 = vmatpush1.bf16.msra.mxu0 %v2840
        %2861 = vmatprep.subr.bf16.mxu0 0
        %2862 = vmatpush1.bf16.msra.mxu0 0
        %2863 = vmatprep.subr.bf16.mxu0 0
        %2864 = vmatpush1.bf16.msra.mxu0 0
        %2865 = vmatprep.subr.bf16.mxu0 0
        %2866 = vmatpush1.bf16.msra.mxu0 0
        %2867 = vmatprep.subr.bf16.mxu0 0
        %2868 = vmatpush1.bf16.msra.mxu0 0
        %2869 = vmatprep.subr.bf16.mxu0 0
        %2870 = vmatpush1.bf16.msra.mxu0 0
        %2871 = vmatprep.subr.bf16.mxu0 0
        %2872 = vmatpush1.bf16.msra.mxu0 0
        %2873 = vmatprep.subr.bf16.mxu0 0
        %2874 = vmatpush1.bf16.msra.mxu0 0
        %2875 = vmatprep.subr.bf16.mxu0 0
        %2876 = vmatpush1.bf16.msra.mxu0 0
        %2877 = vmatprep.subr.bf16.mxu0 0
        %2878 = vmatpush1.bf16.msra.mxu0 0
        %2879 = vmatprep.subr.bf16.mxu0 0
        %2880 = vmatpush1.bf16.msra.mxu0 0
        %2881 = vmatprep.subr.bf16.mxu0 0
        %2882 = vmatpush1.bf16.msra.mxu0 0
        %2883 = vmatprep.subr.bf16.mxu0 0
        %2884 = vmatpush1.bf16.msra.mxu0 0
        %2885 = vmatprep.mubr.bf16.mxu0 0
        %2886 = vmatmul.mubr.bf16.gmra.mrb[0].mxu0 %v2851
        %v2887 = vpop.f32.mrb[0].mxu0
        %v2888 = vadd.f32 %v2805, %v2887
        %v2889 = vpop.f32.mrb[0].mxu0
        %v2890 = vadd.f32 %v2809, %v2889
        %v2891 = vpop.f32.mrb[0].mxu0
        %v2892 = vpop.f32.mrb[0].mxu0
        %2893 = vdwg.mxu0
        %v2894 = vmul.f32 %v2888, 0.5
        %v2895 = vmul.f32 %v2890, 0.5
        %v2896 = vmul.f32 %v2888, 0.70710677
        %v2897 = vmul.f32 %v2890, 0.70710677
        %v2898 = verf.f32.pop %v2896
        %v2899 = verf.f32.pop %v2897
        %v2900 = vadd.f32 %v2898, 1.0
        %v2901 = vadd.f32 %v2899, 1.0
        %v2902 = vmul.f32 %v2894, %v2900
        %v2903 = vmul.f32 %v2895, %v2901
        %v2904 = vpack.c.bf16 %v2902, %v2902
        %v2905 = vpack.c.bf16 %v2903, %v2903
        %s2906 = scalar_lea.vmem %s16, 128
        %v2907 = vld [vmem:[%s2906] sm:$0xf]
        %v2908 = vld [vmem:[%s2906 + $0x4] sm:$0xf]
        %v2909 = vld [vmem:[%s2906 + $0x8] sm:$0xf]
        %v2910 = vld [vmem:[%s2906 + $0xc] sm:$0xf]
        %v2911 = vld [vmem:[%s2906 + $0x10] sm:$0xf]
        %v2912 = vld [vmem:[%s2906 + $0x14] sm:$0xf]
        %v2913 = vld [vmem:[%s2906 + $0x18] sm:$0xf]
        %v2914 = vld [vmem:[%s2906 + $0x1c] sm:$0xf]
        %v2915 = vld [vmem:[%s2906 + $0x20] sm:$0xf]
        %v2916 = vld [vmem:[%s2906 + $0x24] sm:$0xf]
        %v2917 = vld [vmem:[%s2906 + $0x28] sm:$0xf]
        %v2918 = vld [vmem:[%s2906 + $0x2c] sm:$0xf]
        %v2919 = vld [vmem:[%s2906 + $0x30] sm:$0xf]
        %v2920 = vld [vmem:[%s2906 + $0x34] sm:$0xf]
        %v2921 = vld [vmem:[%s2906 + $0x38] sm:$0xf]
        %v2922 = vld [vmem:[%s2906 + $0x3c] sm:$0xf]
        %v2923 = vld [vmem:[%s2906 + $0x40] sm:$0xf]
        %v2924 = vld [vmem:[%s2906 + $0x44] sm:$0xf]
        %v2925 = vld [vmem:[%s2906 + $0x48] sm:$0xf]
        %v2926 = vld [vmem:[%s2906 + $0x4c] sm:$0xf]
        %v2927 = vld [vmem:[%s2906 + $0x50] sm:$0xf]
        %v2928 = vld [vmem:[%s2906 + $0x54] sm:$0xf]
        %v2929 = vld [vmem:[%s2906 + $0x58] sm:$0xf]
        %v2930 = vld [vmem:[%s2906 + $0x5c] sm:$0xf]
        %v2931 = vld [vmem:[%s2906 + $0x60] sm:$0xf]
        %v2932 = vld [vmem:[%s2906 + $0x64] sm:$0xf]
        %v2933 = vld [vmem:[%s2906 + $0x68] sm:$0xf]
        %v2934 = vld [vmem:[%s2906 + $0x6c] sm:$0xf]
        %v2935 = vld [vmem:[%s2906 + $0x70] sm:$0xf]
        %v2936 = vld [vmem:[%s2906 + $0x74] sm:$0xf]
        %v2937 = vld [vmem:[%s2906 + $0x78] sm:$0xf]
        %v2938 = vld [vmem:[%s2906 + $0x7c] sm:$0xf]
        %s2939 = scalar_lea.vmem %s17, 1
        %v2940 = vld [vmem:[%s2939] sm:$0x1]
        %v2941 = vunpack.c.l.bf16 %v2940
        %v2942 = vlaneseq
        %v2943 = vshrl.u32 %v2942, 7
        %v2944 = vsub.s32 0, %v2943
        %v2945 = vrot.slane %v2941, %v2944
        %v2978 = vunpack.c.l.b16 %v2907
        %v2979 = vunpack.c.l.b16 %v2908
        %v2980 = vunpack.c.l.b16 %v2909
        %v2981 = vunpack.c.l.b16 %v2910
        %v2982 = vunpack.c.l.b16 %v2911
        %v2983 = vunpack.c.l.b16 %v2912
        %v2984 = vunpack.c.l.b16 %v2913
        %v2985 = vunpack.c.l.b16 %v2914
        %v2986 = vunpack.c.l.b16 %v2915
        %v2987 = vunpack.c.l.b16 %v2916
        %v2988 = vunpack.c.l.b16 %v2917
        %v2989 = vunpack.c.l.b16 %v2918
        %v2990 = vunpack.c.l.b16 %v2919
        %v2991 = vunpack.c.l.b16 %v2920
        %v2992 = vunpack.c.l.b16 %v2921
        %v2993 = vunpack.c.l.b16 %v2922
        %v2994 = vunpack.c.l.b16 %v2923
        %v2995 = vunpack.c.l.b16 %v2924
        %v2996 = vunpack.c.l.b16 %v2925
        %v2997 = vunpack.c.l.b16 %v2926
        %v2998 = vunpack.c.l.b16 %v2927
        %v2999 = vunpack.c.l.b16 %v2928
        %v3000 = vunpack.c.l.b16 %v2929
        %v3001 = vunpack.c.l.b16 %v2930
        %v3002 = vunpack.c.l.b16 %v2931
        %v3003 = vunpack.c.l.b16 %v2932
        %v3004 = vunpack.c.l.b16 %v2933
        %v3005 = vunpack.c.l.b16 %v2934
        %v3006 = vunpack.c.l.b16 %v2935
        %v3007 = vunpack.c.l.b16 %v2936
        %v3008 = vunpack.c.l.b16 %v2937
        %v3009 = vunpack.c.l.b16 %v2938
        %v3010 = vpack.c.b16 %v2979, %v2978
        %v3011 = vpack.c.b16 %v2981, %v2980
        %v3012 = vpack.c.b16 %v2983, %v2982
        %v3013 = vpack.c.b16 %v2985, %v2984
        %v3014 = vpack.c.b16 %v2987, %v2986
        %v3015 = vpack.c.b16 %v2989, %v2988
        %v3016 = vpack.c.b16 %v2991, %v2990
        %v3017 = vpack.c.b16 %v2993, %v2992
        %v3018 = vpack.c.b16 %v2995, %v2994
        %v3019 = vpack.c.b16 %v2997, %v2996
        %v3020 = vpack.c.b16 %v2999, %v2998
        %v3021 = vpack.c.b16 %v3001, %v3000
        %v3022 = vpack.c.b16 %v3003, %v3002
        %v3023 = vpack.c.b16 %v3005, %v3004
        %v3024 = vpack.c.b16 %v3007, %v3006
        %v3025 = vpack.c.b16 %v3009, %v3008
        %3042 = vmatprep.subr.bf16.mxu0 0
        %3043 = vmatpush1.bf16.msra.mxu0 %v3010
        %3044 = vmatprep.subr.bf16.mxu0 0
        %3045 = vmatpush1.bf16.msra.mxu0 %v3011
        %3046 = vmatprep.subr.bf16.mxu0 0
        %3047 = vmatpush1.bf16.msra.mxu0 %v3012
        %3048 = vmatprep.subr.bf16.mxu0 0
        %3049 = vmatpush1.bf16.msra.mxu0 %v3013
        %3050 = vmatprep.subr.bf16.mxu0 0
        %3051 = vmatpush1.bf16.msra.mxu0 %v3014
        %3052 = vmatprep.subr.bf16.mxu0 0
        %3053 = vmatpush1.bf16.msra.mxu0 %v3015
        %3054 = vmatprep.subr.bf16.mxu0 0
        %3055 = vmatpush1.bf16.msra.mxu0 %v3016
        %3056 = vmatprep.subr.bf16.mxu0 0
        %3057 = vmatpush1.bf16.msra.mxu0 %v3017
        %3058 = vmatprep.subr.bf16.mxu0 0
        %3059 = vmatpush1.bf16.msra.mxu0 %v3018
        %3060 = vmatprep.subr.bf16.mxu0 0
        %3061 = vmatpush1.bf16.msra.mxu0 %v3019
        %3062 = vmatprep.subr.bf16.mxu0 0
        %3063 = vmatpush1.bf16.msra.mxu0 %v3020
        %3064 = vmatprep.subr.bf16.mxu0 0
        %3065 = vmatpush1.bf16.msra.mxu0 %v3021
        %3066 = vmatprep.subr.bf16.mxu0 0
        %3067 = vmatpush1.bf16.msra.mxu0 %v3022
        %3068 = vmatprep.subr.bf16.mxu0 0
        %3069 = vmatpush1.bf16.msra.mxu0 %v3023
        %3070 = vmatprep.subr.bf16.mxu0 0
        %3071 = vmatpush1.bf16.msra.mxu0 %v3024
        %3072 = vmatprep.subr.bf16.mxu0 0
        %3073 = vmatpush1.bf16.msra.mxu0 %v3025
        %3074 = vmatprep.mubr.bf16.mxu0 %v2905
        %3075 = vmatmul.mubr.bf16.gmra.mrb[0].mxu0 %v2904
        %v3076 = vpop.f32.mrb[0].mxu0
        %v3077 = vadd.f32 %v2945, %v3076
        %v3078 = vpop.f32.mrb[0].mxu0
        %v3079 = vpop.f32.mrb[0].mxu0
        %v3080 = vpop.f32.mrb[0].mxu0
        %3081 = vdwg.mxu0
        %v3082 = vadd.f32 %v2748, %v3077
        %v3083 = vld [vmem:[%s18] sm:$0x1]
        %v3084 = vld [vmem:[%s19] sm:$0x1]
        %v3085 = vsel %vm1054, %v3082, 0.0
        %3086 = vadd.xlane.f32.xlu0 %v3085
        %v3087 = vpop.xlane.xlu0 %3086
        %v3088 = vmul.f32 %v3087, %v1058
        %v3089 = vsub.f32 %v3082, %v3088
        %v3090 = vmul.f32 %v3089, %v3089
        %v3091 = vsel %vm1054, %v3090, 0.0
        %3092 = vadd.xlane.f32.xlu0 %v3091
        %v3093 = vpop.xlane.xlu0 %3092
        %v3094 = vmul.f32 %v3093, %v1058
        %v3095 = vadd.f32 %v3094, 1e-05
        %v3096 = vrsqrt.pop %v3095
        %v3097 = vmul.f32 %v3089, %v3096
        %v3098 = vunpack.c.l.bf16 %v3083
        %v3099 = vlaneseq
        %v3100 = vshrl.u32 %v3099, 7
        %v3101 = vsub.s32 0, %v3100
        %v3102 = vrot.slane %v3098, %v3101
        %v3103 = vmul.f32 %v3097, %v3102
        %v3104 = vunpack.c.l.bf16 %v3084
        %v3105 = vlaneseq
        %v3106 = vshrl.u32 %v3105, 7
        %v3107 = vsub.s32 0, %v3106
        %v3108 = vrot.slane %v3104, %v3107
        %v3109 = vadd.f32 %v3103, %v3108
        %v3110 = vpack.c.bf16 %v3109, %v3109
        %v3111 = vld [vmem:[%s20] sm:$0xf]
        %v3112 = vld [vmem:[%s20 + $0x4] sm:$0xf]
        %v3113 = vld [vmem:[%s20 + $0x8] sm:$0xf]
        %v3114 = vld [vmem:[%s20 + $0xc] sm:$0xf]
        %v3115 = vld [vmem:[%s20 + $0x10] sm:$0xf]
        %v3116 = vld [vmem:[%s20 + $0x14] sm:$0xf]
        %v3117 = vld [vmem:[%s20 + $0x18] sm:$0xf]
        %v3118 = vld [vmem:[%s20 + $0x1c] sm:$0xf]
        %v3119 = vld [vmem:[%s21] sm:$0x1]
        %v3120 = vunpack.c.l.bf16 %v3119
        %v3121 = vlaneseq
        %v3122 = vshrl.u32 %v3121, 7
        %v3123 = vsub.s32 0, %v3122
        %v3124 = vrot.slane %v3120, %v3123
        %v3133 = vunpack.c.l.b16 %v3111
        %v3134 = vunpack.c.l.b16 %v3112
        %v3135 = vunpack.c.l.b16 %v3113
        %v3136 = vunpack.c.l.b16 %v3114
        %v3137 = vunpack.c.l.b16 %v3115
        %v3138 = vunpack.c.l.b16 %v3116
        %v3139 = vunpack.c.l.b16 %v3117
        %v3140 = vunpack.c.l.b16 %v3118
        %v3141 = vpack.c.b16 %v3134, %v3133
        %v3142 = vpack.c.b16 %v3136, %v3135
        %v3143 = vpack.c.b16 %v3138, %v3137
        %v3144 = vpack.c.b16 %v3140, %v3139
        %v3150 = vsel %vm1054, %v3110, 0
        %3152 = vmatprep.subr.bf16.mxu0 0
        %3153 = vmatpush1.bf16.msra.mxu0 %v3141
        %3154 = vmatprep.subr.bf16.mxu0 0
        %3155 = vmatpush1.bf16.msra.mxu0 %v3142
        %3156 = vmatprep.subr.bf16.mxu0 0
        %3157 = vmatpush1.bf16.msra.mxu0 %v3143
        %3158 = vmatprep.subr.bf16.mxu0 0
        %3159 = vmatpush1.bf16.msra.mxu0 %v3144
        %3160 = vmatprep.subr.bf16.mxu0 0
        %3161 = vmatpush1.bf16.msra.mxu0 0
        %3162 = vmatprep.subr.bf16.mxu0 0
        %3163 = vmatpush1.bf16.msra.mxu0 0
        %3164 = vmatprep.subr.bf16.mxu0 0
        %3165 = vmatpush1.bf16.msra.mxu0 0
        %3166 = vmatprep.subr.bf16.mxu0 0
        %3167 = vmatpush1.bf16.msra.mxu0 0
        %3168 = vmatprep.subr.bf16.mxu0 0
        %3169 = vmatpush1.bf16.msra.mxu0 0
        %3170 = vmatprep.subr.bf16.mxu0 0
        %3171 = vmatpush1.bf16.msra.mxu0 0
        %3172 = vmatprep.subr.bf16.mxu0 0
        %3173 = vmatpush1.bf16.msra.mxu0 0
        %3174 = vmatprep.subr.bf16.mxu0 0
        %3175 = vmatpush1.bf16.msra.mxu0 0
        %3176 = vmatprep.subr.bf16.mxu0 0
        %3177 = vmatpush1.bf16.msra.mxu0 0
        %3178 = vmatprep.subr.bf16.mxu0 0
        %3179 = vmatpush1.bf16.msra.mxu0 0
        %3180 = vmatprep.subr.bf16.mxu0 0
        %3181 = vmatpush1.bf16.msra.mxu0 0
        %3182 = vmatprep.subr.bf16.mxu0 0
        %3183 = vmatpush1.bf16.msra.mxu0 0
        %3184 = vmatprep.mubr.bf16.mxu0 0
        %3185 = vmatmul.mubr.bf16.gmra.mrb[0].mxu0 %v3150
        %v3186 = vpop.f32.mrb[0].mxu0
        %v3187 = vadd.f32 %v3124, %v3186
        %v3188 = vpop.f32.mrb[0].mxu0
        %v3189 = vpop.f32.mrb[0].mxu0
        %v3190 = vpop.f32.mrb[0].mxu0
        %3191 = vdwg.mxu0
        %v3192 = vpack.c.bf16 %v3187, %v3187
        %v3193 = vld [vmem:[%s22] sm:$0xf]
        %v3194 = vld [vmem:[%s22 + $0x4] sm:$0xf]
        %v3195 = vld [vmem:[%s22 + $0x8] sm:$0xf]
        %v3196 = vld [vmem:[%s22 + $0xc] sm:$0xf]
        %v3197 = vld [vmem:[%s23] sm:$0x1]
        %v3198 = vunpack.c.l.bf16 %v3197
        %v3199 = vlaneseq
        %v3200 = vshrl.u32 %v3199, 7
        %v3201 = vsub.s32 0, %v3200
        %v3202 = vrot.slane %v3198, %v3201
        %v3207 = vunpack.c.l.b16 %v3193
        %v3208 = vunpack.c.l.b16 %v3194
        %v3209 = vunpack.c.l.b16 %v3195
        %v3210 = vunpack.c.l.b16 %v3196
        %v3211 = vpack.c.b16 %v3208, %v3207
        %v3212 = vpack.c.b16 %v3210, %v3209
        %v3216 = vsel %vm959, %v3192, 0
        %3218 = vmatprep.subr.bf16.mxu0 0
        %3219 = vmatpush1.bf16.msra.mxu0 %v3211
        %3220 = vmatprep.subr.bf16.mxu0 0
        %3221 = vmatpush1.bf16.msra.mxu0 %v3212
        %3222 = vmatprep.subr.bf16.mxu0 0
        %3223 = vmatpush1.bf16.msra.mxu0 0
        %3224 = vmatprep.subr.bf16.mxu0 0
        %3225 = vmatpush1.bf16.msra.mxu0 0
        %3226 = vmatprep.subr.bf16.mxu0 0
        %3227 = vmatpush1.bf16.msra.mxu0 0
        %3228 = vmatprep.subr.bf16.mxu0 0
        %3229 = vmatpush1.bf16.msra.mxu0 0
        %3230 = vmatprep.subr.bf16.mxu0 0
        %3231 = vmatpush1.bf16.msra.mxu0 0
        %3232 = vmatprep.subr.bf16.mxu0 0
        %3233 = vmatpush1.bf16.msra.mxu0 0
        %3234 = vmatprep.subr.bf16.mxu0 0
        %3235 = vmatpush1.bf16.msra.mxu0 0
        %3236 = vmatprep.subr.bf16.mxu0 0
        %3237 = vmatpush1.bf16.msra.mxu0 0
        %3238 = vmatprep.subr.bf16.mxu0 0
        %3239 = vmatpush1.bf16.msra.mxu0 0
        %3240 = vmatprep.subr.bf16.mxu0 0
        %3241 = vmatpush1.bf16.msra.mxu0 0
        %3242 = vmatprep.subr.bf16.mxu0 0
        %3243 = vmatpush1.bf16.msra.mxu0 0
        %3244 = vmatprep.subr.bf16.mxu0 0
        %3245 = vmatpush1.bf16.msra.mxu0 0
        %3246 = vmatprep.subr.bf16.mxu0 0
        %3247 = vmatpush1.bf16.msra.mxu0 0
        %3248 = vmatprep.subr.bf16.mxu0 0
        %3249 = vmatpush1.bf16.msra.mxu0 0
        %3250 = vmatprep.mubr.bf16.mxu0 0
        %3251 = vmatmul.mubr.bf16.gmra.mrb[0].mxu0 %v3216
        %v3252 = vpop.f32.mrb[0].mxu0
        %v3253 = vadd.f32 %v3202, %v3252
        %v3254 = vpop.f32.mrb[0].mxu0
        %v3255 = vpop.f32.mrb[0].mxu0
        %v3256 = vpop.f32.mrb[0].mxu0
        %3257 = vdwg.mxu0
        %v3258 = vmul.f32 %v3253, 0.5
        %v3259 = vmul.f32 %v3253, 0.70710677
        %v3260 = verf.f32.pop %v3259
        %v3261 = vadd.f32 %v3260, 1.0
        %v3262 = vmul.f32 %v3258, %v3261
        %v3263 = vld [vmem:[%s24] sm:$0x1]
        %v3264 = vld [vmem:[%s25] sm:$0x1]
        %v3265 = vsel %vm959, %v3262, 0.0
        %3266 = vadd.xlane.f32.xlu0 %v3265
        %v3267 = vpop.xlane.xlu0 %3266
        %v3268 = vmul.f32 %v3267, %v963
        %v3269 = vsub.f32 %v3262, %v3268
        %v3270 = vmul.f32 %v3269, %v3269
        %v3271 = vsel %vm959, %v3270, 0.0
        %3272 = vadd.xlane.f32.xlu0 %v3271
        %v3273 = vpop.xlane.xlu0 %3272
        %v3274 = vmul.f32 %v3273, %v963
        %v3275 = vadd.f32 %v3274, 1e-12
        %v3276 = vrsqrt.pop %v3275
        %v3277 = vmul.f32 %v3269, %v3276
        %v3278 = vunpack.c.l.bf16 %v3263
        %v3279 = vlaneseq
        %v3280 = vshrl.u32 %v3279, 7
        %v3281 = vsub.s32 0, %v3280
        %v3282 = vrot.slane %v3278, %v3281
        %v3283 = vmul.f32 %v3277, %v3282
        %v3284 = vunpack.c.l.bf16 %v3264
        %v3285 = vlaneseq
        %v3286 = vshrl.u32 %v3285, 7
        %v3287 = vsub.s32 0, %v3286
        %v3288 = vrot.slane %v3284, %v3287
        %v3289 = vadd.f32 %v3283, %v3288
        %v3290 = vpack.c.bf16 %v3289, %v3289
        %v3291 = vld [vmem:[%s26] sm:$0xf]
        %v3292 = vld [vmem:[%s26 + $0x4] sm:$0xf]
        %v3293 = vld [vmem:[%s26 + $0x8] sm:$0xf]
        %v3294 = vld [vmem:[%s26 + $0xc] sm:$0xf]
        %v3295 = vld [vmem:[%s27] sm:$0xff]
        %v3300 = vunpack.c.l.b16 %v3291
        %v3301 = vunpack.c.l.b16 %v3292
        %v3302 = vunpack.c.l.b16 %v3293
        %v3303 = vunpack.c.l.b16 %v3294
        %v3304 = vpack.c.b16 %v3301, %v3300
        %v3305 = vpack.c.b16 %v3303, %v3302
        %v3309 = vsel %vm959, %v3290, 0
        %3311 = vmatprep.subr.bf16.mxu0 0
        %3312 = vmatpush1.bf16.msra.mxu0 %v3304
        %3313 = vmatprep.subr.bf16.mxu0 0
        %3314 = vmatpush1.bf16.msra.mxu0 %v3305
        %3315 = vmatprep.subr.bf16.mxu0 0
        %3316 = vmatpush1.bf16.msra.mxu0 0
        %3317 = vmatprep.subr.bf16.mxu0 0
        %3318 = vmatpush1.bf16.msra.mxu0 0
        %3319 = vmatprep.subr.bf16.mxu0 0
        %3320 = vmatpush1.bf16.msra.mxu0 0
        %3321 = vmatprep.subr.bf16.mxu0 0
        %3322 = vmatpush1.bf16.msra.mxu0 0
        %3323 = vmatprep.subr.bf16.mxu0 0
        %3324 = vmatpush1.bf16.msra.mxu0 0
        %3325 = vmatprep.subr.bf16.mxu0 0
        %3326 = vmatpush1.bf16.msra.mxu0 0
        %3327 = vmatprep.subr.bf16.mxu0 0
        %3328 = vmatpush1.bf16.msra.mxu0 0
        %3329 = vmatprep.subr.bf16.mxu0 0
        %3330 = vmatpush1.bf16.msra.mxu0 0
        %3331 = vmatprep.subr.bf16.mxu0 0
        %3332 = vmatpush1.bf16.msra.mxu0 0
        %3333 = vmatprep.subr.bf16.mxu0 0
        %3334 = vmatpush1.bf16.msra.mxu0 0
        %3335 = vmatprep.subr.bf16.mxu0 0
        %3336 = vmatpush1.bf16.msra.mxu0 0
        %3337 = vmatprep.subr.bf16.mxu0 0
        %3338 = vmatpush1.bf16.msra.mxu0 0
        %3339 = vmatprep.subr.bf16.mxu0 0
        %3340 = vmatpush1.bf16.msra.mxu0 0
        %3341 = vmatprep.subr.bf16.mxu0 0
        %3342 = vmatpush1.bf16.msra.mxu0 0
        %3343 = vmatprep.mubr.bf16.mxu0 0
        %3344 = vmatmul.mubr.bf16.gmra.mrb[0].mxu0 %v3309
        %v3345 = vpop.f32.mrb[0].mxu0
        %v3346 = vadd.f32 %v3295, %v3345
        %v3347 = vpop.f32.mrb[0].mxu0
        %v3348 = vpop.f32.mrb[0].mxu0
        %v3349 = vpop.f32.mrb[0].mxu0
        %3350 = vdwg.mxu0
        %3351 = vst [vmem:[%s836] sm:$0xff] %v3346
        %s3352 = sand.u32 %s643, 1
        %s3353 = scalar_lea.sflag [#allocation3], %s3352
        %s3354 = sand.u32 %s643, 1
        %s3355 = smul.addr %s3354, 8
        %s3356 = scalar_lea.vmem [#allocation2], %s3355
        // Predicated region
        $region133: #{bidirectional_transformer_forward.1} parent=131 // pred_check
          %p3357 = pneg %p653
        $region134: #{bidirectional_transformer_forward.1} parent=131 // pred_check_branch
          %3359 = sbr.rel (%p3357) target = $region136
        $region135: #{bidirectional_transformer_forward.1} parent=131 // pred_region
          %s3361 = ssub.s32 128, 128
          %3362 = vsyncadd %s3353, %s3361
          %s3363 = smul.addr %s42, 128
          %s3364 = scalar_lea.hbm %s28, %s3363
          %s3366 = sshll.u32 %s3356, 4
          %s3367 = int_to_ptr.vmem [resolvable:$true] %s3366
          %3369 = dma.vmem_to_hbm [thread:$0]  %s3367, 128, %s3364, %s3353
        $region136: #{bidirectional_transformer_forward.1} parent=131 // pred_fallthru
          _
      $region132: #{bidirectional_transformer_forward.1} parent=5 // pred_fallthru
        _
      %p3370 = scmp.le.s32.totalorder 2, %s37
      // Predicated region
      $region137: #{bidirectional_transformer_forward.1} parent=5 // pred_check
        %p3371 = pneg %p3370
      $region138: #{bidirectional_transformer_forward.1} parent=5 // pred_check_branch
        %3373 = sbr.rel (%p3371) target = $region140
      $region139: #{bidirectional_transformer_forward.1} parent=5 // pred_region
        %s3374 = ssub.s32 %s37, 2
        // Predicated region
        $region141: #{bidirectional_transformer_forward.1} parent=139 // pred_check
          %p3375 = pneg %p659
        $region142: #{bidirectional_transformer_forward.1} parent=139 // pred_check_branch
          %3377 = sbr.rel (%p3375) target = $region144
        $region143: #{bidirectional_transformer_forward.1} parent=139 // pred_region
          %s3378 = sand.u32 %s644, 1
          %s3379 = scalar_lea.sflag [#allocation3], %s3378
          %s3380 = sand.u32 %s644, 1
          %s3381 = smul.addr %s3380, 8
          %s3382 = scalar_lea.vmem [#allocation2], %s3381
          %3383 = dma.done %s3379, 128
        $region144: #{bidirectional_transformer_forward.1} parent=139 // pred_fallthru
          _
      $region140: #{bidirectional_transformer_forward.1} parent=5 // pred_fallthru
        _
    $region6: #{bidirectional_transformer_forward.1} parent=1 // loop_footer
      %s41 = sadd.s32 1, %s37
    $region7: #{bidirectional_transformer_forward.1} parent=1 // loop_footer_branch
      %36 = sbr.rel target = $region3
    $region8: #{bidirectional_transformer_forward.1} parent=1 // loop_exit
      _
    %3384 = vsyncpa [#allocation3], 1
    %s3385 = scalar_lea.sflag [#allocation3], 1
    %3386 = vsyncpa %s3385, 1

</llo_original>
